<compile_context>
chip_gen: v7x
topology: tpu7x:2x2x1
jax: 0.10.0
libtpu: 0.0.40
codegen_flags: <defaults>
</compile_context>

<pallas_src>
import functools
import math

import jax
import jax.numpy as jnp
from jax import lax
from jax.experimental import pallas as pl
from jax.experimental.pallas import tpu as pltpu


def _transformer_block_kernel(
    x_ref,
    wq_ref, bq_ref, wk_ref, bk_ref, wv_ref, bv_ref,
    wo_ref, bo_ref,
    ln1_g_ref, ln1_b_ref, ln2_g_ref, ln2_b_ref,
    w1_ref, b1_ref, w2_ref, b2_ref,
    o_ref,
    ctx_ref,                                   # VMEM scratch [S, E] bf16
    *, num_heads, head_dim, eps):
    f32 = jnp.float32
    bf16 = jnp.bfloat16

    x = x_ref[0].astype(f32)                                   # [S, E]

    # ---- attention LayerNorm (f32 elementwise) ----
    mu = jnp.mean(x, axis=-1, keepdims=True)
    xc = x - mu
    var = jnp.mean(xc * xc, axis=-1, keepdims=True)
    xn = xc * lax.rsqrt(var + eps) * ln1_g_ref[...] + ln1_b_ref[...]
    xn_b = xn.astype(bf16)

    # ---- full-width Q/K/V projections (bf16 MXU inputs, f32 accumulation).
    # Wq / bq already carry the 1/sqrt(Dh) scale (folded in the wrapper).
    q = jnp.dot(xn_b, wq_ref[...], preferred_element_type=f32) + bq_ref[...]
    k = jnp.dot(xn_b, wk_ref[...], preferred_element_type=f32) + bk_ref[...]
    v = jnp.dot(xn_b, wv_ref[...], preferred_element_type=f32) + bv_ref[...]

    # ---- per-head attention; context assembled into lane slices of ctx_ref
    # so the output projection below is ONE [S,E]@[E,E] matmul with K=E.
    # TODO(synk): batch heads via a [H,S,Dh] dot_general / fori_loop for very
    #             large S to bound vreg live ranges.
    for h in range(num_heads):                                 # small, static
        lo = h * head_dim
        hi = lo + head_dim
        qh = q[:, lo:hi].astype(bf16)
        kh = k[:, lo:hi].astype(bf16)
        vh = v[:, lo:hi].astype(bf16)
        # scores = qh @ kh.T (contract head_dim) -- no explicit transpose.
        s = lax.dot_general(qh, kh, (((1,), (1,)), ((), ())),
                            preferred_element_type=f32)        # [S, S]
        s = s - jnp.max(s, axis=-1, keepdims=True)
        p = jnp.exp(s)
        p = p * pl.reciprocal(jnp.sum(p, axis=-1, keepdims=True), approx=True)
        ctx_ref[:, lo:hi] = jnp.dot(
            p.astype(bf16), vh, preferred_element_type=f32).astype(bf16)

    attn = jnp.dot(ctx_ref[...], wo_ref[...],
                   preferred_element_type=f32) + bo_ref[...]
    x1 = attn + x                                              # first residual

    # ---- MLP LayerNorm ----
    mu2 = jnp.mean(x1, axis=-1, keepdims=True)
    xc2 = x1 - mu2
    var2 = jnp.mean(xc2 * xc2, axis=-1, keepdims=True)
    x2n = xc2 * lax.rsqrt(var2 + eps) * ln2_g_ref[...] + ln2_b_ref[...]

    # ---- PositionwiseFeedForward: w2(relu(w1(x))) ----
    h1 = jnp.maximum(
        jnp.dot(x2n.astype(bf16), w1_ref[...], preferred_element_type=f32)
        + b1_ref[...], 0.0)
    y = jnp.dot(h1.astype(bf16), w2_ref[...],
                preferred_element_type=f32) + b2_ref[...]
    o_ref[0] = (y + x1).astype(o_ref.dtype)                    # second residual


@functools.partial(jax.jit, static_argnames=("num_heads",))
def transformer_block(x, params, *, num_heads):
    """Forward pass of TransformerBlock (eval mode). Returns (out, None)."""
    B, S, E = x.shape
    H = num_heads
    Dh = E // H
    d_ff = params["w1_w"].shape[0]
    f32, bf16 = jnp.float32, jnp.bfloat16

    # torch nn.Linear stores weight as [out_features, in_features]; convert to
    # math layout [in, out].  Weights go to bf16 (MXU-native input); biases and
    # LN params stay f32 (added / applied on the VPU after f32 accumulation).
    t = lambda w: jnp.transpose(w, (1, 0))
    scale = 1.0 / math.sqrt(Dh)                   # fold softmax scale into Q

    wq = (t(params["q_w"]) * scale).astype(bf16)               # [E, E]
    bq = (params["q_b"] * scale).reshape(1, E).astype(f32)
    wk = t(params["k_w"]).astype(bf16)
    bk = params["k_b"].reshape(1, E).astype(f32)
    wv = t(params["v_w"]).astype(bf16)
    bv = params["v_b"].reshape(1, E).astype(f32)
    wo = t(params["o_w"]).astype(bf16)                         # [E, E]
    bo = params["o_b"].reshape(1, E).astype(f32)

    ln1_g = params["ln1_g"].reshape(1, E).astype(f32)
    ln1_b = params["ln1_b"].reshape(1, E).astype(f32)
    ln2_g = params["ln2_g"].reshape(1, E).astype(f32)
    ln2_b = params["ln2_b"].reshape(1, E).astype(f32)

    w1 = t(params["w1_w"]).astype(bf16)                        # [E, d_ff]
    b1 = params["w1_b"].reshape(1, d_ff).astype(f32)
    w2 = t(params["w2_w"]).astype(bf16)                        # [d_ff, E]
    b2 = params["w2_b"].reshape(1, E).astype(f32)

    const = lambda shape: pl.BlockSpec(shape, lambda b: (0,) * len(shape))

    kernel = functools.partial(_transformer_block_kernel,
                               num_heads=H, head_dim=Dh, eps=1e-6)

    # Explicit scoped-VMEM budget: bf16 weights (double-buffered by the
    # pipeline) + f32 biases/LN params + x/out blocks + intermediates.
    weight_bytes = (4 * E * E + 2 * E * d_ff) * 2
    param_bytes = (8 * E + d_ff) * 4
    block_bytes = 2 * (S * E * 4)
    inter_bytes = (S * S + S * d_ff + 8 * S * E) * 4
    vmem_limit = int(min(
        100 * 1024 * 1024,
        max(32 * 1024 * 1024,
            2 * (weight_bytes + param_bytes + block_bytes)
            + inter_bytes + (4 << 20))))

    out = pl.pallas_call(
        kernel,
        out_shape=jax.ShapeDtypeStruct((B, S, E), x.dtype),
        grid=(B,),
        in_specs=[
            pl.BlockSpec((1, S, E), lambda b: (b, 0, 0)),      # x
            const((E, E)), const((1, E)),                      # Wq, bq (scaled)
            const((E, E)), const((1, E)),                      # Wk, bk
            const((E, E)), const((1, E)),                      # Wv, bv
            const((E, E)), const((1, E)),                      # Wo, bo
            const((1, E)), const((1, E)),                      # ln1 gamma/beta
            const((1, E)), const((1, E)),                      # ln2 gamma/beta
            const((E, d_ff)), const((1, d_ff)),                # W1, b1
            const((d_ff, E)), const((1, E)),                   # W2, b2
        ],
        out_specs=pl.BlockSpec((1, S, E), lambda b: (b, 0, 0)),
        scratch_shapes=[pltpu.VMEM((S, E), bf16)],             # ctx assembly
        compiler_params=pltpu.CompilerParams(
            dimension_semantics=("parallel",),
            vmem_limit_bytes=vmem_limit),
    )(x, wq, bq, wk, bk, wv, bv, wo, bo,
      ln1_g, ln1_b, ln2_g, ln2_b, w1, b1, w2, b2)

    return out, None   # `weights` is None because SelfAttention.vis == False


if __name__ == "__main__":
    B, S, E, H = 2, 8, 32, 4          # batch, seq, embed_dim, num_heads
    d_ff = 2048                       # PositionwiseFeedForward d_ff
    Dh = E // H

    keys = jax.random.split(jax.random.PRNGKey(0), 13)

    def linear_params(kw, kb, out_dim, in_dim):
        bound = 1.0 / math.sqrt(in_dim)
        w = jax.random.uniform(kw, (out_dim, in_dim), minval=-bound,
                               maxval=bound, dtype=jnp.float32)
        b = jax.random.uniform(kb, (out_dim,), minval=-bound, maxval=bound,
                               dtype=jnp.float32)
        return w, b

    qw, qb = linear_params(keys[0], keys[1], E, E)
    kw_, kb_ = linear_params(keys[2], keys[3], E, E)
    vw, vb = linear_params(keys[4], keys[5], E, E)
    ow, ob = linear_params(keys[6], keys[7], E, E)
    w1w, w1b = linear_params(keys[8], keys[9], d_ff, E)
    w2w, w2b = linear_params(keys[10], keys[11], E, d_ff)

    params = dict(
        q_w=qw, q_b=qb, k_w=kw_, k_b=kb_, v_w=vw, v_b=vb, o_w=ow, o_b=ob,
        ln1_g=jnp.ones((E,), jnp.float32), ln1_b=jnp.zeros((E,), jnp.float32),
        ln2_g=jnp.ones((E,), jnp.float32), ln2_b=jnp.zeros((E,), jnp.float32),
        w1_w=w1w, w1_b=w1b, w2_w=w2w, w2_b=w2b)

    x = jax.random.normal(keys[12], (B, S, E), dtype=jnp.float32)

    out, weights = transformer_block(x, params, num_heads=H)
    out = jax.block_until_ready(out)

    # ---- pure-JAX f32 reference (mirrors the PyTorch forward in eval mode) --
    def reference(x, p, eps=1e-6):
        def ln(v, g, b):
            mu = v.mean(-1, keepdims=True)
            var = ((v - mu) ** 2).mean(-1, keepdims=True)
            return (v - mu) / jnp.sqrt(var + eps) * g + b

        h0 = x
        xn = ln(x, p["ln1_g"], p["ln1_b"])
        q = xn @ p["q_w"].T + p["q_b"]
        k = xn @ p["k_w"].T + p["k_b"]
        v = xn @ p["v_w"].T + p["v_b"]
        split = lambda t: t.reshape(B, S, H, Dh).transpose(0, 2, 1, 3)
        qh, kh, vh = split(q), split(k), split(v)
        scores = jnp.einsum("bhqd,bhkd->bhqk", qh, kh) / math.sqrt(Dh)
        probs = jax.nn.softmax(scores, axis=-1)
        ctx = jnp.einsum("bhqk,bhkd->bhqd", probs, vh)
        ctx = ctx.transpose(0, 2, 1, 3).reshape(B, S, E)
        x1 = ctx @ p["o_w"].T + p["o_b"] + h0
        x2n = ln(x1, p["ln2_g"], p["ln2_b"])
        mid = jax.nn.relu(x2n @ p["w1_w"].T + p["w1_b"])
        return mid @ p["w2_w"].T + p["w2_b"] + x1

    ref = reference(x, params)

    assert out.shape == (B, S, E), out.shape
    assert weights is None
    max_err = float(jnp.max(jnp.abs(out - ref)))
    # bf16 MXU inputs (f32 accumulation) -> slightly looser tolerance.
    assert jnp.allclose(out, ref, atol=5e-2, rtol=5e-2), max_err

    print("KERNEL_OK")
</pallas_src>

<mosaic_0001>
module attributes {stable_mosaic.version = 11 : i64} {
  func.func @_transformer_block_kernel(%arg0: i32, %arg1: memref<1x8x32xf32, #tpu.memory_space<vmem>>, %arg2: memref<32x32xbf16, #tpu.memory_space<vmem>>, %arg3: memref<1x32xf32, #tpu.memory_space<vmem>>, %arg4: memref<32x32xbf16, #tpu.memory_space<vmem>>, %arg5: memref<1x32xf32, #tpu.memory_space<vmem>>, %arg6: memref<32x32xbf16, #tpu.memory_space<vmem>>, %arg7: memref<1x32xf32, #tpu.memory_space<vmem>>, %arg8: memref<32x32xbf16, #tpu.memory_space<vmem>>, %arg9: memref<1x32xf32, #tpu.memory_space<vmem>>, %arg10: memref<1x32xf32, #tpu.memory_space<vmem>>, %arg11: memref<1x32xf32, #tpu.memory_space<vmem>>, %arg12: memref<1x32xf32, #tpu.memory_space<vmem>>, %arg13: memref<1x32xf32, #tpu.memory_space<vmem>>, %arg14: memref<32x2048xbf16, #tpu.memory_space<vmem>>, %arg15: memref<1x2048xf32, #tpu.memory_space<vmem>>, %arg16: memref<2048x32xbf16, #tpu.memory_space<vmem>>, %arg17: memref<1x32xf32, #tpu.memory_space<vmem>>, %arg18: memref<1x8x32xf32, #tpu.memory_space<vmem>>, %arg19: memref<8x32xbf16, #tpu.memory_space<vmem>>) attributes {dimension_semantics = [#tpu.dimension_semantics<parallel>], iteration_bounds = array<i64: 2>, scalar_prefetch = 0 : i64, scratch_operands = 1 : i64, tpu.core_type = #tpu.core_type<tc>, window_params = [{transform_indices = @transform_0, window_bounds = array<i64: 1, 8, 32>}, {pipeline_mode = #tpu.pipeline_mode<synchronous>, transform_indices = @transform_1, window_bounds = array<i64: 32, 32>}, {pipeline_mode = #tpu.pipeline_mode<synchronous>, transform_indices = @transform_2, window_bounds = array<i64: 1, 32>}, {pipeline_mode = #tpu.pipeline_mode<synchronous>, transform_indices = @transform_3, window_bounds = array<i64: 32, 32>}, {pipeline_mode = #tpu.pipeline_mode<synchronous>, transform_indices = @transform_4, window_bounds = array<i64: 1, 32>}, {pipeline_mode = #tpu.pipeline_mode<synchronous>, transform_indices = @transform_5, window_bounds = array<i64: 32, 32>}, {pipeline_mode = #tpu.pipeline_mode<synchronous>, transform_indices = @transform_6, window_bounds = array<i64: 1, 32>}, {pipeline_mode = #tpu.pipeline_mode<synchronous>, transform_indices = @transform_7, window_bounds = array<i64: 32, 32>}, {pipeline_mode = #tpu.pipeline_mode<synchronous>, transform_indices = @transform_8, window_bounds = array<i64: 1, 32>}, {pipeline_mode = #tpu.pipeline_mode<synchronous>, transform_indices = @transform_9, window_bounds = array<i64: 1, 32>}, {pipeline_mode = #tpu.pipeline_mode<synchronous>, transform_indices = @transform_10, window_bounds = array<i64: 1, 32>}, {pipeline_mode = #tpu.pipeline_mode<synchronous>, transform_indices = @transform_11, window_bounds = array<i64: 1, 32>}, {pipeline_mode = #tpu.pipeline_mode<synchronous>, transform_indices = @transform_12, window_bounds = array<i64: 1, 32>}, {pipeline_mode = #tpu.pipeline_mode<synchronous>, transform_indices = @transform_13, window_bounds = array<i64: 32, 2048>}, {pipeline_mode = #tpu.pipeline_mode<synchronous>, transform_indices = @transform_14, window_bounds = array<i64: 1, 2048>}, {pipeline_mode = #tpu.pipeline_mode<synchronous>, transform_indices = @transform_15, window_bounds = array<i64: 2048, 32>}, {pipeline_mode = #tpu.pipeline_mode<synchronous>, transform_indices = @transform_16, window_bounds = array<i64: 1, 32>}, {transform_indices = @transform_17, window_bounds = array<i64: 1, 8, 32>}]} {
    %c0 = arith.constant 0 : index
    %c0_0 = arith.constant 0 : index
    %c0_1 = arith.constant 0 : index
    %0 = vector.load %arg1[%c0, %c0_0, %c0_1] : memref<1x8x32xf32, #tpu.memory_space<vmem>>, vector<1x8x32xf32>
    %1 = vector.shape_cast %0 : vector<1x8x32xf32> to vector<8x32xf32>
    %cst = arith.constant dense<0.000000e+00> : vector<8xf32>
    %2 = vector.multi_reduction <add>, %1, %cst [1] : vector<8x32xf32> to vector<8xf32>
    %3 = vector.shape_cast %2 : vector<8xf32> to vector<8x1xf32>
    %cst_2 = arith.constant 3.200000e+01 : f32
    %4 = vector.broadcast %cst_2 : f32 to vector<8x1xf32>
    %5 = arith.divf %3, %4 : vector<8x1xf32>
    %6 = vector.broadcast %5 : vector<8x1xf32> to vector<8x32xf32>
    %7 = arith.subf %1, %6 : vector<8x32xf32>
    %8 = arith.mulf %7, %7 : vector<8x32xf32>
    %cst_3 = arith.constant dense<0.000000e+00> : vector<8xf32>
    %9 = vector.multi_reduction <add>, %8, %cst_3 [1] : vector<8x32xf32> to vector<8xf32>
    %10 = vector.shape_cast %9 : vector<8xf32> to vector<8x1xf32>
    %cst_4 = arith.constant 3.200000e+01 : f32
    %11 = vector.broadcast %cst_4 : f32 to vector<8x1xf32>
    %12 = arith.divf %10, %11 : vector<8x1xf32>
    %cst_5 = arith.constant 9.99999997E-7 : f32
    %13 = vector.broadcast %cst_5 : f32 to vector<8x1xf32>
    %14 = arith.addf %12, %13 : vector<8x1xf32>
    %15 = math.rsqrt %14 : vector<8x1xf32>
    %16 = vector.broadcast %15 : vector<8x1xf32> to vector<8x32xf32>
    %17 = arith.mulf %7, %16 : vector<8x32xf32>
    %c0_6 = arith.constant 0 : index
    %c0_7 = arith.constant 0 : index
    %18 = vector.load %arg10[%c0_6, %c0_7] : memref<1x32xf32, #tpu.memory_space<vmem>>, vector<1x32xf32>
    %19 = vector.broadcast %18 : vector<1x32xf32> to vector<8x32xf32>
    %20 = arith.mulf %17, %19 : vector<8x32xf32>
    %c0_8 = arith.constant 0 : index
    %c0_9 = arith.constant 0 : index
    %21 = vector.load %arg11[%c0_8, %c0_9] : memref<1x32xf32, #tpu.memory_space<vmem>>, vector<1x32xf32>
    %22 = vector.broadcast %21 : vector<1x32xf32> to vector<8x32xf32>
    %23 = arith.addf %20, %22 : vector<8x32xf32>
    %24 = arith.truncf %23 : vector<8x32xf32> to vector<8x32xbf16>
    %c0_10 = arith.constant 0 : index
    %c0_11 = arith.constant 0 : index
    %25 = vector.load %arg2[%c0_10, %c0_11] : memref<32x32xbf16, #tpu.memory_space<vmem>>, vector<32x32xbf16>
    %cst_12 = arith.constant dense<0.000000e+00> : vector<8x32xf32>
    %26 = tpu.matmul %24, %25, %cst_12 {dimension_numbers = #tpu.dot_dimension_numbers<[1], [0], [0], [1], [0, 0, 1, 1], [], []>} : vector<8x32xbf16>, vector<32x32xbf16>, vector<8x32xf32> -> vector<8x32xf32>
    %c0_13 = arith.constant 0 : index
    %c0_14 = arith.constant 0 : index
    %27 = vector.load %arg3[%c0_13, %c0_14] : memref<1x32xf32, #tpu.memory_space<vmem>>, vector<1x32xf32>
    %28 = vector.broadcast %27 : vector<1x32xf32> to vector<8x32xf32>
    %29 = arith.addf %26, %28 : vector<8x32xf32>
    %c0_15 = arith.constant 0 : index
    %c0_16 = arith.constant 0 : index
    %30 = vector.load %arg4[%c0_15, %c0_16] : memref<32x32xbf16, #tpu.memory_space<vmem>>, vector<32x32xbf16>
    %cst_17 = arith.constant dense<0.000000e+00> : vector<8x32xf32>
    %31 = tpu.matmul %24, %30, %cst_17 {dimension_numbers = #tpu.dot_dimension_numbers<[1], [0], [0], [1], [0, 0, 1, 1], [], []>} : vector<8x32xbf16>, vector<32x32xbf16>, vector<8x32xf32> -> vector<8x32xf32>
    %c0_18 = arith.constant 0 : index
    %c0_19 = arith.constant 0 : index
    %32 = vector.load %arg5[%c0_18, %c0_19] : memref<1x32xf32, #tpu.memory_space<vmem>>, vector<1x32xf32>
    %33 = vector.broadcast %32 : vector<1x32xf32> to vector<8x32xf32>
    %34 = arith.addf %31, %33 : vector<8x32xf32>
    %c0_20 = arith.constant 0 : index
    %c0_21 = arith.constant 0 : index
    %35 = vector.load %arg6[%c0_20, %c0_21] : memref<32x32xbf16, #tpu.memory_space<vmem>>, vector<32x32xbf16>
    %cst_22 = arith.constant dense<0.000000e+00> : vector<8x32xf32>
    %36 = tpu.matmul %24, %35, %cst_22 {dimension_numbers = #tpu.dot_dimension_numbers<[1], [0], [0], [1], [0, 0, 1, 1], [], []>} : vector<8x32xbf16>, vector<32x32xbf16>, vector<8x32xf32> -> vector<8x32xf32>
    %c0_23 = arith.constant 0 : index
    %c0_24 = arith.constant 0 : index
    %37 = vector.load %arg7[%c0_23, %c0_24] : memref<1x32xf32, #tpu.memory_space<vmem>>, vector<1x32xf32>
    %38 = vector.broadcast %37 : vector<1x32xf32> to vector<8x32xf32>
    %39 = arith.addf %36, %38 : vector<8x32xf32>
    %40 = vector.extract_strided_slice %29 {offsets = [0, 0], sizes = [8, 8], strides = [1, 1]} : vector<8x32xf32> to vector<8x8xf32>
    %41 = arith.truncf %40 : vector<8x8xf32> to vector<8x8xbf16>
    %42 = vector.extract_strided_slice %34 {offsets = [0, 0], sizes = [8, 8], strides = [1, 1]} : vector<8x32xf32> to vector<8x8xf32>
    %43 = arith.truncf %42 : vector<8x8xf32> to vector<8x8xbf16>
    %44 = vector.extract_strided_slice %39 {offsets = [0, 0], sizes = [8, 8], strides = [1, 1]} : vector<8x32xf32> to vector<8x8xf32>
    %45 = arith.truncf %44 : vector<8x8xf32> to vector<8x8xbf16>
    %cst_25 = arith.constant dense<0.000000e+00> : vector<8x8xf32>
    %46 = tpu.matmul %41, %43, %cst_25 {dimension_numbers = #tpu.dot_dimension_numbers<[1], [1], [0], [0], [0, 0, 1, 0], [], []>} : vector<8x8xbf16>, vector<8x8xbf16>, vector<8x8xf32> -> vector<8x8xf32>
    %cst_26 = arith.constant dense<0xFF800000> : vector<8xf32>
    %47 = vector.multi_reduction <maximumf>, %46, %cst_26 [1] : vector<8x8xf32> to vector<8xf32>
    %48 = vector.shape_cast %47 : vector<8xf32> to vector<8x1xf32>
    %49 = vector.broadcast %48 : vector<8x1xf32> to vector<8x8xf32>
    %50 = arith.subf %46, %49 : vector<8x8xf32>
    %51 = math.exp %50 : vector<8x8xf32>
    %cst_27 = arith.constant dense<0.000000e+00> : vector<8xf32>
    %52 = vector.multi_reduction <add>, %51, %cst_27 [1] : vector<8x8xf32> to vector<8xf32>
    %53 = vector.shape_cast %52 : vector<8xf32> to vector<8x1xf32>
    %54 = tpu.reciprocal %53 {approx = true} : vector<8x1xf32> -> vector<8x1xf32>
    %55 = vector.broadcast %54 : vector<8x1xf32> to vector<8x8xf32>
    %56 = arith.mulf %51, %55 : vector<8x8xf32>
    %57 = arith.truncf %56 : vector<8x8xf32> to vector<8x8xbf16>
    %cst_28 = arith.constant dense<0.000000e+00> : vector<8x8xf32>
    %58 = tpu.matmul %57, %45, %cst_28 {dimension_numbers = #tpu.dot_dimension_numbers<[1], [0], [0], [1], [0, 0, 1, 1], [], []>} : vector<8x8xbf16>, vector<8x8xbf16>, vector<8x8xf32> -> vector<8x8xf32>
    %59 = arith.truncf %58 : vector<8x8xf32> to vector<8x8xbf16>
    %c0_29 = arith.constant 0 : index
    %c0_30 = arith.constant 0 : index
    %60 = vector.load %arg19[%c0_29, %c0_30] : memref<8x32xbf16, #tpu.memory_space<vmem>>, vector<8x8xbf16>
    tpu.vector_store %arg19[%c0_29, %c0_30], %59 {strides = array<i32>} : memref<8x32xbf16, #tpu.memory_space<vmem>>, vector<8x8xbf16>,
    %61 = vector.extract_strided_slice %29 {offsets = [0, 8], sizes = [8, 8], strides = [1, 1]} : vector<8x32xf32> to vector<8x8xf32>
    %62 = arith.truncf %61 : vector<8x8xf32> to vector<8x8xbf16>
    %63 = vector.extract_strided_slice %34 {offsets = [0, 8], sizes = [8, 8], strides = [1, 1]} : vector<8x32xf32> to vector<8x8xf32>
    %64 = arith.truncf %63 : vector<8x8xf32> to vector<8x8xbf16>
    %65 = vector.extract_strided_slice %39 {offsets = [0, 8], sizes = [8, 8], strides = [1, 1]} : vector<8x32xf32> to vector<8x8xf32>
    %66 = arith.truncf %65 : vector<8x8xf32> to vector<8x8xbf16>
    %cst_31 = arith.constant dense<0.000000e+00> : vector<8x8xf32>
    %67 = tpu.matmul %62, %64, %cst_31 {dimension_numbers = #tpu.dot_dimension_numbers<[1], [1], [0], [0], [0, 0, 1, 0], [], []>} : vector<8x8xbf16>, vector<8x8xbf16>, vector<8x8xf32> -> vector<8x8xf32>
    %cst_32 = arith.constant dense<0xFF800000> : vector<8xf32>
    %68 = vector.multi_reduction <maximumf>, %67, %cst_32 [1] : vector<8x8xf32> to vector<8xf32>
    %69 = vector.shape_cast %68 : vector<8xf32> to vector<8x1xf32>
    %70 = vector.broadcast %69 : vector<8x1xf32> to vector<8x8xf32>
    %71 = arith.subf %67, %70 : vector<8x8xf32>
    %72 = math.exp %71 : vector<8x8xf32>
    %cst_33 = arith.constant dense<0.000000e+00> : vector<8xf32>
    %73 = vector.multi_reduction <add>, %72, %cst_33 [1] : vector<8x8xf32> to vector<8xf32>
    %74 = vector.shape_cast %73 : vector<8xf32> to vector<8x1xf32>
    %75 = tpu.reciprocal %74 {approx = true} : vector<8x1xf32> -> vector<8x1xf32>
    %76 = vector.broadcast %75 : vector<8x1xf32> to vector<8x8xf32>
    %77 = arith.mulf %72, %76 : vector<8x8xf32>
    %78 = arith.truncf %77 : vector<8x8xf32> to vector<8x8xbf16>
    %cst_34 = arith.constant dense<0.000000e+00> : vector<8x8xf32>
    %79 = tpu.matmul %78, %66, %cst_34 {dimension_numbers = #tpu.dot_dimension_numbers<[1], [0], [0], [1], [0, 0, 1, 1], [], []>} : vector<8x8xbf16>, vector<8x8xbf16>, vector<8x8xf32> -> vector<8x8xf32>
    %80 = arith.truncf %79 : vector<8x8xf32> to vector<8x8xbf16>
    %c0_35 = arith.constant 0 : index
    %c8 = arith.constant 8 : index
    %81 = vector.load %arg19[%c0_35, %c8] : memref<8x32xbf16, #tpu.memory_space<vmem>>, vector<8x8xbf16>
    tpu.vector_store %arg19[%c0_35, %c8], %80 {strides = array<i32>} : memref<8x32xbf16, #tpu.memory_space<vmem>>, vector<8x8xbf16>,
    %82 = vector.extract_strided_slice %29 {offsets = [0, 16], sizes = [8, 8], strides = [1, 1]} : vector<8x32xf32> to vector<8x8xf32>
    %83 = arith.truncf %82 : vector<8x8xf32> to vector<8x8xbf16>
    %84 = vector.extract_strided_slice %34 {offsets = [0, 16], sizes = [8, 8], strides = [1, 1]} : vector<8x32xf32> to vector<8x8xf32>
    %85 = arith.truncf %84 : vector<8x8xf32> to vector<8x8xbf16>
    %86 = vector.extract_strided_slice %39 {offsets = [0, 16], sizes = [8, 8], strides = [1, 1]} : vector<8x32xf32> to vector<8x8xf32>
    %87 = arith.truncf %86 : vector<8x8xf32> to vector<8x8xbf16>
    %cst_36 = arith.constant dense<0.000000e+00> : vector<8x8xf32>
    %88 = tpu.matmul %83, %85, %cst_36 {dimension_numbers = #tpu.dot_dimension_numbers<[1], [1], [0], [0], [0, 0, 1, 0], [], []>} : vector<8x8xbf16>, vector<8x8xbf16>, vector<8x8xf32> -> vector<8x8xf32>
    %cst_37 = arith.constant dense<0xFF800000> : vector<8xf32>
    %89 = vector.multi_reduction <maximumf>, %88, %cst_37 [1] : vector<8x8xf32> to vector<8xf32>
    %90 = vector.shape_cast %89 : vector<8xf32> to vector<8x1xf32>
    %91 = vector.broadcast %90 : vector<8x1xf32> to vector<8x8xf32>
    %92 = arith.subf %88, %91 : vector<8x8xf32>
    %93 = math.exp %92 : vector<8x8xf32>
    %cst_38 = arith.constant dense<0.000000e+00> : vector<8xf32>
    %94 = vector.multi_reduction <add>, %93, %cst_38 [1] : vector<8x8xf32> to vector<8xf32>
    %95 = vector.shape_cast %94 : vector<8xf32> to vector<8x1xf32>
    %96 = tpu.reciprocal %95 {approx = true} : vector<8x1xf32> -> vector<8x1xf32>
    %97 = vector.broadcast %96 : vector<8x1xf32> to vector<8x8xf32>
    %98 = arith.mulf %93, %97 : vector<8x8xf32>
    %99 = arith.truncf %98 : vector<8x8xf32> to vector<8x8xbf16>
    %cst_39 = arith.constant dense<0.000000e+00> : vector<8x8xf32>
    %100 = tpu.matmul %99, %87, %cst_39 {dimension_numbers = #tpu.dot_dimension_numbers<[1], [0], [0], [1], [0, 0, 1, 1], [], []>} : vector<8x8xbf16>, vector<8x8xbf16>, vector<8x8xf32> -> vector<8x8xf32>
    %101 = arith.truncf %100 : vector<8x8xf32> to vector<8x8xbf16>
    %c0_40 = arith.constant 0 : index
    %c16 = arith.constant 16 : index
    %102 = vector.load %arg19[%c0_40, %c16] : memref<8x32xbf16, #tpu.memory_space<vmem>>, vector<8x8xbf16>
    tpu.vector_store %arg19[%c0_40, %c16], %101 {strides = array<i32>} : memref<8x32xbf16, #tpu.memory_space<vmem>>, vector<8x8xbf16>,
    %103 = vector.extract_strided_slice %29 {offsets = [0, 24], sizes = [8, 8], strides = [1, 1]} : vector<8x32xf32> to vector<8x8xf32>
    %104 = arith.truncf %103 : vector<8x8xf32> to vector<8x8xbf16>
    %105 = vector.extract_strided_slice %34 {offsets = [0, 24], sizes = [8, 8], strides = [1, 1]} : vector<8x32xf32> to vector<8x8xf32>
    %106 = arith.truncf %105 : vector<8x8xf32> to vector<8x8xbf16>
    %107 = vector.extract_strided_slice %39 {offsets = [0, 24], sizes = [8, 8], strides = [1, 1]} : vector<8x32xf32> to vector<8x8xf32>
    %108 = arith.truncf %107 : vector<8x8xf32> to vector<8x8xbf16>
    %cst_41 = arith.constant dense<0.000000e+00> : vector<8x8xf32>
    %109 = tpu.matmul %104, %106, %cst_41 {dimension_numbers = #tpu.dot_dimension_numbers<[1], [1], [0], [0], [0, 0, 1, 0], [], []>} : vector<8x8xbf16>, vector<8x8xbf16>, vector<8x8xf32> -> vector<8x8xf32>
    %cst_42 = arith.constant dense<0xFF800000> : vector<8xf32>
    %110 = vector.multi_reduction <maximumf>, %109, %cst_42 [1] : vector<8x8xf32> to vector<8xf32>
    %111 = vector.shape_cast %110 : vector<8xf32> to vector<8x1xf32>
    %112 = vector.broadcast %111 : vector<8x1xf32> to vector<8x8xf32>
    %113 = arith.subf %109, %112 : vector<8x8xf32>
    %114 = math.exp %113 : vector<8x8xf32>
    %cst_43 = arith.constant dense<0.000000e+00> : vector<8xf32>
    %115 = vector.multi_reduction <add>, %114, %cst_43 [1] : vector<8x8xf32> to vector<8xf32>
    %116 = vector.shape_cast %115 : vector<8xf32> to vector<8x1xf32>
    %117 = tpu.reciprocal %116 {approx = true} : vector<8x1xf32> -> vector<8x1xf32>
    %118 = vector.broadcast %117 : vector<8x1xf32> to vector<8x8xf32>
    %119 = arith.mulf %114, %118 : vector<8x8xf32>
    %120 = arith.truncf %119 : vector<8x8xf32> to vector<8x8xbf16>
    %cst_44 = arith.constant dense<0.000000e+00> : vector<8x8xf32>
    %121 = tpu.matmul %120, %108, %cst_44 {dimension_numbers = #tpu.dot_dimension_numbers<[1], [0], [0], [1], [0, 0, 1, 1], [], []>} : vector<8x8xbf16>, vector<8x8xbf16>, vector<8x8xf32> -> vector<8x8xf32>
    %122 = arith.truncf %121 : vector<8x8xf32> to vector<8x8xbf16>
    %c0_45 = arith.constant 0 : index
    %c24 = arith.constant 24 : index
    %123 = vector.load %arg19[%c0_45, %c24] : memref<8x32xbf16, #tpu.memory_space<vmem>>, vector<8x8xbf16>
    tpu.vector_store %arg19[%c0_45, %c24], %122 {strides = array<i32>} : memref<8x32xbf16, #tpu.memory_space<vmem>>, vector<8x8xbf16>,
    %c0_46 = arith.constant 0 : index
    %c0_47 = arith.constant 0 : index
    %124 = vector.load %arg19[%c0_46, %c0_47] : memref<8x32xbf16, #tpu.memory_space<vmem>>, vector<8x32xbf16>
    %c0_48 = arith.constant 0 : index
    %c0_49 = arith.constant 0 : index
    %125 = vector.load %arg8[%c0_48, %c0_49] : memref<32x32xbf16, #tpu.memory_space<vmem>>, vector<32x32xbf16>
    %cst_50 = arith.constant dense<0.000000e+00> : vector<8x32xf32>
    %126 = tpu.matmul %124, %125, %cst_50 {dimension_numbers = #tpu.dot_dimension_numbers<[1], [0], [0], [1], [0, 0, 1, 1], [], []>} : vector<8x32xbf16>, vector<32x32xbf16>, vector<8x32xf32> -> vector<8x32xf32>
    %c0_51 = arith.constant 0 : index
    %c0_52 = arith.constant 0 : index
    %127 = vector.load %arg9[%c0_51, %c0_52] : memref<1x32xf32, #tpu.memory_space<vmem>>, vector<1x32xf32>
    %128 = vector.broadcast %127 : vector<1x32xf32> to vector<8x32xf32>
    %129 = arith.addf %126, %128 : vector<8x32xf32>
    %130 = arith.addf %129, %1 : vector<8x32xf32>
    %cst_53 = arith.constant dense<0.000000e+00> : vector<8xf32>
    %131 = vector.multi_reduction <add>, %130, %cst_53 [1] : vector<8x32xf32> to vector<8xf32>
    %132 = vector.shape_cast %131 : vector<8xf32> to vector<8x1xf32>
    %cst_54 = arith.constant 3.200000e+01 : f32
    %133 = vector.broadcast %cst_54 : f32 to vector<8x1xf32>
    %134 = arith.divf %132, %133 : vector<8x1xf32>
    %135 = vector.broadcast %134 : vector<8x1xf32> to vector<8x32xf32>
    %136 = arith.subf %130, %135 : vector<8x32xf32>
    %137 = arith.mulf %136, %136 : vector<8x32xf32>
    %cst_55 = arith.constant dense<0.000000e+00> : vector<8xf32>
    %138 = vector.multi_reduction <add>, %137, %cst_55 [1] : vector<8x32xf32> to vector<8xf32>
    %139 = vector.shape_cast %138 : vector<8xf32> to vector<8x1xf32>
    %cst_56 = arith.constant 3.200000e+01 : f32
    %140 = vector.broadcast %cst_56 : f32 to vector<8x1xf32>
    %141 = arith.divf %139, %140 : vector<8x1xf32>
    %cst_57 = arith.constant 9.99999997E-7 : f32
    %142 = vector.broadcast %cst_57 : f32 to vector<8x1xf32>
    %143 = arith.addf %141, %142 : vector<8x1xf32>
    %144 = math.rsqrt %143 : vector<8x1xf32>
    %145 = vector.broadcast %144 : vector<8x1xf32> to vector<8x32xf32>
    %146 = arith.mulf %136, %145 : vector<8x32xf32>
    %c0_58 = arith.constant 0 : index
    %c0_59 = arith.constant 0 : index
    %147 = vector.load %arg12[%c0_58, %c0_59] : memref<1x32xf32, #tpu.memory_space<vmem>>, vector<1x32xf32>
    %148 = vector.broadcast %147 : vector<1x32xf32> to vector<8x32xf32>
    %149 = arith.mulf %146, %148 : vector<8x32xf32>
    %c0_60 = arith.constant 0 : index
    %c0_61 = arith.constant 0 : index
    %150 = vector.load %arg13[%c0_60, %c0_61] : memref<1x32xf32, #tpu.memory_space<vmem>>, vector<1x32xf32>
    %151 = vector.broadcast %150 : vector<1x32xf32> to vector<8x32xf32>
    %152 = arith.addf %149, %151 : vector<8x32xf32>
    %153 = arith.truncf %152 : vector<8x32xf32> to vector<8x32xbf16>
    %c0_62 = arith.constant 0 : index
    %c0_63 = arith.constant 0 : index
    %154 = vector.load %arg14[%c0_62, %c0_63] : memref<32x2048xbf16, #tpu.memory_space<vmem>>, vector<32x2048xbf16>
    %cst_64 = arith.constant dense<0.000000e+00> : vector<8x2048xf32>
    %155 = tpu.matmul %153, %154, %cst_64 {dimension_numbers = #tpu.dot_dimension_numbers<[1], [0], [0], [1], [0, 0, 1, 1], [], []>} : vector<8x32xbf16>, vector<32x2048xbf16>, vector<8x2048xf32> -> vector<8x2048xf32>
    %c0_65 = arith.constant 0 : index
    %c0_66 = arith.constant 0 : index
    %156 = vector.load %arg15[%c0_65, %c0_66] : memref<1x2048xf32, #tpu.memory_space<vmem>>, vector<1x2048xf32>
    %157 = vector.broadcast %156 : vector<1x2048xf32> to vector<8x2048xf32>
    %158 = arith.addf %155, %157 : vector<8x2048xf32>
    %cst_67 = arith.constant 0.000000e+00 : f32
    %159 = vector.broadcast %cst_67 : f32 to vector<8x2048xf32>
    %160 = arith.maximumf %158, %159 : vector<8x2048xf32>
    %161 = arith.truncf %160 : vector<8x2048xf32> to vector<8x2048xbf16>
    %c0_68 = arith.constant 0 : index
    %c0_69 = arith.constant 0 : index
    %162 = vector.load %arg16[%c0_68, %c0_69] : memref<2048x32xbf16, #tpu.memory_space<vmem>>, vector<2048x32xbf16>
    %cst_70 = arith.constant dense<0.000000e+00> : vector<8x32xf32>
    %163 = tpu.matmul %161, %162, %cst_70 {dimension_numbers = #tpu.dot_dimension_numbers<[1], [0], [0], [1], [0, 0, 1, 1], [], []>} : vector<8x2048xbf16>, vector<2048x32xbf16>, vector<8x32xf32> -> vector<8x32xf32>
    %c0_71 = arith.constant 0 : index
    %c0_72 = arith.constant 0 : index
    %164 = vector.load %arg17[%c0_71, %c0_72] : memref<1x32xf32, #tpu.memory_space<vmem>>, vector<1x32xf32>
    %165 = vector.broadcast %164 : vector<1x32xf32> to vector<8x32xf32>
    %166 = arith.addf %163, %165 : vector<8x32xf32>
    %167 = arith.addf %166, %130 : vector<8x32xf32>
    %c0_73 = arith.constant 0 : index
    %c0_74 = arith.constant 0 : index
    %c0_75 = arith.constant 0 : index
    %168 = vector.load %arg18[%c0_73, %c0_74, %c0_75] : memref<1x8x32xf32, #tpu.memory_space<vmem>>, vector<1x8x32xf32>
    %169 = vector.shape_cast %168 : vector<1x8x32xf32> to vector<8x32xf32>
    %170 = vector.shape_cast %167 : vector<8x32xf32> to vector<1x8x32xf32>
    tpu.vector_store %arg18[%c0_73, %c0_74, %c0_75], %170 {strides = array<i32>} : memref<1x8x32xf32, #tpu.memory_space<vmem>>, vector<1x8x32xf32>,
    return
  }
  func.func @transform_0(%arg0: i32) -> (i32, i32, i32) {
    %c0_i32 = arith.constant 0 : i32
    %c0_i32_0 = arith.constant 0 : i32
    %c0_i32_1 = arith.constant 0 : i32
    return %arg0, %c0_i32, %c0_i32_0 : i32, i32, i32
  }
  func.func @transform_1(%arg0: i32) -> (i32, i32) {
    %c0_i32 = arith.constant 0 : i32
    %c0_i32_0 = arith.constant 0 : i32
    %c0_i32_1 = arith.constant 0 : i32
    return %c0_i32, %c0_i32_0 : i32, i32
  }
  func.func @transform_2(%arg0: i32) -> (i32, i32) {
    %c0_i32 = arith.constant 0 : i32
    %c0_i32_0 = arith.constant 0 : i32
    %c0_i32_1 = arith.constant 0 : i32
    return %c0_i32, %c0_i32_0 : i32, i32
  }
  func.func @transform_3(%arg0: i32) -> (i32, i32) {
    %c0_i32 = arith.constant 0 : i32
    %c0_i32_0 = arith.constant 0 : i32
    %c0_i32_1 = arith.constant 0 : i32
    return %c0_i32, %c0_i32_0 : i32, i32
  }
  func.func @transform_4(%arg0: i32) -> (i32, i32) {
    %c0_i32 = arith.constant 0 : i32
    %c0_i32_0 = arith.constant 0 : i32
    %c0_i32_1 = arith.constant 0 : i32
    return %c0_i32, %c0_i32_0 : i32, i32
  }
  func.func @transform_5(%arg0: i32) -> (i32, i32) {
    %c0_i32 = arith.constant 0 : i32
    %c0_i32_0 = arith.constant 0 : i32
    %c0_i32_1 = arith.constant 0 : i32
    return %c0_i32, %c0_i32_0 : i32, i32
  }
  func.func @transform_6(%arg0: i32) -> (i32, i32) {
    %c0_i32 = arith.constant 0 : i32
    %c0_i32_0 = arith.constant 0 : i32
    %c0_i32_1 = arith.constant 0 : i32
    return %c0_i32, %c0_i32_0 : i32, i32
  }
  func.func @transform_7(%arg0: i32) -> (i32, i32) {
    %c0_i32 = arith.constant 0 : i32
    %c0_i32_0 = arith.constant 0 : i32
    %c0_i32_1 = arith.constant 0 : i32
    return %c0_i32, %c0_i32_0 : i32, i32
  }
  func.func @transform_8(%arg0: i32) -> (i32, i32) {
    %c0_i32 = arith.constant 0 : i32
    %c0_i32_0 = arith.constant 0 : i32
    %c0_i32_1 = arith.constant 0 : i32
    return %c0_i32, %c0_i32_0 : i32, i32
  }
  func.func @transform_9(%arg0: i32) -> (i32, i32) {
    %c0_i32 = arith.constant 0 : i32
    %c0_i32_0 = arith.constant 0 : i32
    %c0_i32_1 = arith.constant 0 : i32
    return %c0_i32, %c0_i32_0 : i32, i32
  }
  func.func @transform_10(%arg0: i32) -> (i32, i32) {
    %c0_i32 = arith.constant 0 : i32
    %c0_i32_0 = arith.constant 0 : i32
    %c0_i32_1 = arith.constant 0 : i32
    return %c0_i32, %c0_i32_0 : i32, i32
  }
  func.func @transform_11(%arg0: i32) -> (i32, i32) {
    %c0_i32 = arith.constant 0 : i32
    %c0_i32_0 = arith.constant 0 : i32
    %c0_i32_1 = arith.constant 0 : i32
    return %c0_i32, %c0_i32_0 : i32, i32
  }
  func.func @transform_12(%arg0: i32) -> (i32, i32) {
    %c0_i32 = arith.constant 0 : i32
    %c0_i32_0 = arith.constant 0 : i32
    %c0_i32_1 = arith.constant 0 : i32
    return %c0_i32, %c0_i32_0 : i32, i32
  }
  func.func @transform_13(%arg0: i32) -> (i32, i32) {
    %c0_i32 = arith.constant 0 : i32
    %c0_i32_0 = arith.constant 0 : i32
    %c0_i32_1 = arith.constant 0 : i32
    return %c0_i32, %c0_i32_0 : i32, i32
  }
  func.func @transform_14(%arg0: i32) -> (i32, i32) {
    %c0_i32 = arith.constant 0 : i32
    %c0_i32_0 = arith.constant 0 : i32
    %c0_i32_1 = arith.constant 0 : i32
    return %c0_i32, %c0_i32_0 : i32, i32
  }
  func.func @transform_15(%arg0: i32) -> (i32, i32) {
    %c0_i32 = arith.constant 0 : i32
    %c0_i32_0 = arith.constant 0 : i32
    %c0_i32_1 = arith.constant 0 : i32
    return %c0_i32, %c0_i32_0 : i32, i32
  }
  func.func @transform_16(%arg0: i32) -> (i32, i32) {
    %c0_i32 = arith.constant 0 : i32
    %c0_i32_0 = arith.constant 0 : i32
    %c0_i32_1 = arith.constant 0 : i32
    return %c0_i32, %c0_i32_0 : i32, i32
  }
  func.func @transform_17(%arg0: i32) -> (i32, i32, i32) {
    %c0_i32 = arith.constant 0 : i32
    %c0_i32_0 = arith.constant 0 : i32
    %c0_i32_1 = arith.constant 0 : i32
    return %arg0, %c0_i32, %c0_i32_0 : i32, i32, i32
  }
}

</mosaic_0001>

<llo_original>
// kernel: transformer_block.1
$region0: #{transformer_block.1}
  #allocation0 [shape = 'u32[]', space=smem, size = 0x4, offset = 0x4, fixed_abs, tag = 'smem constant byte address 0x4 - core index']
  #allocation1 [shape = 'u32[144,128]{1,0:T(1,128)}', space=vmem, size = 0x12000, scoped, tag = 'internal scratch']
  #allocation2 [shape = 'bf16[8,32]{1,0:T(8,128)(2,1)}', space=vmem, size = 0x800, scoped, tag = 'scratch operand']
  %s0 = inlined_call_operand.vmem [shape: f32[2,8,32], index: 0, kind: input, shape index: {}]
  %s1 = inlined_call_operand.vmem [shape: bf16[32,32], index: 1, kind: input, shape index: {}]
  %s2 = inlined_call_operand.vmem [shape: f32[1,32], index: 2, kind: input, shape index: {}]
  %s3 = inlined_call_operand.vmem [shape: bf16[32,32], index: 3, kind: input, shape index: {}]
  %s4 = inlined_call_operand.vmem [shape: f32[1,32], index: 4, kind: input, shape index: {}]
  %s5 = inlined_call_operand.vmem [shape: bf16[32,32], index: 5, kind: input, shape index: {}]
  %s6 = inlined_call_operand.vmem [shape: f32[1,32], index: 6, kind: input, shape index: {}]
  %s7 = inlined_call_operand.vmem [shape: bf16[32,32], index: 7, kind: input, shape index: {}]
  %s8 = inlined_call_operand.vmem [shape: f32[1,32], index: 8, kind: input, shape index: {}]
  %s9 = inlined_call_operand.vmem [shape: f32[1,32], index: 9, kind: input, shape index: {}]
  %s10 = inlined_call_operand.vmem [shape: f32[1,32], index: 10, kind: input, shape index: {}]
  %s11 = inlined_call_operand.vmem [shape: f32[1,32], index: 11, kind: input, shape index: {}]
  %s12 = inlined_call_operand.vmem [shape: f32[1,32], index: 12, kind: input, shape index: {}]
  %s13 = inlined_call_operand.vmem [shape: bf16[32,2048], index: 13, kind: input, shape index: {}]
  %s14 = inlined_call_operand.vmem [shape: f32[1,2048], index: 14, kind: input, shape index: {}]
  %s15 = inlined_call_operand.vmem [shape: bf16[2048,32], index: 15, kind: input, shape index: {}]
  %s16 = inlined_call_operand.vmem [shape: f32[1,32], index: 16, kind: input, shape index: {}]
  %s17 = inlined_call_operand.hbm [shape: f32[2,8,32], index: 17, kind: output, shape index: {}]
  %s18 = sld [smem:[#allocation0]]
  $region101: #{transformer_block.1} parent=0
    _
  %s20 = ssub.s32 1, %s18
  %s21 = scalar_select 0, %s20, %s18
  $region1: #{transformer_block.1} parent=0
    #allocation3 [shape = 'u8[8192]{0}', space=vmem, size = 0x2000, scoped, tag = 'output window, operand 0']
    #allocation4 [shape = 's32[2]{0}', space=sflag, size = 0x8, scoped, tag = 'scoped memory for transformer_block.1']
    %22 = vsyncpa [#allocation4], 0
    %s23 = scalar_lea.sflag [#allocation4], 1
    %24 = vsyncpa %s23, 0
    loop: start=0, step=1, limit=4
    $region2: #{transformer_block.1} parent=1 // loop_pre_header
      _
    $region3: #{transformer_block.1} parent=1 // loop_header
      %s26 = sphi 0, %s30
      %p27 = scmp.ge.s32.totalorder %s26, 4
      %s36 = sphi 0, %s38
      %s39 = sphi 0, %s36
      %s40 = sphi 0, %s39
      %s56 = sphi 0, %s40
      %s60 = sphi 0, %s60
      %s62 = sphi 0, %s60
      %s63 = sphi 0, %s62
      %s77 = sphi 0, %s63
      %s81 = sphi 0, %s81
      %s83 = sphi 0, %s81
      %s84 = sphi 0, %s83
      %s98 = sphi 0, %s84
      %s102 = sphi 0, %s102
      %s104 = sphi 0, %s102
      %s105 = sphi 0, %s104
      %s119 = sphi 0, %s105
      %s123 = sphi 0, %s123
      %s125 = sphi 0, %s123
      %s126 = sphi 0, %s125
      %s140 = sphi 0, %s126
      %s144 = sphi 0, %s144
      %s146 = sphi 0, %s144
      %s147 = sphi 0, %s146
      %s161 = sphi 0, %s147
      %s165 = sphi 0, %s165
      %s167 = sphi 0, %s165
      %s168 = sphi 0, %s167
      %s182 = sphi 0, %s168
      %s186 = sphi 0, %s186
      %s188 = sphi 0, %s186
      %s189 = sphi 0, %s188
      %s203 = sphi 0, %s189
      %s207 = sphi 0, %s207
      %s209 = sphi 0, %s207
      %s210 = sphi 0, %s209
      %s224 = sphi 0, %s210
      %s228 = sphi 0, %s228
      %s230 = sphi 0, %s228
      %s231 = sphi 0, %s230
      %s245 = sphi 0, %s231
      %s249 = sphi 0, %s249
      %s251 = sphi 0, %s249
      %s252 = sphi 0, %s251
      %s266 = sphi 0, %s252
      %s270 = sphi 0, %s270
      %s272 = sphi 0, %s270
      %s273 = sphi 0, %s272
      %s287 = sphi 0, %s273
      %s291 = sphi 0, %s291
      %s293 = sphi 0, %s291
      %s294 = sphi 0, %s293
      %s308 = sphi 0, %s294
      %s312 = sphi 0, %s312
      %s314 = sphi 0, %s312
      %s315 = sphi 0, %s314
      %s329 = sphi 0, %s315
      %s333 = sphi 0, %s333
      %s335 = sphi 0, %s333
      %s336 = sphi 0, %s335
      %s350 = sphi 0, %s336
      %s354 = sphi 0, %s354
      %s356 = sphi 0, %s354
      %s357 = sphi 0, %s356
      %s371 = sphi 0, %s357
      %s375 = sphi 0, %s375
      %s377 = sphi 0, %s375
      %s378 = sphi 0, %s377
      %s392 = sphi 0, %s378
      %s398 = sphi 0, %s400
      %s401 = sphi 0, %s398
      %s402 = sphi 0, %s401
      %s418 = sphi 0, %s402
    $region4: #{transformer_block.1} parent=1 // loop_header_branch
      %29 = sbr.rel (%p27) target = $region8
    $region5: #{transformer_block.1} parent=1 // loop_body
      %s31 = ssub.s32 %s26, 1
      %s32 = ssub.s32 %s26, 2
      %s33 = sadd.s32 %s26, 1
      %s34 = ssub.s32 %s26, %s33
      %p35 = scmp.eq.s32.totalorder %s34, 0
      %s37 = sadd.s32 %s36, 1
      %s38 = scalar_select %p35, %s36, %s37
      %p41 = pneg %p35
      %p42 = scmp.eq.s32.totalorder %s26, 1
      %p43 = por %p41, %p42
      %p44 = scmp.ne.s32.totalorder %s36, %s39
      %p45 = scmp.eq.s32.totalorder %s26, 0
      %p46 = por %p44, %p45
      %p47 = scmp.ne.s32.totalorder %s36, %s39
      %p48 = scmp.eq.s32.totalorder %s31, 1
      %p49 = por %p47, %p48
      %p50 = scmp.ne.s32.totalorder %s39, %s40
      %p51 = scmp.eq.s32.totalorder %s31, 0
      %p52 = por %p50, %p51
      %p53 = scmp.ne.s32.totalorder %s39, %s40
      %p54 = scmp.eq.s32.totalorder %s32, 1
      %p55 = por %p53, %p54
      %p57 = scmp.ne.s32.totalorder %s40, %s56
      %p58 = scmp.eq.s32.totalorder %s32, 0
      %p59 = por %p57, %p58
      %s61 = sadd.s32 %s60, 1
      %p64 = scmp.eq.s32.totalorder %s26, 1
      %p65 = scmp.ne.s32.totalorder %s60, %s62
      %p66 = scmp.eq.s32.totalorder %s26, 0
      %p67 = por %p65, %p66
      %p68 = scmp.ne.s32.totalorder %s60, %s62
      %p69 = scmp.eq.s32.totalorder %s31, 1
      %p70 = por %p68, %p69
      %p71 = scmp.ne.s32.totalorder %s62, %s63
      %p72 = scmp.eq.s32.totalorder %s31, 0
      %p73 = por %p71, %p72
      %p74 = scmp.ne.s32.totalorder %s62, %s63
      %p75 = scmp.eq.s32.totalorder %s32, 1
      %p76 = por %p74, %p75
      %p78 = scmp.ne.s32.totalorder %s63, %s77
      %p79 = scmp.eq.s32.totalorder %s32, 0
      %p80 = por %p78, %p79
      %s82 = sadd.s32 %s81, 1
      %p85 = scmp.eq.s32.totalorder %s26, 1
      %p86 = scmp.ne.s32.totalorder %s81, %s83
      %p87 = scmp.eq.s32.totalorder %s26, 0
      %p88 = por %p86, %p87
      %p89 = scmp.ne.s32.totalorder %s81, %s83
      %p90 = scmp.eq.s32.totalorder %s31, 1
      %p91 = por %p89, %p90
      %p92 = scmp.ne.s32.totalorder %s83, %s84
      %p93 = scmp.eq.s32.totalorder %s31, 0
      %p94 = por %p92, %p93
      %p95 = scmp.ne.s32.totalorder %s83, %s84
      %p96 = scmp.eq.s32.totalorder %s32, 1
      %p97 = por %p95, %p96
      %p99 = scmp.ne.s32.totalorder %s84, %s98
      %p100 = scmp.eq.s32.totalorder %s32, 0
      %p101 = por %p99, %p100
      %s103 = sadd.s32 %s102, 1
      %p106 = scmp.eq.s32.totalorder %s26, 1
      %p107 = scmp.ne.s32.totalorder %s102, %s104
      %p108 = scmp.eq.s32.totalorder %s26, 0
      %p109 = por %p107, %p108
      %p110 = scmp.ne.s32.totalorder %s102, %s104
      %p111 = scmp.eq.s32.totalorder %s31, 1
      %p112 = por %p110, %p111
      %p113 = scmp.ne.s32.totalorder %s104, %s105
      %p114 = scmp.eq.s32.totalorder %s31, 0
      %p115 = por %p113, %p114
      %p116 = scmp.ne.s32.totalorder %s104, %s105
      %p117 = scmp.eq.s32.totalorder %s32, 1
      %p118 = por %p116, %p117
      %p120 = scmp.ne.s32.totalorder %s105, %s119
      %p121 = scmp.eq.s32.totalorder %s32, 0
      %p122 = por %p120, %p121
      %s124 = sadd.s32 %s123, 1
      %p127 = scmp.eq.s32.totalorder %s26, 1
      %p128 = scmp.ne.s32.totalorder %s123, %s125
      %p129 = scmp.eq.s32.totalorder %s26, 0
      %p130 = por %p128, %p129
      %p131 = scmp.ne.s32.totalorder %s123, %s125
      %p132 = scmp.eq.s32.totalorder %s31, 1
      %p133 = por %p131, %p132
      %p134 = scmp.ne.s32.totalorder %s125, %s126
      %p135 = scmp.eq.s32.totalorder %s31, 0
      %p136 = por %p134, %p135
      %p137 = scmp.ne.s32.totalorder %s125, %s126
      %p138 = scmp.eq.s32.totalorder %s32, 1
      %p139 = por %p137, %p138
      %p141 = scmp.ne.s32.totalorder %s126, %s140
      %p142 = scmp.eq.s32.totalorder %s32, 0
      %p143 = por %p141, %p142
      %s145 = sadd.s32 %s144, 1
      %p148 = scmp.eq.s32.totalorder %s26, 1
      %p149 = scmp.ne.s32.totalorder %s144, %s146
      %p150 = scmp.eq.s32.totalorder %s26, 0
      %p151 = por %p149, %p150
      %p152 = scmp.ne.s32.totalorder %s144, %s146
      %p153 = scmp.eq.s32.totalorder %s31, 1
      %p154 = por %p152, %p153
      %p155 = scmp.ne.s32.totalorder %s146, %s147
      %p156 = scmp.eq.s32.totalorder %s31, 0
      %p157 = por %p155, %p156
      %p158 = scmp.ne.s32.totalorder %s146, %s147
      %p159 = scmp.eq.s32.totalorder %s32, 1
      %p160 = por %p158, %p159
      %p162 = scmp.ne.s32.totalorder %s147, %s161
      %p163 = scmp.eq.s32.totalorder %s32, 0
      %p164 = por %p162, %p163
      %s166 = sadd.s32 %s165, 1
      %p169 = scmp.eq.s32.totalorder %s26, 1
      %p170 = scmp.ne.s32.totalorder %s165, %s167
      %p171 = scmp.eq.s32.totalorder %s26, 0
      %p172 = por %p170, %p171
      %p173 = scmp.ne.s32.totalorder %s165, %s167
      %p174 = scmp.eq.s32.totalorder %s31, 1
      %p175 = por %p173, %p174
      %p176 = scmp.ne.s32.totalorder %s167, %s168
      %p177 = scmp.eq.s32.totalorder %s31, 0
      %p178 = por %p176, %p177
      %p179 = scmp.ne.s32.totalorder %s167, %s168
      %p180 = scmp.eq.s32.totalorder %s32, 1
      %p181 = por %p179, %p180
      %p183 = scmp.ne.s32.totalorder %s168, %s182
      %p184 = scmp.eq.s32.totalorder %s32, 0
      %p185 = por %p183, %p184
      %s187 = sadd.s32 %s186, 1
      %p190 = scmp.eq.s32.totalorder %s26, 1
      %p191 = scmp.ne.s32.totalorder %s186, %s188
      %p192 = scmp.eq.s32.totalorder %s26, 0
      %p193 = por %p191, %p192
      %p194 = scmp.ne.s32.totalorder %s186, %s188
      %p195 = scmp.eq.s32.totalorder %s31, 1
      %p196 = por %p194, %p195
      %p197 = scmp.ne.s32.totalorder %s188, %s189
      %p198 = scmp.eq.s32.totalorder %s31, 0
      %p199 = por %p197, %p198
      %p200 = scmp.ne.s32.totalorder %s188, %s189
      %p201 = scmp.eq.s32.totalorder %s32, 1
      %p202 = por %p200, %p201
      %p204 = scmp.ne.s32.totalorder %s189, %s203
      %p205 = scmp.eq.s32.totalorder %s32, 0
      %p206 = por %p204, %p205
      %s208 = sadd.s32 %s207, 1
      %p211 = scmp.eq.s32.totalorder %s26, 1
      %p212 = scmp.ne.s32.totalorder %s207, %s209
      %p213 = scmp.eq.s32.totalorder %s26, 0
      %p214 = por %p212, %p213
      %p215 = scmp.ne.s32.totalorder %s207, %s209
      %p216 = scmp.eq.s32.totalorder %s31, 1
      %p217 = por %p215, %p216
      %p218 = scmp.ne.s32.totalorder %s209, %s210
      %p219 = scmp.eq.s32.totalorder %s31, 0
      %p220 = por %p218, %p219
      %p221 = scmp.ne.s32.totalorder %s209, %s210
      %p222 = scmp.eq.s32.totalorder %s32, 1
      %p223 = por %p221, %p222
      %p225 = scmp.ne.s32.totalorder %s210, %s224
      %p226 = scmp.eq.s32.totalorder %s32, 0
      %p227 = por %p225, %p226
      %s229 = sadd.s32 %s228, 1
      %p232 = scmp.eq.s32.totalorder %s26, 1
      %p233 = scmp.ne.s32.totalorder %s228, %s230
      %p234 = scmp.eq.s32.totalorder %s26, 0
      %p235 = por %p233, %p234
      %p236 = scmp.ne.s32.totalorder %s228, %s230
      %p237 = scmp.eq.s32.totalorder %s31, 1
      %p238 = por %p236, %p237
      %p239 = scmp.ne.s32.totalorder %s230, %s231
      %p240 = scmp.eq.s32.totalorder %s31, 0
      %p241 = por %p239, %p240
      %p242 = scmp.ne.s32.totalorder %s230, %s231
      %p243 = scmp.eq.s32.totalorder %s32, 1
      %p244 = por %p242, %p243
      %p246 = scmp.ne.s32.totalorder %s231, %s245
      %p247 = scmp.eq.s32.totalorder %s32, 0
      %p248 = por %p246, %p247
      %s250 = sadd.s32 %s249, 1
      %p253 = scmp.eq.s32.totalorder %s26, 1
      %p254 = scmp.ne.s32.totalorder %s249, %s251
      %p255 = scmp.eq.s32.totalorder %s26, 0
      %p256 = por %p254, %p255
      %p257 = scmp.ne.s32.totalorder %s249, %s251
      %p258 = scmp.eq.s32.totalorder %s31, 1
      %p259 = por %p257, %p258
      %p260 = scmp.ne.s32.totalorder %s251, %s252
      %p261 = scmp.eq.s32.totalorder %s31, 0
      %p262 = por %p260, %p261
      %p263 = scmp.ne.s32.totalorder %s251, %s252
      %p264 = scmp.eq.s32.totalorder %s32, 1
      %p265 = por %p263, %p264
      %p267 = scmp.ne.s32.totalorder %s252, %s266
      %p268 = scmp.eq.s32.totalorder %s32, 0
      %p269 = por %p267, %p268
      %s271 = sadd.s32 %s270, 1
      %p274 = scmp.eq.s32.totalorder %s26, 1
      %p275 = scmp.ne.s32.totalorder %s270, %s272
      %p276 = scmp.eq.s32.totalorder %s26, 0
      %p277 = por %p275, %p276
      %p278 = scmp.ne.s32.totalorder %s270, %s272
      %p279 = scmp.eq.s32.totalorder %s31, 1
      %p280 = por %p278, %p279
      %p281 = scmp.ne.s32.totalorder %s272, %s273
      %p282 = scmp.eq.s32.totalorder %s31, 0
      %p283 = por %p281, %p282
      %p284 = scmp.ne.s32.totalorder %s272, %s273
      %p285 = scmp.eq.s32.totalorder %s32, 1
      %p286 = por %p284, %p285
      %p288 = scmp.ne.s32.totalorder %s273, %s287
      %p289 = scmp.eq.s32.totalorder %s32, 0
      %p290 = por %p288, %p289
      %s292 = sadd.s32 %s291, 1
      %p295 = scmp.eq.s32.totalorder %s26, 1
      %p296 = scmp.ne.s32.totalorder %s291, %s293
      %p297 = scmp.eq.s32.totalorder %s26, 0
      %p298 = por %p296, %p297
      %p299 = scmp.ne.s32.totalorder %s291, %s293
      %p300 = scmp.eq.s32.totalorder %s31, 1
      %p301 = por %p299, %p300
      %p302 = scmp.ne.s32.totalorder %s293, %s294
      %p303 = scmp.eq.s32.totalorder %s31, 0
      %p304 = por %p302, %p303
      %p305 = scmp.ne.s32.totalorder %s293, %s294
      %p306 = scmp.eq.s32.totalorder %s32, 1
      %p307 = por %p305, %p306
      %p309 = scmp.ne.s32.totalorder %s294, %s308
      %p310 = scmp.eq.s32.totalorder %s32, 0
      %p311 = por %p309, %p310
      %s313 = sadd.s32 %s312, 1
      %p316 = scmp.eq.s32.totalorder %s26, 1
      %p317 = scmp.ne.s32.totalorder %s312, %s314
      %p318 = scmp.eq.s32.totalorder %s26, 0
      %p319 = por %p317, %p318
      %p320 = scmp.ne.s32.totalorder %s312, %s314
      %p321 = scmp.eq.s32.totalorder %s31, 1
      %p322 = por %p320, %p321
      %p323 = scmp.ne.s32.totalorder %s314, %s315
      %p324 = scmp.eq.s32.totalorder %s31, 0
      %p325 = por %p323, %p324
      %p326 = scmp.ne.s32.totalorder %s314, %s315
      %p327 = scmp.eq.s32.totalorder %s32, 1
      %p328 = por %p326, %p327
      %p330 = scmp.ne.s32.totalorder %s315, %s329
      %p331 = scmp.eq.s32.totalorder %s32, 0
      %p332 = por %p330, %p331
      %s334 = sadd.s32 %s333, 1
      %p337 = scmp.eq.s32.totalorder %s26, 1
      %p338 = scmp.ne.s32.totalorder %s333, %s335
      %p339 = scmp.eq.s32.totalorder %s26, 0
      %p340 = por %p338, %p339
      %p341 = scmp.ne.s32.totalorder %s333, %s335
      %p342 = scmp.eq.s32.totalorder %s31, 1
      %p343 = por %p341, %p342
      %p344 = scmp.ne.s32.totalorder %s335, %s336
      %p345 = scmp.eq.s32.totalorder %s31, 0
      %p346 = por %p344, %p345
      %p347 = scmp.ne.s32.totalorder %s335, %s336
      %p348 = scmp.eq.s32.totalorder %s32, 1
      %p349 = por %p347, %p348
      %p351 = scmp.ne.s32.totalorder %s336, %s350
      %p352 = scmp.eq.s32.totalorder %s32, 0
      %p353 = por %p351, %p352
      %s355 = sadd.s32 %s354, 1
      %p358 = scmp.eq.s32.totalorder %s26, 1
      %p359 = scmp.ne.s32.totalorder %s354, %s356
      %p360 = scmp.eq.s32.totalorder %s26, 0
      %p361 = por %p359, %p360
      %p362 = scmp.ne.s32.totalorder %s354, %s356
      %p363 = scmp.eq.s32.totalorder %s31, 1
      %p364 = por %p362, %p363
      %p365 = scmp.ne.s32.totalorder %s356, %s357
      %p366 = scmp.eq.s32.totalorder %s31, 0
      %p367 = por %p365, %p366
      %p368 = scmp.ne.s32.totalorder %s356, %s357
      %p369 = scmp.eq.s32.totalorder %s32, 1
      %p370 = por %p368, %p369
      %p372 = scmp.ne.s32.totalorder %s357, %s371
      %p373 = scmp.eq.s32.totalorder %s32, 0
      %p374 = por %p372, %p373
      %s376 = sadd.s32 %s375, 1
      %p379 = scmp.eq.s32.totalorder %s26, 1
      %p380 = scmp.ne.s32.totalorder %s375, %s377
      %p381 = scmp.eq.s32.totalorder %s26, 0
      %p382 = por %p380, %p381
      %p383 = scmp.ne.s32.totalorder %s375, %s377
      %p384 = scmp.eq.s32.totalorder %s31, 1
      %p385 = por %p383, %p384
      %p386 = scmp.ne.s32.totalorder %s377, %s378
      %p387 = scmp.eq.s32.totalorder %s31, 0
      %p388 = por %p386, %p387
      %p389 = scmp.ne.s32.totalorder %s377, %s378
      %p390 = scmp.eq.s32.totalorder %s32, 1
      %p391 = por %p389, %p390
      %p393 = scmp.ne.s32.totalorder %s378, %s392
      %p394 = scmp.eq.s32.totalorder %s32, 0
      %p395 = por %p393, %p394
      %s396 = ssub.s32 %s26, %s33
      %p397 = scmp.eq.s32.totalorder %s396, 0
      %s399 = sadd.s32 %s398, 1
      %s400 = scalar_select %p397, %s398, %s399
      %p403 = pneg %p397
      %p404 = scmp.eq.s32.totalorder %s26, 1
      %p405 = por %p403, %p404
      %p406 = scmp.ne.s32.totalorder %s398, %s401
      %p407 = scmp.eq.s32.totalorder %s26, 0
      %p408 = por %p406, %p407
      %p409 = scmp.ne.s32.totalorder %s398, %s401
      %p410 = scmp.eq.s32.totalorder %s31, 1
      %p411 = por %p409, %p410
      %p412 = scmp.ne.s32.totalorder %s401, %s402
      %p413 = scmp.eq.s32.totalorder %s31, 0
      %p414 = por %p412, %p413
      %p415 = scmp.ne.s32.totalorder %s401, %s402
      %p416 = scmp.eq.s32.totalorder %s32, 1
      %p417 = por %p415, %p416
      %p419 = scmp.ne.s32.totalorder %s402, %s418
      %p420 = scmp.eq.s32.totalorder %s32, 0
      %p421 = por %p419, %p420
      %p422 = scmp.le.s32.totalorder 1, %s26
      %p423 = scmp.lt.s32.totalorder %s26, 3
      %p424 = pnand %p422, %p423
      %p425 = pneg %p424
      // Predicated region
      $region9: #{transformer_block.1} parent=5 // pred_check
        _
      $region10: #{transformer_block.1} parent=5 // pred_check_branch
        %427 = sbr.rel (%p424) target = $region12
      $region11: #{transformer_block.1} parent=5 // pred_region
        %s428 = ssub.s32 %s26, 1
        // Predicated region
        $region13: #{transformer_block.1} parent=11 // pred_check
          %p429 = pneg %p73
        $region14: #{transformer_block.1} parent=11 // pred_check_branch
          %431 = sbr.rel (%p429) target = $region16
        $region15: #{transformer_block.1} parent=11 // pred_region
          _
        $region16: #{transformer_block.1} parent=11 // pred_fallthru
          _
        // Predicated region
        $region17: #{transformer_block.1} parent=11 // pred_check
          %p432 = pneg %p94
        $region18: #{transformer_block.1} parent=11 // pred_check_branch
          %434 = sbr.rel (%p432) target = $region20
        $region19: #{transformer_block.1} parent=11 // pred_region
          _
        $region20: #{transformer_block.1} parent=11 // pred_fallthru
          _
        // Predicated region
        $region21: #{transformer_block.1} parent=11 // pred_check
          %p435 = pneg %p115
        $region22: #{transformer_block.1} parent=11 // pred_check_branch
          %437 = sbr.rel (%p435) target = $region24
        $region23: #{transformer_block.1} parent=11 // pred_region
          _
        $region24: #{transformer_block.1} parent=11 // pred_fallthru
          _
        // Predicated region
        $region25: #{transformer_block.1} parent=11 // pred_check
          %p438 = pneg %p136
        $region26: #{transformer_block.1} parent=11 // pred_check_branch
          %440 = sbr.rel (%p438) target = $region28
        $region27: #{transformer_block.1} parent=11 // pred_region
          _
        $region28: #{transformer_block.1} parent=11 // pred_fallthru
          _
        // Predicated region
        $region29: #{transformer_block.1} parent=11 // pred_check
          %p441 = pneg %p157
        $region30: #{transformer_block.1} parent=11 // pred_check_branch
          %443 = sbr.rel (%p441) target = $region32
        $region31: #{transformer_block.1} parent=11 // pred_region
          _
        $region32: #{transformer_block.1} parent=11 // pred_fallthru
          _
        // Predicated region
        $region33: #{transformer_block.1} parent=11 // pred_check
          %p444 = pneg %p178
        $region34: #{transformer_block.1} parent=11 // pred_check_branch
          %446 = sbr.rel (%p444) target = $region36
        $region35: #{transformer_block.1} parent=11 // pred_region
          _
        $region36: #{transformer_block.1} parent=11 // pred_fallthru
          _
        // Predicated region
        $region37: #{transformer_block.1} parent=11 // pred_check
          %p447 = pneg %p199
        $region38: #{transformer_block.1} parent=11 // pred_check_branch
          %449 = sbr.rel (%p447) target = $region40
        $region39: #{transformer_block.1} parent=11 // pred_region
          _
        $region40: #{transformer_block.1} parent=11 // pred_fallthru
          _
        // Predicated region
        $region41: #{transformer_block.1} parent=11 // pred_check
          %p450 = pneg %p220
        $region42: #{transformer_block.1} parent=11 // pred_check_branch
          %452 = sbr.rel (%p450) target = $region44
        $region43: #{transformer_block.1} parent=11 // pred_region
          _
        $region44: #{transformer_block.1} parent=11 // pred_fallthru
          _
        // Predicated region
        $region45: #{transformer_block.1} parent=11 // pred_check
          %p453 = pneg %p241
        $region46: #{transformer_block.1} parent=11 // pred_check_branch
          %455 = sbr.rel (%p453) target = $region48
        $region47: #{transformer_block.1} parent=11 // pred_region
          _
        $region48: #{transformer_block.1} parent=11 // pred_fallthru
          _
        // Predicated region
        $region49: #{transformer_block.1} parent=11 // pred_check
          %p456 = pneg %p262
        $region50: #{transformer_block.1} parent=11 // pred_check_branch
          %458 = sbr.rel (%p456) target = $region52
        $region51: #{transformer_block.1} parent=11 // pred_region
          _
        $region52: #{transformer_block.1} parent=11 // pred_fallthru
          _
        // Predicated region
        $region53: #{transformer_block.1} parent=11 // pred_check
          %p459 = pneg %p283
        $region54: #{transformer_block.1} parent=11 // pred_check_branch
          %461 = sbr.rel (%p459) target = $region56
        $region55: #{transformer_block.1} parent=11 // pred_region
          _
        $region56: #{transformer_block.1} parent=11 // pred_fallthru
          _
        // Predicated region
        $region57: #{transformer_block.1} parent=11 // pred_check
          %p462 = pneg %p304
        $region58: #{transformer_block.1} parent=11 // pred_check_branch
          %464 = sbr.rel (%p462) target = $region60
        $region59: #{transformer_block.1} parent=11 // pred_region
          _
        $region60: #{transformer_block.1} parent=11 // pred_fallthru
          _
        // Predicated region
        $region61: #{transformer_block.1} parent=11 // pred_check
          %p465 = pneg %p325
        $region62: #{transformer_block.1} parent=11 // pred_check_branch
          %467 = sbr.rel (%p465) target = $region64
        $region63: #{transformer_block.1} parent=11 // pred_region
          _
        $region64: #{transformer_block.1} parent=11 // pred_fallthru
          _
        // Predicated region
        $region65: #{transformer_block.1} parent=11 // pred_check
          %p468 = pneg %p346
        $region66: #{transformer_block.1} parent=11 // pred_check_branch
          %470 = sbr.rel (%p468) target = $region68
        $region67: #{transformer_block.1} parent=11 // pred_region
          _
        $region68: #{transformer_block.1} parent=11 // pred_fallthru
          _
        // Predicated region
        $region69: #{transformer_block.1} parent=11 // pred_check
          %p471 = pneg %p367
        $region70: #{transformer_block.1} parent=11 // pred_check_branch
          %473 = sbr.rel (%p471) target = $region72
        $region71: #{transformer_block.1} parent=11 // pred_region
          _
        $region72: #{transformer_block.1} parent=11 // pred_fallthru
          _
        // Predicated region
        $region73: #{transformer_block.1} parent=11 // pred_check
          %p474 = pneg %p388
        $region74: #{transformer_block.1} parent=11 // pred_check_branch
          %476 = sbr.rel (%p474) target = $region76
        $region75: #{transformer_block.1} parent=11 // pred_region
          _
        $region76: #{transformer_block.1} parent=11 // pred_fallthru
          _
      $region12: #{transformer_block.1} parent=5 // pred_fallthru
        _
      %p477 = scmp.lt.s32.totalorder %s26, 2
      // Predicated region
      $region77: #{transformer_block.1} parent=5 // pred_check
        %p478 = pneg %p477
      $region78: #{transformer_block.1} parent=5 // pred_check_branch
        %480 = sbr.rel (%p478) target = $region80
      $region79: #{transformer_block.1} parent=5 // pred_region
        // Predicated region
        $region81: #{transformer_block.1} parent=79 // pred_check
          %p481 = pneg %p46
        $region82: #{transformer_block.1} parent=79 // pred_check_branch
          %483 = sbr.rel (%p481) target = $region84
        $region83: #{transformer_block.1} parent=79 // pred_region
          %p484 = scmp.lt.s32.totalorder %s26, 1
          %s485 = scalar_select %p484, %s26, 1
          %s486 = smul.addr %s485, 8
          %s487 = scalar_lea.vmem %s0, %s486
        $region84: #{transformer_block.1} parent=79 // pred_fallthru
          _
      $region80: #{transformer_block.1} parent=5 // pred_fallthru
        _
      %p488 = scmp.le.s32.totalorder 1, %s26
      %p489 = scmp.lt.s32.totalorder %s26, 3
      %p490 = pnand %p488, %p489
      %p491 = pneg %p490
      // Predicated region
      $region85: #{transformer_block.1} parent=5 // pred_check
        _
      $region86: #{transformer_block.1} parent=5 // pred_check_branch
        %493 = sbr.rel (%p490) target = $region88
      $region87: #{transformer_block.1} parent=5 // pred_region
        %s494 = ssub.s32 %s26, 1
        %p495 = scmp.lt.s32.totalorder %s31, 1
        %s496 = scalar_select %p495, %s31, 1
        %s497 = smul.addr %s496, 8
        %s498 = scalar_lea.vmem %s0, %s497
        %p499 = pneg %p52
        %p500 = pneg %p49
        %p501 = pneg %p73
        %p502 = pneg %p70
        %p503 = pneg %p94
        %p504 = pneg %p91
        %p505 = pneg %p115
        %p506 = pneg %p112
        %p507 = pneg %p136
        %p508 = pneg %p133
        %p509 = pneg %p157
        %p510 = pneg %p154
        %p511 = pneg %p178
        %p512 = pneg %p175
        %p513 = pneg %p199
        %p514 = pneg %p196
        %p515 = pneg %p220
        %p516 = pneg %p217
        %p517 = pneg %p241
        %p518 = pneg %p238
        %p519 = pneg %p262
        %p520 = pneg %p259
        %p521 = pneg %p283
        %p522 = pneg %p280
        %p523 = pneg %p304
        %p524 = pneg %p301
        %p525 = pneg %p325
        %p526 = pneg %p322
        %p527 = pneg %p346
        %p528 = pneg %p343
        %p529 = pneg %p367
        %p530 = pneg %p364
        %p531 = pneg %p388
        %p532 = pneg %p385
        %p533 = pneg %p414
        %p534 = pneg %p411
        %s535 = sand.u32 %s401, 1
        %s536 = scalar_lea.sflag [#allocation4], %s535
        %s537 = sand.u32 %s401, 1
        %s538 = smul.addr %s537, 8
        %s539 = scalar_lea.vmem [#allocation3], %s538
        %p540 = scmp.lt.s32.totalorder %s31, 1
        %s541 = scalar_select %p540, %s31, 1
        %s542 = smul.addr %s541, 8
        %s543 = scalar_lea.vmem %s0, %s542
        %v545 = vld [vmem:[%s543] sm:$0xff]
        %vm546 = vcmask 261120
        %v547 = vsel %vm546, %v545, 0.0
        %548 = vadd.xlane.f32.xlu0 %v547
        %v549 = vpop.xlane.xlu0 %548
        %v550 = vrcp.pop 32.0
        %v551 = vmul.f32 %v549, %v550
        %v552 = vsub.f32 %v545, %v551
        %v553 = vmul.f32 %v552, %v552
        %v554 = vsel %vm546, %v553, 0.0
        %555 = vadd.xlane.f32.xlu0 %v554
        %v556 = vpop.xlane.xlu0 %555
        %v557 = vmul.f32 %v556, %v550
        %v558 = vadd.f32 %v557, 1e-06
        %v559 = vrsqrt.pop %v558
        %v560 = vmul.f32 %v552, %v559
        %v561 = vld [vmem:[%s9] sm:$0x1]
        %v563 = vlaneseq
        %v564 = vshrl.u32 %v563, 7
        %v565 = vsub.s32 0, %v564
        %v566 = vrot.slane %v561, %v565
        %v568 = vmul.f32 %v560, %v566
        %v569 = vld [vmem:[%s10] sm:$0x1]
        %v571 = vlaneseq
        %v572 = vshrl.u32 %v571, 7
        %v573 = vsub.s32 0, %v572
        %v574 = vrot.slane %v569, %v573
        %v576 = vadd.f32 %v568, %v574
        %v577 = vpack.c.bf16 %v576, %v576
        %v578 = vld [vmem:[%s1] sm:$0xf]
        %v579 = vld [vmem:[%s1 + $0x4] sm:$0xf]
        %v580 = vld [vmem:[%s1 + $0x8] sm:$0xf]
        %v581 = vld [vmem:[%s1 + $0xc] sm:$0xf]
        %v582 = vld [vmem:[%s2] sm:$0x1]
        %v584 = vlaneseq
        %v585 = vshrl.u32 %v584, 7
        %v586 = vsub.s32 0, %v585
        %v587 = vrot.slane %v582, %v586
        %v593 = vunpack.c.l.b16 %v578
        %v594 = vunpack.c.l.b16 %v579
        %v595 = vunpack.c.l.b16 %v580
        %v596 = vunpack.c.l.b16 %v581
        %v597 = vpack.c.b16 %v594, %v593
        %v598 = vpack.c.b16 %v596, %v595
        %v602 = vsel %vm546, %v577, 0
        %604 = vmatprep.subr.bf16.mxu0 0
        %605 = vmatpush1.bf16.msra.mxu0 %v597
        %606 = vmatprep.subr.bf16.mxu0 0
        %607 = vmatpush1.bf16.msra.mxu0 %v598
        %608 = vmatprep.subr.bf16.mxu0 0
        %609 = vmatpush1.bf16.msra.mxu0 0
        %610 = vmatprep.subr.bf16.mxu0 0
        %611 = vmatpush1.bf16.msra.mxu0 0
        %612 = vmatprep.subr.bf16.mxu0 0
        %613 = vmatpush1.bf16.msra.mxu0 0
        %614 = vmatprep.subr.bf16.mxu0 0
        %615 = vmatpush1.bf16.msra.mxu0 0
        %616 = vmatprep.subr.bf16.mxu0 0
        %617 = vmatpush1.bf16.msra.mxu0 0
        %618 = vmatprep.subr.bf16.mxu0 0
        %619 = vmatpush1.bf16.msra.mxu0 0
        %620 = vmatprep.subr.bf16.mxu0 0
        %621 = vmatpush1.bf16.msra.mxu0 0
        %622 = vmatprep.subr.bf16.mxu0 0
        %623 = vmatpush1.bf16.msra.mxu0 0
        %624 = vmatprep.subr.bf16.mxu0 0
        %625 = vmatpush1.bf16.msra.mxu0 0
        %626 = vmatprep.subr.bf16.mxu0 0
        %627 = vmatpush1.bf16.msra.mxu0 0
        %628 = vmatprep.subr.bf16.mxu0 0
        %629 = vmatpush1.bf16.msra.mxu0 0
        %630 = vmatprep.subr.bf16.mxu0 0
        %631 = vmatpush1.bf16.msra.mxu0 0
        %632 = vmatprep.subr.bf16.mxu0 0
        %633 = vmatpush1.bf16.msra.mxu0 0
        %634 = vmatprep.subr.bf16.mxu0 0
        %635 = vmatpush1.bf16.msra.mxu0 0
        %636 = vmatprep.mubr.bf16.mxu0 0
        %637 = vmatmul.mubr.bf16.gmra.mrb[0].mxu0 %v602
        %v638 = vpop.f32.mrb[0].mxu0
        %v639 = vadd.f32 %v587, %v638
        %v640 = vpop.f32.mrb[0].mxu0
        %v641 = vpop.f32.mrb[0].mxu0
        %v642 = vpop.f32.mrb[0].mxu0
        %643 = vdwg.mxu0
        %v644 = vld [vmem:[%s3] sm:$0xf]
        %v645 = vld [vmem:[%s3 + $0x4] sm:$0xf]
        %v646 = vld [vmem:[%s3 + $0x8] sm:$0xf]
        %v647 = vld [vmem:[%s3 + $0xc] sm:$0xf]
        %v648 = vld [vmem:[%s4] sm:$0x1]
        %v650 = vlaneseq
        %v651 = vshrl.u32 %v650, 7
        %v652 = vsub.s32 0, %v651
        %v653 = vrot.slane %v648, %v652
        %v659 = vunpack.c.l.b16 %v644
        %v660 = vunpack.c.l.b16 %v645
        %v661 = vunpack.c.l.b16 %v646
        %v662 = vunpack.c.l.b16 %v647
        %v663 = vpack.c.b16 %v660, %v659
        %v664 = vpack.c.b16 %v662, %v661
        %667 = vmatprep.subr.bf16.mxu0 0
        %668 = vmatpush1.bf16.msra.mxu0 %v663
        %669 = vmatprep.subr.bf16.mxu0 0
        %670 = vmatpush1.bf16.msra.mxu0 %v664
        %671 = vmatprep.subr.bf16.mxu0 0
        %672 = vmatpush1.bf16.msra.mxu0 0
        %673 = vmatprep.subr.bf16.mxu0 0
        %674 = vmatpush1.bf16.msra.mxu0 0
        %675 = vmatprep.subr.bf16.mxu0 0
        %676 = vmatpush1.bf16.msra.mxu0 0
        %677 = vmatprep.subr.bf16.mxu0 0
        %678 = vmatpush1.bf16.msra.mxu0 0
        %679 = vmatprep.subr.bf16.mxu0 0
        %680 = vmatpush1.bf16.msra.mxu0 0
        %681 = vmatprep.subr.bf16.mxu0 0
        %682 = vmatpush1.bf16.msra.mxu0 0
        %683 = vmatprep.subr.bf16.mxu0 0
        %684 = vmatpush1.bf16.msra.mxu0 0
        %685 = vmatprep.subr.bf16.mxu0 0
        %686 = vmatpush1.bf16.msra.mxu0 0
        %687 = vmatprep.subr.bf16.mxu0 0
        %688 = vmatpush1.bf16.msra.mxu0 0
        %689 = vmatprep.subr.bf16.mxu0 0
        %690 = vmatpush1.bf16.msra.mxu0 0
        %691 = vmatprep.subr.bf16.mxu0 0
        %692 = vmatpush1.bf16.msra.mxu0 0
        %693 = vmatprep.subr.bf16.mxu0 0
        %694 = vmatpush1.bf16.msra.mxu0 0
        %695 = vmatprep.subr.bf16.mxu0 0
        %696 = vmatpush1.bf16.msra.mxu0 0
        %697 = vmatprep.subr.bf16.mxu0 0
        %698 = vmatpush1.bf16.msra.mxu0 0
        %699 = vmatprep.mubr.bf16.mxu0 0
        %700 = vmatmul.mubr.bf16.gmra.mrb[0].mxu0 %v602
        %v701 = vpop.f32.mrb[0].mxu0
        %v702 = vadd.f32 %v653, %v701
        %v703 = vpop.f32.mrb[0].mxu0
        %v704 = vpop.f32.mrb[0].mxu0
        %v705 = vpop.f32.mrb[0].mxu0
        %706 = vdwg.mxu0
        %v707 = vld [vmem:[%s5] sm:$0xf]
        %v708 = vld [vmem:[%s5 + $0x4] sm:$0xf]
        %v709 = vld [vmem:[%s5 + $0x8] sm:$0xf]
        %v710 = vld [vmem:[%s5 + $0xc] sm:$0xf]
        %v711 = vld [vmem:[%s6] sm:$0x1]
        %v713 = vlaneseq
        %v714 = vshrl.u32 %v713, 7
        %v715 = vsub.s32 0, %v714
        %v716 = vrot.slane %v711, %v715
        %v722 = vunpack.c.l.b16 %v707
        %v723 = vunpack.c.l.b16 %v708
        %v724 = vunpack.c.l.b16 %v709
        %v725 = vunpack.c.l.b16 %v710
        %v726 = vpack.c.b16 %v723, %v722
        %v727 = vpack.c.b16 %v725, %v724
        %730 = vmatprep.subr.bf16.mxu0 0
        %731 = vmatpush1.bf16.msra.mxu0 %v726
        %732 = vmatprep.subr.bf16.mxu0 0
        %733 = vmatpush1.bf16.msra.mxu0 %v727
        %734 = vmatprep.subr.bf16.mxu0 0
        %735 = vmatpush1.bf16.msra.mxu0 0
        %736 = vmatprep.subr.bf16.mxu0 0
        %737 = vmatpush1.bf16.msra.mxu0 0
        %738 = vmatprep.subr.bf16.mxu0 0
        %739 = vmatpush1.bf16.msra.mxu0 0
        %740 = vmatprep.subr.bf16.mxu0 0
        %741 = vmatpush1.bf16.msra.mxu0 0
        %742 = vmatprep.subr.bf16.mxu0 0
        %743 = vmatpush1.bf16.msra.mxu0 0
        %744 = vmatprep.subr.bf16.mxu0 0
        %745 = vmatpush1.bf16.msra.mxu0 0
        %746 = vmatprep.subr.bf16.mxu0 0
        %747 = vmatpush1.bf16.msra.mxu0 0
        %748 = vmatprep.subr.bf16.mxu0 0
        %749 = vmatpush1.bf16.msra.mxu0 0
        %750 = vmatprep.subr.bf16.mxu0 0
        %751 = vmatpush1.bf16.msra.mxu0 0
        %752 = vmatprep.subr.bf16.mxu0 0
        %753 = vmatpush1.bf16.msra.mxu0 0
        %754 = vmatprep.subr.bf16.mxu0 0
        %755 = vmatpush1.bf16.msra.mxu0 0
        %756 = vmatprep.subr.bf16.mxu0 0
        %757 = vmatpush1.bf16.msra.mxu0 0
        %758 = vmatprep.subr.bf16.mxu0 0
        %759 = vmatpush1.bf16.msra.mxu0 0
        %760 = vmatprep.subr.bf16.mxu0 0
        %761 = vmatpush1.bf16.msra.mxu0 0
        %762 = vmatprep.mubr.bf16.mxu0 0
        %763 = vmatmul.mubr.bf16.gmra.mrb[0].mxu0 %v602
        %v764 = vpop.f32.mrb[0].mxu0
        %v765 = vadd.f32 %v716, %v764
        %v766 = vpop.f32.mrb[0].mxu0
        %v767 = vpop.f32.mrb[0].mxu0
        %v768 = vpop.f32.mrb[0].mxu0
        %769 = vdwg.mxu0
        %v770 = vpack.c.bf16 %v639, %v639
        %v771 = vpack.c.bf16 %v702, %v702
        %v772 = vpack.c.bf16 %v765, %v765
        %vm773 = vcmask 64512
        %v775 = vsel %vm773, %v770, 0
        %v778 = vsel %vm773, %v771, 0
        %780 = vmatprep.subr.bf16.mxu0 0
        %781 = vmatpush1.bf16.xpose.msra.mxu0 %v778
        %782 = vmatprep.subr.bf16.mxu0 0
        %783 = vmatpush1.bf16.xpose.msra.mxu0 0
        %784 = vmatprep.subr.bf16.mxu0 0
        %785 = vmatpush1.bf16.xpose.msra.mxu0 0
        %786 = vmatprep.subr.bf16.mxu0 0
        %787 = vmatpush1.bf16.xpose.msra.mxu0 0
        %788 = vmatprep.subr.bf16.mxu0 0
        %789 = vmatpush1.bf16.xpose.msra.mxu0 0
        %790 = vmatprep.subr.bf16.mxu0 0
        %791 = vmatpush1.bf16.xpose.msra.mxu0 0
        %792 = vmatprep.subr.bf16.mxu0 0
        %793 = vmatpush1.bf16.xpose.msra.mxu0 0
        %794 = vmatprep.subr.bf16.mxu0 0
        %795 = vmatpush1.bf16.xpose.msra.mxu0 0
        %796 = vmatprep.subr.bf16.mxu0 0
        %797 = vmatpush1.bf16.xpose.msra.mxu0 0
        %798 = vmatprep.subr.bf16.mxu0 0
        %799 = vmatpush1.bf16.xpose.msra.mxu0 0
        %800 = vmatprep.subr.bf16.mxu0 0
        %801 = vmatpush1.bf16.xpose.msra.mxu0 0
        %802 = vmatprep.subr.bf16.mxu0 0
        %803 = vmatpush1.bf16.xpose.msra.mxu0 0
        %804 = vmatprep.subr.bf16.mxu0 0
        %805 = vmatpush1.bf16.xpose.msra.mxu0 0
        %806 = vmatprep.subr.bf16.mxu0 0
        %807 = vmatpush1.bf16.xpose.msra.mxu0 0
        %808 = vmatprep.subr.bf16.mxu0 0
        %809 = vmatpush1.bf16.xpose.msra.mxu0 0
        %810 = vmatprep.subr.bf16.mxu0 0
        %811 = vmatpush1.bf16.xpose.msra.mxu0 0
        %812 = vmatprep.mubr.bf16.mxu0 0
        %813 = vmatmul.mubr.bf16.gmra.mrb[0].mxu0 %v775
        %v814 = vpop.f32.mrb[0].mxu0
        %v815 = vadd.f32 0.0, %v814
        %v816 = vpop.f32.mrb[0].mxu0
        %v817 = vpop.f32.mrb[0].mxu0
        %v818 = vpop.f32.mrb[0].mxu0
        %819 = vdwg.mxu0
        %v820 = vsel %vm773, %v815, -inf
        %821 = vmax.xlane.f32.xlu0 %v820
        %v822 = vpop.xlane.xlu0 %821
        %v823 = vsub.f32 %v815, %v822
        %v824 = vmul.f32 %v823, 1.442695
        %v825 = vpow.pop %v824
        %v826 = vsel %vm773, %v825, 0.0
        %827 = vadd.xlane.f32.xlu0 %v826
        %v828 = vpop.xlane.xlu0 %827
        %v829 = vrcp.pop %v828
        %v830 = vmul.f32 %v825, %v829
        %v831 = vpack.c.bf16 %v830, %v830
        %v833 = vsel %vm773, %v831, 0
        %vm835 = vcmask 1043456
        %v837 = vsel %vm835, %v772, 0
        %839 = vmatprep.subr.bf16.mxu0 0
        %840 = vmatpush1.bf16.msra.mxu0 %v837
        %841 = vmatprep.subr.bf16.mxu0 0
        %842 = vmatpush1.bf16.msra.mxu0 0
        %843 = vmatprep.subr.bf16.mxu0 0
        %844 = vmatpush1.bf16.msra.mxu0 0
        %845 = vmatprep.subr.bf16.mxu0 0
        %846 = vmatpush1.bf16.msra.mxu0 0
        %847 = vmatprep.subr.bf16.mxu0 0
        %848 = vmatpush1.bf16.msra.mxu0 0
        %849 = vmatprep.subr.bf16.mxu0 0
        %850 = vmatpush1.bf16.msra.mxu0 0
        %851 = vmatprep.subr.bf16.mxu0 0
        %852 = vmatpush1.bf16.msra.mxu0 0
        %853 = vmatprep.subr.bf16.mxu0 0
        %854 = vmatpush1.bf16.msra.mxu0 0
        %855 = vmatprep.subr.bf16.mxu0 0
        %856 = vmatpush1.bf16.msra.mxu0 0
        %857 = vmatprep.subr.bf16.mxu0 0
        %858 = vmatpush1.bf16.msra.mxu0 0
        %859 = vmatprep.subr.bf16.mxu0 0
        %860 = vmatpush1.bf16.msra.mxu0 0
        %861 = vmatprep.subr.bf16.mxu0 0
        %862 = vmatpush1.bf16.msra.mxu0 0
        %863 = vmatprep.subr.bf16.mxu0 0
        %864 = vmatpush1.bf16.msra.mxu0 0
        %865 = vmatprep.subr.bf16.mxu0 0
        %866 = vmatpush1.bf16.msra.mxu0 0
        %867 = vmatprep.subr.bf16.mxu0 0
        %868 = vmatpush1.bf16.msra.mxu0 0
        %869 = vmatprep.subr.bf16.mxu0 0
        %870 = vmatpush1.bf16.msra.mxu0 0
        %871 = vmatprep.mubr.bf16.mxu0 0
        %872 = vmatmul.mubr.bf16.gmra.mrb[0].mxu0 %v833
        %v873 = vpop.f32.mrb[0].mxu0
        %v874 = vadd.f32 0.0, %v873
        %v875 = vpop.f32.mrb[0].mxu0
        %v876 = vpop.f32.mrb[0].mxu0
        %v877 = vpop.f32.mrb[0].mxu0
        %878 = vdwg.mxu0
        %v879 = vpack.c.bf16 %v874, %v874
        %vm880 = vcmask 60416
        %881 = vst.msk [vmem:[#allocation2] sm:$0xf] %vm880, %v879
        %883 = vrot.lane.b32.xlu0 %v770, 120
        %v884 = vpop.permute.xlu0 %883
        %886 = vrot.lane.b32.xlu0 %v771, 120
        %v887 = vpop.permute.xlu0 %886
        %v889 = vsel %vm773, %v884, 0
        %v892 = vsel %vm773, %v887, 0
        %894 = vmatprep.subr.bf16.mxu0 0
        %895 = vmatpush1.bf16.xpose.msra.mxu0 %v892
        %896 = vmatprep.subr.bf16.mxu0 0
        %897 = vmatpush1.bf16.xpose.msra.mxu0 0
        %898 = vmatprep.subr.bf16.mxu0 0
        %899 = vmatpush1.bf16.xpose.msra.mxu0 0
        %900 = vmatprep.subr.bf16.mxu0 0
        %901 = vmatpush1.bf16.xpose.msra.mxu0 0
        %902 = vmatprep.subr.bf16.mxu0 0
        %903 = vmatpush1.bf16.xpose.msra.mxu0 0
        %904 = vmatprep.subr.bf16.mxu0 0
        %905 = vmatpush1.bf16.xpose.msra.mxu0 0
        %906 = vmatprep.subr.bf16.mxu0 0
        %907 = vmatpush1.bf16.xpose.msra.mxu0 0
        %908 = vmatprep.subr.bf16.mxu0 0
        %909 = vmatpush1.bf16.xpose.msra.mxu0 0
        %910 = vmatprep.subr.bf16.mxu0 0
        %911 = vmatpush1.bf16.xpose.msra.mxu0 0
        %912 = vmatprep.subr.bf16.mxu0 0
        %913 = vmatpush1.bf16.xpose.msra.mxu0 0
        %914 = vmatprep.subr.bf16.mxu0 0
        %915 = vmatpush1.bf16.xpose.msra.mxu0 0
        %916 = vmatprep.subr.bf16.mxu0 0
        %917 = vmatpush1.bf16.xpose.msra.mxu0 0
        %918 = vmatprep.subr.bf16.mxu0 0
        %919 = vmatpush1.bf16.xpose.msra.mxu0 0
        %920 = vmatprep.subr.bf16.mxu0 0
        %921 = vmatpush1.bf16.xpose.msra.mxu0 0
        %922 = vmatprep.subr.bf16.mxu0 0
        %923 = vmatpush1.bf16.xpose.msra.mxu0 0
        %924 = vmatprep.subr.bf16.mxu0 0
        %925 = vmatpush1.bf16.xpose.msra.mxu0 0
        %926 = vmatprep.mubr.bf16.mxu0 0
        %927 = vmatmul.mubr.bf16.gmra.mrb[0].mxu0 %v889
        %v928 = vpop.f32.mrb[0].mxu0
        %v929 = vadd.f32 0.0, %v928
        %v930 = vpop.f32.mrb[0].mxu0
        %v931 = vpop.f32.mrb[0].mxu0
        %v932 = vpop.f32.mrb[0].mxu0
        %933 = vdwg.mxu0
        %v934 = vsel %vm773, %v929, -inf
        %935 = vmax.xlane.f32.xlu0 %v934
        %v936 = vpop.xlane.xlu0 %935
        %v937 = vsub.f32 %v929, %v936
        %v938 = vmul.f32 %v937, 1.442695
        %v939 = vpow.pop %v938
        %v940 = vsel %vm773, %v939, 0.0
        %941 = vadd.xlane.f32.xlu0 %v940
        %v942 = vpop.xlane.xlu0 %941
        %v943 = vrcp.pop %v942
        %v944 = vmul.f32 %v939, %v943
        %v945 = vpack.c.bf16 %v944, %v944
        %947 = vrot.lane.b32.xlu0 %v772, 120
        %v948 = vpop.permute.xlu0 %947
        %v950 = vsel %vm773, %v945, 0
        %v953 = vsel %vm835, %v948, 0
        %955 = vmatprep.subr.bf16.mxu0 0
        %956 = vmatpush1.bf16.msra.mxu0 %v953
        %957 = vmatprep.subr.bf16.mxu0 0
        %958 = vmatpush1.bf16.msra.mxu0 0
        %959 = vmatprep.subr.bf16.mxu0 0
        %960 = vmatpush1.bf16.msra.mxu0 0
        %961 = vmatprep.subr.bf16.mxu0 0
        %962 = vmatpush1.bf16.msra.mxu0 0
        %963 = vmatprep.subr.bf16.mxu0 0
        %964 = vmatpush1.bf16.msra.mxu0 0
        %965 = vmatprep.subr.bf16.mxu0 0
        %966 = vmatpush1.bf16.msra.mxu0 0
        %967 = vmatprep.subr.bf16.mxu0 0
        %968 = vmatpush1.bf16.msra.mxu0 0
        %969 = vmatprep.subr.bf16.mxu0 0
        %970 = vmatpush1.bf16.msra.mxu0 0
        %971 = vmatprep.subr.bf16.mxu0 0
        %972 = vmatpush1.bf16.msra.mxu0 0
        %973 = vmatprep.subr.bf16.mxu0 0
        %974 = vmatpush1.bf16.msra.mxu0 0
        %975 = vmatprep.subr.bf16.mxu0 0
        %976 = vmatpush1.bf16.msra.mxu0 0
        %977 = vmatprep.subr.bf16.mxu0 0
        %978 = vmatpush1.bf16.msra.mxu0 0
        %979 = vmatprep.subr.bf16.mxu0 0
        %980 = vmatpush1.bf16.msra.mxu0 0
        %981 = vmatprep.subr.bf16.mxu0 0
        %982 = vmatpush1.bf16.msra.mxu0 0
        %983 = vmatprep.subr.bf16.mxu0 0
        %984 = vmatpush1.bf16.msra.mxu0 0
        %985 = vmatprep.subr.bf16.mxu0 0
        %986 = vmatpush1.bf16.msra.mxu0 0
        %987 = vmatprep.mubr.bf16.mxu0 0
        %988 = vmatmul.mubr.bf16.gmra.mrb[0].mxu0 %v950
        %v989 = vpop.f32.mrb[0].mxu0
        %v990 = vadd.f32 0.0, %v989
        %v991 = vpop.f32.mrb[0].mxu0
        %v992 = vpop.f32.mrb[0].mxu0
        %v993 = vpop.f32.mrb[0].mxu0
        %994 = vdwg.mxu0
        %v995 = vpack.c.bf16 %v990, %v990
        %v997 = vunpack.c.l.b16 %v995
        %v998 = vpack.c.b16 %v997, %v997
        %999 = vrot.lane.b32.xlu0 %v998, 8
        %v1000 = vpop.permute.xlu0 %999
        %vm1002 = vcmask 126016
        %1003 = vst.msk [vmem:[#allocation2] sm:$0xf] %vm1002, %v1000
        %1004 = vrot.lane.b32.xlu0 %v770, 112
        %v1005 = vpop.permute.xlu0 %1004
        %1006 = vrot.lane.b32.xlu0 %v771, 112
        %v1007 = vpop.permute.xlu0 %1006
        %v1009 = vsel %vm773, %v1005, 0
        %v1012 = vsel %vm773, %v1007, 0
        %1014 = vmatprep.subr.bf16.mxu0 0
        %1015 = vmatpush1.bf16.xpose.msra.mxu0 %v1012
        %1016 = vmatprep.subr.bf16.mxu0 0
        %1017 = vmatpush1.bf16.xpose.msra.mxu0 0
        %1018 = vmatprep.subr.bf16.mxu0 0
        %1019 = vmatpush1.bf16.xpose.msra.mxu0 0
        %1020 = vmatprep.subr.bf16.mxu0 0
        %1021 = vmatpush1.bf16.xpose.msra.mxu0 0
        %1022 = vmatprep.subr.bf16.mxu0 0
        %1023 = vmatpush1.bf16.xpose.msra.mxu0 0
        %1024 = vmatprep.subr.bf16.mxu0 0
        %1025 = vmatpush1.bf16.xpose.msra.mxu0 0
        %1026 = vmatprep.subr.bf16.mxu0 0
        %1027 = vmatpush1.bf16.xpose.msra.mxu0 0
        %1028 = vmatprep.subr.bf16.mxu0 0
        %1029 = vmatpush1.bf16.xpose.msra.mxu0 0
        %1030 = vmatprep.subr.bf16.mxu0 0
        %1031 = vmatpush1.bf16.xpose.msra.mxu0 0
        %1032 = vmatprep.subr.bf16.mxu0 0
        %1033 = vmatpush1.bf16.xpose.msra.mxu0 0
        %1034 = vmatprep.subr.bf16.mxu0 0
        %1035 = vmatpush1.bf16.xpose.msra.mxu0 0
        %1036 = vmatprep.subr.bf16.mxu0 0
        %1037 = vmatpush1.bf16.xpose.msra.mxu0 0
        %1038 = vmatprep.subr.bf16.mxu0 0
        %1039 = vmatpush1.bf16.xpose.msra.mxu0 0
        %1040 = vmatprep.subr.bf16.mxu0 0
        %1041 = vmatpush1.bf16.xpose.msra.mxu0 0
        %1042 = vmatprep.subr.bf16.mxu0 0
        %1043 = vmatpush1.bf16.xpose.msra.mxu0 0
        %1044 = vmatprep.subr.bf16.mxu0 0
        %1045 = vmatpush1.bf16.xpose.msra.mxu0 0
        %1046 = vmatprep.mubr.bf16.mxu0 0
        %1047 = vmatmul.mubr.bf16.gmra.mrb[0].mxu0 %v1009
        %v1048 = vpop.f32.mrb[0].mxu0
        %v1049 = vadd.f32 0.0, %v1048
        %v1050 = vpop.f32.mrb[0].mxu0
        %v1051 = vpop.f32.mrb[0].mxu0
        %v1052 = vpop.f32.mrb[0].mxu0
        %1053 = vdwg.mxu0
        %v1054 = vsel %vm773, %v1049, -inf
        %1055 = vmax.xlane.f32.xlu0 %v1054
        %v1056 = vpop.xlane.xlu0 %1055
        %v1057 = vsub.f32 %v1049, %v1056
        %v1058 = vmul.f32 %v1057, 1.442695
        %v1059 = vpow.pop %v1058
        %v1060 = vsel %vm773, %v1059, 0.0
        %1061 = vadd.xlane.f32.xlu0 %v1060
        %v1062 = vpop.xlane.xlu0 %1061
        %v1063 = vrcp.pop %v1062
        %v1064 = vmul.f32 %v1059, %v1063
        %v1065 = vpack.c.bf16 %v1064, %v1064
        %1066 = vrot.lane.b32.xlu0 %v772, 112
        %v1067 = vpop.permute.xlu0 %1066
        %v1069 = vsel %vm773, %v1065, 0
        %v1072 = vsel %vm835, %v1067, 0
        %1074 = vmatprep.subr.bf16.mxu0 0
        %1075 = vmatpush1.bf16.msra.mxu0 %v1072
        %1076 = vmatprep.subr.bf16.mxu0 0
        %1077 = vmatpush1.bf16.msra.mxu0 0
        %1078 = vmatprep.subr.bf16.mxu0 0
        %1079 = vmatpush1.bf16.msra.mxu0 0
        %1080 = vmatprep.subr.bf16.mxu0 0
        %1081 = vmatpush1.bf16.msra.mxu0 0
        %1082 = vmatprep.subr.bf16.mxu0 0
        %1083 = vmatpush1.bf16.msra.mxu0 0
        %1084 = vmatprep.subr.bf16.mxu0 0
        %1085 = vmatpush1.bf16.msra.mxu0 0
        %1086 = vmatprep.subr.bf16.mxu0 0
        %1087 = vmatpush1.bf16.msra.mxu0 0
        %1088 = vmatprep.subr.bf16.mxu0 0
        %1089 = vmatpush1.bf16.msra.mxu0 0
        %1090 = vmatprep.subr.bf16.mxu0 0
        %1091 = vmatpush1.bf16.msra.mxu0 0
        %1092 = vmatprep.subr.bf16.mxu0 0
        %1093 = vmatpush1.bf16.msra.mxu0 0
        %1094 = vmatprep.subr.bf16.mxu0 0
        %1095 = vmatpush1.bf16.msra.mxu0 0
        %1096 = vmatprep.subr.bf16.mxu0 0
        %1097 = vmatpush1.bf16.msra.mxu0 0
        %1098 = vmatprep.subr.bf16.mxu0 0
        %1099 = vmatpush1.bf16.msra.mxu0 0
        %1100 = vmatprep.subr.bf16.mxu0 0
        %1101 = vmatpush1.bf16.msra.mxu0 0
        %1102 = vmatprep.subr.bf16.mxu0 0
        %1103 = vmatpush1.bf16.msra.mxu0 0
        %1104 = vmatprep.subr.bf16.mxu0 0
        %1105 = vmatpush1.bf16.msra.mxu0 0
        %1106 = vmatprep.mubr.bf16.mxu0 0
        %1107 = vmatmul.mubr.bf16.gmra.mrb[0].mxu0 %v1069
        %v1108 = vpop.f32.mrb[0].mxu0
        %v1109 = vadd.f32 0.0, %v1108
        %v1110 = vpop.f32.mrb[0].mxu0
        %v1111 = vpop.f32.mrb[0].mxu0
        %v1112 = vpop.f32.mrb[0].mxu0
        %1113 = vdwg.mxu0
        %v1114 = vpack.c.bf16 %v1109, %v1109
        %v1116 = vunpack.c.l.b16 %v1114
        %v1117 = vpack.c.b16 %v1116, %v1116
        %1118 = vrot.lane.b32.xlu0 %v1117, 16
        %v1119 = vpop.permute.xlu0 %1118
        %vm1121 = vcmask 191616
        %1122 = vst.msk [vmem:[#allocation2] sm:$0xf] %vm1121, %v1119
        %1123 = vrot.lane.b32.xlu0 %v770, 104
        %v1124 = vpop.permute.xlu0 %1123
        %1125 = vrot.lane.b32.xlu0 %v771, 104
        %v1126 = vpop.permute.xlu0 %1125
        %v1128 = vsel %vm773, %v1124, 0
        %v1131 = vsel %vm773, %v1126, 0
        %1133 = vmatprep.subr.bf16.mxu0 0
        %1134 = vmatpush1.bf16.xpose.msra.mxu0 %v1131
        %1135 = vmatprep.subr.bf16.mxu0 0
        %1136 = vmatpush1.bf16.xpose.msra.mxu0 0
        %1137 = vmatprep.subr.bf16.mxu0 0
        %1138 = vmatpush1.bf16.xpose.msra.mxu0 0
        %1139 = vmatprep.subr.bf16.mxu0 0
        %1140 = vmatpush1.bf16.xpose.msra.mxu0 0
        %1141 = vmatprep.subr.bf16.mxu0 0
        %1142 = vmatpush1.bf16.xpose.msra.mxu0 0
        %1143 = vmatprep.subr.bf16.mxu0 0
        %1144 = vmatpush1.bf16.xpose.msra.mxu0 0
        %1145 = vmatprep.subr.bf16.mxu0 0
        %1146 = vmatpush1.bf16.xpose.msra.mxu0 0
        %1147 = vmatprep.subr.bf16.mxu0 0
        %1148 = vmatpush1.bf16.xpose.msra.mxu0 0
        %1149 = vmatprep.subr.bf16.mxu0 0
        %1150 = vmatpush1.bf16.xpose.msra.mxu0 0
        %1151 = vmatprep.subr.bf16.mxu0 0
        %1152 = vmatpush1.bf16.xpose.msra.mxu0 0
        %1153 = vmatprep.subr.bf16.mxu0 0
        %1154 = vmatpush1.bf16.xpose.msra.mxu0 0
        %1155 = vmatprep.subr.bf16.mxu0 0
        %1156 = vmatpush1.bf16.xpose.msra.mxu0 0
        %1157 = vmatprep.subr.bf16.mxu0 0
        %1158 = vmatpush1.bf16.xpose.msra.mxu0 0
        %1159 = vmatprep.subr.bf16.mxu0 0
        %1160 = vmatpush1.bf16.xpose.msra.mxu0 0
        %1161 = vmatprep.subr.bf16.mxu0 0
        %1162 = vmatpush1.bf16.xpose.msra.mxu0 0
        %1163 = vmatprep.subr.bf16.mxu0 0
        %1164 = vmatpush1.bf16.xpose.msra.mxu0 0
        %1165 = vmatprep.mubr.bf16.mxu0 0
        %1166 = vmatmul.mubr.bf16.gmra.mrb[0].mxu0 %v1128
        %v1167 = vpop.f32.mrb[0].mxu0
        %v1168 = vadd.f32 0.0, %v1167
        %v1169 = vpop.f32.mrb[0].mxu0
        %v1170 = vpop.f32.mrb[0].mxu0
        %v1171 = vpop.f32.mrb[0].mxu0
        %1172 = vdwg.mxu0
        %v1173 = vsel %vm773, %v1168, -inf
        %1174 = vmax.xlane.f32.xlu0 %v1173
        %v1175 = vpop.xlane.xlu0 %1174
        %v1176 = vsub.f32 %v1168, %v1175
        %v1177 = vmul.f32 %v1176, 1.442695
        %v1178 = vpow.pop %v1177
        %v1179 = vsel %vm773, %v1178, 0.0
        %1180 = vadd.xlane.f32.xlu0 %v1179
        %v1181 = vpop.xlane.xlu0 %1180
        %v1182 = vrcp.pop %v1181
        %v1183 = vmul.f32 %v1178, %v1182
        %v1184 = vpack.c.bf16 %v1183, %v1183
        %1185 = vrot.lane.b32.xlu0 %v772, 104
        %v1186 = vpop.permute.xlu0 %1185
        %v1188 = vsel %vm773, %v1184, 0
        %v1191 = vsel %vm835, %v1186, 0
        %1193 = vmatprep.subr.bf16.mxu0 0
        %1194 = vmatpush1.bf16.msra.mxu0 %v1191
        %1195 = vmatprep.subr.bf16.mxu0 0
        %1196 = vmatpush1.bf16.msra.mxu0 0
        %1197 = vmatprep.subr.bf16.mxu0 0
        %1198 = vmatpush1.bf16.msra.mxu0 0
        %1199 = vmatprep.subr.bf16.mxu0 0
        %1200 = vmatpush1.bf16.msra.mxu0 0
        %1201 = vmatprep.subr.bf16.mxu0 0
        %1202 = vmatpush1.bf16.msra.mxu0 0
        %1203 = vmatprep.subr.bf16.mxu0 0
        %1204 = vmatpush1.bf16.msra.mxu0 0
        %1205 = vmatprep.subr.bf16.mxu0 0
        %1206 = vmatpush1.bf16.msra.mxu0 0
        %1207 = vmatprep.subr.bf16.mxu0 0
        %1208 = vmatpush1.bf16.msra.mxu0 0
        %1209 = vmatprep.subr.bf16.mxu0 0
        %1210 = vmatpush1.bf16.msra.mxu0 0
        %1211 = vmatprep.subr.bf16.mxu0 0
        %1212 = vmatpush1.bf16.msra.mxu0 0
        %1213 = vmatprep.subr.bf16.mxu0 0
        %1214 = vmatpush1.bf16.msra.mxu0 0
        %1215 = vmatprep.subr.bf16.mxu0 0
        %1216 = vmatpush1.bf16.msra.mxu0 0
        %1217 = vmatprep.subr.bf16.mxu0 0
        %1218 = vmatpush1.bf16.msra.mxu0 0
        %1219 = vmatprep.subr.bf16.mxu0 0
        %1220 = vmatpush1.bf16.msra.mxu0 0
        %1221 = vmatprep.subr.bf16.mxu0 0
        %1222 = vmatpush1.bf16.msra.mxu0 0
        %1223 = vmatprep.subr.bf16.mxu0 0
        %1224 = vmatpush1.bf16.msra.mxu0 0
        %1225 = vmatprep.mubr.bf16.mxu0 0
        %1226 = vmatmul.mubr.bf16.gmra.mrb[0].mxu0 %v1188
        %v1227 = vpop.f32.mrb[0].mxu0
        %v1228 = vadd.f32 0.0, %v1227
        %v1229 = vpop.f32.mrb[0].mxu0
        %v1230 = vpop.f32.mrb[0].mxu0
        %v1231 = vpop.f32.mrb[0].mxu0
        %1232 = vdwg.mxu0
        %v1233 = vpack.c.bf16 %v1228, %v1228
        %v1235 = vunpack.c.l.b16 %v1233
        %v1236 = vpack.c.b16 %v1235, %v1235
        %1237 = vrot.lane.b32.xlu0 %v1236, 24
        %v1238 = vpop.permute.xlu0 %1237
        %vm1240 = vcmask 257216
        %1241 = vst.msk [vmem:[#allocation2] sm:$0xf] %vm1240, %v1238
        %v1242 = vld [vmem:[#allocation2] sm:$0xf]
        %v1243 = vld [vmem:[%s7] sm:$0xf]
        %v1244 = vld [vmem:[%s7 + $0x4] sm:$0xf]
        %v1245 = vld [vmem:[%s7 + $0x8] sm:$0xf]
        %v1246 = vld [vmem:[%s7 + $0xc] sm:$0xf]
        %v1247 = vld [vmem:[%s8] sm:$0x1]
        %v1249 = vlaneseq
        %v1250 = vshrl.u32 %v1249, 7
        %v1251 = vsub.s32 0, %v1250
        %v1252 = vrot.slane %v1247, %v1251
        %v1258 = vunpack.c.l.b16 %v1243
        %v1259 = vunpack.c.l.b16 %v1244
        %v1260 = vunpack.c.l.b16 %v1245
        %v1261 = vunpack.c.l.b16 %v1246
        %v1262 = vpack.c.b16 %v1259, %v1258
        %v1263 = vpack.c.b16 %v1261, %v1260
        %v1267 = vsel %vm546, %v1242, 0
        %1269 = vmatprep.subr.bf16.mxu0 0
        %1270 = vmatpush1.bf16.msra.mxu0 %v1262
        %1271 = vmatprep.subr.bf16.mxu0 0
        %1272 = vmatpush1.bf16.msra.mxu0 %v1263
        %1273 = vmatprep.subr.bf16.mxu0 0
        %1274 = vmatpush1.bf16.msra.mxu0 0
        %1275 = vmatprep.subr.bf16.mxu0 0
        %1276 = vmatpush1.bf16.msra.mxu0 0
        %1277 = vmatprep.subr.bf16.mxu0 0
        %1278 = vmatpush1.bf16.msra.mxu0 0
        %1279 = vmatprep.subr.bf16.mxu0 0
        %1280 = vmatpush1.bf16.msra.mxu0 0
        %1281 = vmatprep.subr.bf16.mxu0 0
        %1282 = vmatpush1.bf16.msra.mxu0 0
        %1283 = vmatprep.subr.bf16.mxu0 0
        %1284 = vmatpush1.bf16.msra.mxu0 0
        %1285 = vmatprep.subr.bf16.mxu0 0
        %1286 = vmatpush1.bf16.msra.mxu0 0
        %1287 = vmatprep.subr.bf16.mxu0 0
        %1288 = vmatpush1.bf16.msra.mxu0 0
        %1289 = vmatprep.subr.bf16.mxu0 0
        %1290 = vmatpush1.bf16.msra.mxu0 0
        %1291 = vmatprep.subr.bf16.mxu0 0
        %1292 = vmatpush1.bf16.msra.mxu0 0
        %1293 = vmatprep.subr.bf16.mxu0 0
        %1294 = vmatpush1.bf16.msra.mxu0 0
        %1295 = vmatprep.subr.bf16.mxu0 0
        %1296 = vmatpush1.bf16.msra.mxu0 0
        %1297 = vmatprep.subr.bf16.mxu0 0
        %1298 = vmatpush1.bf16.msra.mxu0 0
        %1299 = vmatprep.subr.bf16.mxu0 0
        %1300 = vmatpush1.bf16.msra.mxu0 0
        %1301 = vmatprep.mubr.bf16.mxu0 0
        %1302 = vmatmul.mubr.bf16.gmra.mrb[0].mxu0 %v1267
        %v1303 = vpop.f32.mrb[0].mxu0
        %v1304 = vadd.f32 %v1252, %v1303
        %v1305 = vpop.f32.mrb[0].mxu0
        %v1306 = vpop.f32.mrb[0].mxu0
        %v1307 = vpop.f32.mrb[0].mxu0
        %1308 = vdwg.mxu0
        %v1309 = vadd.f32 %v1304, %v545
        %v1310 = vsel %vm546, %v1309, 0.0
        %1311 = vadd.xlane.f32.xlu0 %v1310
        %v1312 = vpop.xlane.xlu0 %1311
        %v1313 = vmul.f32 %v1312, %v550
        %v1314 = vsub.f32 %v1309, %v1313
        %v1315 = vmul.f32 %v1314, %v1314
        %v1316 = vsel %vm546, %v1315, 0.0
        %1317 = vadd.xlane.f32.xlu0 %v1316
        %v1318 = vpop.xlane.xlu0 %1317
        %v1319 = vmul.f32 %v1318, %v550
        %v1320 = vadd.f32 %v1319, 1e-06
        %v1321 = vrsqrt.pop %v1320
        %v1322 = vmul.f32 %v1314, %v1321
        %v1323 = vld [vmem:[%s11] sm:$0x1]
        %v1325 = vlaneseq
        %v1326 = vshrl.u32 %v1325, 7
        %v1327 = vsub.s32 0, %v1326
        %v1328 = vrot.slane %v1323, %v1327
        %v1330 = vmul.f32 %v1322, %v1328
        %v1331 = vld [vmem:[%s12] sm:$0x1]
        %v1333 = vlaneseq
        %v1334 = vshrl.u32 %v1333, 7
        %v1335 = vsub.s32 0, %v1334
        %v1336 = vrot.slane %v1331, %v1335
        %v1338 = vadd.f32 %v1330, %v1336
        %v1339 = vpack.c.bf16 %v1338, %v1338
        %v1340 = vld [vmem:[%s13] sm:$0xff]
        %v1341 = vld [vmem:[%s13 + $0x8] sm:$0xff]
        %v1342 = vld [vmem:[%s13 + $0x10] sm:$0xff]
        %v1343 = vld [vmem:[%s13 + $0x18] sm:$0xff]
        %v1344 = vld [vmem:[%s13 + $0x20] sm:$0xff]
        %v1345 = vld [vmem:[%s13 + $0x28] sm:$0xff]
        %v1346 = vld [vmem:[%s13 + $0x30] sm:$0xff]
        %v1347 = vld [vmem:[%s13 + $0x38] sm:$0xff]
        %v1348 = vld [vmem:[%s13 + $0x40] sm:$0xff]
        %v1349 = vld [vmem:[%s13 + $0x48] sm:$0xff]
        %v1350 = vld [vmem:[%s13 + $0x50] sm:$0xff]
        %v1351 = vld [vmem:[%s13 + $0x58] sm:$0xff]
        %v1352 = vld [vmem:[%s13 + $0x60] sm:$0xff]
        %v1353 = vld [vmem:[%s13 + $0x68] sm:$0xff]
        %v1354 = vld [vmem:[%s13 + $0x70] sm:$0xff]
        %v1355 = vld [vmem:[%s13 + $0x78] sm:$0xff]
        %v1356 = vld [vmem:[%s13 + $0x80] sm:$0xff]
        %v1357 = vld [vmem:[%s13 + $0x88] sm:$0xff]
        %v1358 = vld [vmem:[%s13 + $0x90] sm:$0xff]
        %v1359 = vld [vmem:[%s13 + $0x98] sm:$0xff]
        %v1360 = vld [vmem:[%s13 + $0xa0] sm:$0xff]
        %v1361 = vld [vmem:[%s13 + $0xa8] sm:$0xff]
        %v1362 = vld [vmem:[%s13 + $0xb0] sm:$0xff]
        %v1363 = vld [vmem:[%s13 + $0xb8] sm:$0xff]
        %v1364 = vld [vmem:[%s13 + $0xc0] sm:$0xff]
        %v1365 = vld [vmem:[%s13 + $0xc8] sm:$0xff]
        %v1366 = vld [vmem:[%s13 + $0xd0] sm:$0xff]
        %v1367 = vld [vmem:[%s13 + $0xd8] sm:$0xff]
        %v1368 = vld [vmem:[%s13 + $0xe0] sm:$0xff]
        %v1369 = vld [vmem:[%s13 + $0xe8] sm:$0xff]
        %v1370 = vld [vmem:[%s13 + $0xf0] sm:$0xff]
        %v1371 = vld [vmem:[%s13 + $0xf8] sm:$0xff]
        %v1372 = vld [vmem:[%s14] sm:$0xff]
        %v1373 = vld [vmem:[%s14 + $0x8] sm:$0xff]
        %v1376 = vlaneseq
        %v1377 = vshrl.u32 %v1376, 7
        %v1378 = vsub.s32 0, %v1377
        %v1379 = vrot.slane %v1372, %v1378
        %v1380 = vlaneseq
        %v1381 = vshrl.u32 %v1380, 7
        %v1382 = vsub.s32 1, %v1381
        %v1383 = vrot.slane %v1372, %v1382
        %v1384 = vlaneseq
        %v1385 = vshrl.u32 %v1384, 7
        %v1386 = vsub.s32 2, %v1385
        %v1387 = vrot.slane %v1372, %v1386
        %v1388 = vlaneseq
        %v1389 = vshrl.u32 %v1388, 7
        %v1390 = vsub.s32 3, %v1389
        %v1391 = vrot.slane %v1372, %v1390
        %v1392 = vlaneseq
        %v1393 = vshrl.u32 %v1392, 7
        %v1394 = vsub.s32 4, %v1393
        %v1395 = vrot.slane %v1372, %v1394
        %v1396 = vlaneseq
        %v1397 = vshrl.u32 %v1396, 7
        %v1398 = vsub.s32 5, %v1397
        %v1399 = vrot.slane %v1372, %v1398
        %v1400 = vlaneseq
        %v1401 = vshrl.u32 %v1400, 7
        %v1402 = vsub.s32 6, %v1401
        %v1403 = vrot.slane %v1372, %v1402
        %v1404 = vlaneseq
        %v1405 = vshrl.u32 %v1404, 7
        %v1406 = vsub.s32 7, %v1405
        %v1407 = vrot.slane %v1372, %v1406
        %v1408 = vlaneseq
        %v1409 = vshrl.u32 %v1408, 7
        %v1410 = vsub.s32 0, %v1409
        %v1411 = vrot.slane %v1373, %v1410
        %v1412 = vlaneseq
        %v1413 = vshrl.u32 %v1412, 7
        %v1414 = vsub.s32 1, %v1413
        %v1415 = vrot.slane %v1373, %v1414
        %v1416 = vlaneseq
        %v1417 = vshrl.u32 %v1416, 7
        %v1418 = vsub.s32 2, %v1417
        %v1419 = vrot.slane %v1373, %v1418
        %v1420 = vlaneseq
        %v1421 = vshrl.u32 %v1420, 7
        %v1422 = vsub.s32 3, %v1421
        %v1423 = vrot.slane %v1373, %v1422
        %v1424 = vlaneseq
        %v1425 = vshrl.u32 %v1424, 7
        %v1426 = vsub.s32 4, %v1425
        %v1427 = vrot.slane %v1373, %v1426
        %v1428 = vlaneseq
        %v1429 = vshrl.u32 %v1428, 7
        %v1430 = vsub.s32 5, %v1429
        %v1431 = vrot.slane %v1373, %v1430
        %v1432 = vlaneseq
        %v1433 = vshrl.u32 %v1432, 7
        %v1434 = vsub.s32 6, %v1433
        %v1435 = vrot.slane %v1373, %v1434
        %v1436 = vlaneseq
        %v1437 = vshrl.u32 %v1436, 7
        %v1438 = vsub.s32 7, %v1437
        %v1439 = vrot.slane %v1373, %v1438
        %v1488 = vunpack.c.l.b16 %v1340
        %v1489 = vunpack.c.h.b16 %v1340
        %v1490 = vunpack.c.l.b16 %v1341
        %v1491 = vunpack.c.h.b16 %v1341
        %v1492 = vunpack.c.l.b16 %v1342
        %v1493 = vunpack.c.h.b16 %v1342
        %v1494 = vunpack.c.l.b16 %v1343
        %v1495 = vunpack.c.h.b16 %v1343
        %v1496 = vunpack.c.l.b16 %v1344
        %v1497 = vunpack.c.h.b16 %v1344
        %v1498 = vunpack.c.l.b16 %v1345
        %v1499 = vunpack.c.h.b16 %v1345
        %v1500 = vunpack.c.l.b16 %v1346
        %v1501 = vunpack.c.h.b16 %v1346
        %v1502 = vunpack.c.l.b16 %v1347
        %v1503 = vunpack.c.h.b16 %v1347
        %v1504 = vunpack.c.l.b16 %v1348
        %v1505 = vunpack.c.h.b16 %v1348
        %v1506 = vunpack.c.l.b16 %v1349
        %v1507 = vunpack.c.h.b16 %v1349
        %v1508 = vunpack.c.l.b16 %v1350
        %v1509 = vunpack.c.h.b16 %v1350
        %v1510 = vunpack.c.l.b16 %v1351
        %v1511 = vunpack.c.h.b16 %v1351
        %v1512 = vunpack.c.l.b16 %v1352
        %v1513 = vunpack.c.h.b16 %v1352
        %v1514 = vunpack.c.l.b16 %v1353
        %v1515 = vunpack.c.h.b16 %v1353
        %v1516 = vunpack.c.l.b16 %v1354
        %v1517 = vunpack.c.h.b16 %v1354
        %v1518 = vunpack.c.l.b16 %v1355
        %v1519 = vunpack.c.h.b16 %v1355
        %v1520 = vunpack.c.l.b16 %v1356
        %v1521 = vunpack.c.h.b16 %v1356
        %v1522 = vunpack.c.l.b16 %v1357
        %v1523 = vunpack.c.h.b16 %v1357
        %v1524 = vunpack.c.l.b16 %v1358
        %v1525 = vunpack.c.h.b16 %v1358
        %v1526 = vunpack.c.l.b16 %v1359
        %v1527 = vunpack.c.h.b16 %v1359
        %v1528 = vunpack.c.l.b16 %v1360
        %v1529 = vunpack.c.h.b16 %v1360
        %v1530 = vunpack.c.l.b16 %v1361
        %v1531 = vunpack.c.h.b16 %v1361
        %v1532 = vunpack.c.l.b16 %v1362
        %v1533 = vunpack.c.h.b16 %v1362
        %v1534 = vunpack.c.l.b16 %v1363
        %v1535 = vunpack.c.h.b16 %v1363
        %v1536 = vunpack.c.l.b16 %v1364
        %v1537 = vunpack.c.h.b16 %v1364
        %v1538 = vunpack.c.l.b16 %v1365
        %v1539 = vunpack.c.h.b16 %v1365
        %v1540 = vunpack.c.l.b16 %v1366
        %v1541 = vunpack.c.h.b16 %v1366
        %v1542 = vunpack.c.l.b16 %v1367
        %v1543 = vunpack.c.h.b16 %v1367
        %v1544 = vunpack.c.l.b16 %v1368
        %v1545 = vunpack.c.h.b16 %v1368
        %v1546 = vunpack.c.l.b16 %v1369
        %v1547 = vunpack.c.h.b16 %v1369
        %v1548 = vunpack.c.l.b16 %v1370
        %v1549 = vunpack.c.h.b16 %v1370
        %v1550 = vunpack.c.l.b16 %v1371
        %v1551 = vunpack.c.h.b16 %v1371
        %v1552 = vpack.c.b16 %v1504, %v1488
        %v1553 = vpack.c.b16 %v1505, %v1489
        %v1554 = vpack.c.b16 %v1506, %v1490
        %v1555 = vpack.c.b16 %v1507, %v1491
        %v1556 = vpack.c.b16 %v1508, %v1492
        %v1557 = vpack.c.b16 %v1509, %v1493
        %v1558 = vpack.c.b16 %v1510, %v1494
        %v1559 = vpack.c.b16 %v1511, %v1495
        %v1560 = vpack.c.b16 %v1512, %v1496
        %v1561 = vpack.c.b16 %v1513, %v1497
        %v1562 = vpack.c.b16 %v1514, %v1498
        %v1563 = vpack.c.b16 %v1515, %v1499
        %v1564 = vpack.c.b16 %v1516, %v1500
        %v1565 = vpack.c.b16 %v1517, %v1501
        %v1566 = vpack.c.b16 %v1518, %v1502
        %v1567 = vpack.c.b16 %v1519, %v1503
        %v1568 = vpack.c.b16 %v1536, %v1520
        %v1569 = vpack.c.b16 %v1537, %v1521
        %v1570 = vpack.c.b16 %v1538, %v1522
        %v1571 = vpack.c.b16 %v1539, %v1523
        %v1572 = vpack.c.b16 %v1540, %v1524
        %v1573 = vpack.c.b16 %v1541, %v1525
        %v1574 = vpack.c.b16 %v1542, %v1526
        %v1575 = vpack.c.b16 %v1543, %v1527
        %v1576 = vpack.c.b16 %v1544, %v1528
        %v1577 = vpack.c.b16 %v1545, %v1529
        %v1578 = vpack.c.b16 %v1546, %v1530
        %v1579 = vpack.c.b16 %v1547, %v1531
        %v1580 = vpack.c.b16 %v1548, %v1532
        %v1581 = vpack.c.b16 %v1549, %v1533
        %v1582 = vpack.c.b16 %v1550, %v1534
        %v1583 = vpack.c.b16 %v1551, %v1535
        %v1617 = vsel %vm546, %v1339, 0
        %1619 = vmatprep.subr.bf16.mxu0 %v1553
        %1620 = vmatpush1.bf16.msra.mxu0 %v1552
        %1621 = vmatprep.subr.bf16.mxu0 %v1569
        %1622 = vmatpush1.bf16.msra.mxu0 %v1568
        %1623 = vmatprep.subr.bf16.mxu0 0
        %1624 = vmatpush1.bf16.msra.mxu0 0
        %1625 = vmatprep.subr.bf16.mxu0 0
        %1626 = vmatpush1.bf16.msra.mxu0 0
        %1627 = vmatprep.subr.bf16.mxu0 0
        %1628 = vmatpush1.bf16.msra.mxu0 0
        %1629 = vmatprep.subr.bf16.mxu0 0
        %1630 = vmatpush1.bf16.msra.mxu0 0
        %1631 = vmatprep.subr.bf16.mxu0 0
        %1632 = vmatpush1.bf16.msra.mxu0 0
        %1633 = vmatprep.subr.bf16.mxu0 0
        %1634 = vmatpush1.bf16.msra.mxu0 0
        %1635 = vmatprep.subr.bf16.mxu0 0
        %1636 = vmatpush1.bf16.msra.mxu0 0
        %1637 = vmatprep.subr.bf16.mxu0 0
        %1638 = vmatpush1.bf16.msra.mxu0 0
        %1639 = vmatprep.subr.bf16.mxu0 0
        %1640 = vmatpush1.bf16.msra.mxu0 0
        %1641 = vmatprep.subr.bf16.mxu0 0
        %1642 = vmatpush1.bf16.msra.mxu0 0
        %1643 = vmatprep.subr.bf16.mxu0 0
        %1644 = vmatpush1.bf16.msra.mxu0 0
        %1645 = vmatprep.subr.bf16.mxu0 0
        %1646 = vmatpush1.bf16.msra.mxu0 0
        %1647 = vmatprep.subr.bf16.mxu0 0
        %1648 = vmatpush1.bf16.msra.mxu0 0
        %1649 = vmatprep.subr.bf16.mxu0 0
        %1650 = vmatpush1.bf16.msra.mxu0 0
        %1651 = vmatprep.mubr.bf16.mxu0 0
        %1652 = vmatmul.mubr.bf16.gmra.mrb[0].mxu0 %v1617
        %v1653 = vpop.f32.mrb[0].mxu0
        %v1654 = vadd.f32 %v1379, %v1653
        %v1655 = vpop.f32.mrb[0].mxu0
        %v1656 = vadd.f32 %v1383, %v1655
        %v1657 = vpop.f32.mrb[0].mxu0
        %v1658 = vpop.f32.mrb[0].mxu0
        %1659 = vdwg.mxu0
        %1660 = vmatprep.subr.bf16.mxu0 %v1555
        %1661 = vmatpush1.bf16.msra.mxu0 %v1554
        %1662 = vmatprep.subr.bf16.mxu0 %v1571
        %1663 = vmatpush1.bf16.msra.mxu0 %v1570
        %1664 = vmatprep.subr.bf16.mxu0 0
        %1665 = vmatpush1.bf16.msra.mxu0 0
        %1666 = vmatprep.subr.bf16.mxu0 0
        %1667 = vmatpush1.bf16.msra.mxu0 0
        %1668 = vmatprep.subr.bf16.mxu0 0
        %1669 = vmatpush1.bf16.msra.mxu0 0
        %1670 = vmatprep.subr.bf16.mxu0 0
        %1671 = vmatpush1.bf16.msra.mxu0 0
        %1672 = vmatprep.subr.bf16.mxu0 0
        %1673 = vmatpush1.bf16.msra.mxu0 0
        %1674 = vmatprep.subr.bf16.mxu0 0
        %1675 = vmatpush1.bf16.msra.mxu0 0
        %1676 = vmatprep.subr.bf16.mxu0 0
        %1677 = vmatpush1.bf16.msra.mxu0 0
        %1678 = vmatprep.subr.bf16.mxu0 0
        %1679 = vmatpush1.bf16.msra.mxu0 0
        %1680 = vmatprep.subr.bf16.mxu0 0
        %1681 = vmatpush1.bf16.msra.mxu0 0
        %1682 = vmatprep.subr.bf16.mxu0 0
        %1683 = vmatpush1.bf16.msra.mxu0 0
        %1684 = vmatprep.subr.bf16.mxu0 0
        %1685 = vmatpush1.bf16.msra.mxu0 0
        %1686 = vmatprep.subr.bf16.mxu0 0
        %1687 = vmatpush1.bf16.msra.mxu0 0
        %1688 = vmatprep.subr.bf16.mxu0 0
        %1689 = vmatpush1.bf16.msra.mxu0 0
        %1690 = vmatprep.subr.bf16.mxu0 0
        %1691 = vmatpush1.bf16.msra.mxu0 0
        %1692 = vmatprep.mubr.bf16.mxu0 0
        %1693 = vmatmul.mubr.bf16.gmra.mrb[0].mxu0 %v1617
        %v1694 = vpop.f32.mrb[0].mxu0
        %v1695 = vadd.f32 %v1387, %v1694
        %v1696 = vpop.f32.mrb[0].mxu0
        %v1697 = vadd.f32 %v1391, %v1696
        %v1698 = vpop.f32.mrb[0].mxu0
        %v1699 = vpop.f32.mrb[0].mxu0
        %1700 = vdwg.mxu0
        %1701 = vmatprep.subr.bf16.mxu0 %v1557
        %1702 = vmatpush1.bf16.msra.mxu0 %v1556
        %1703 = vmatprep.subr.bf16.mxu0 %v1573
        %1704 = vmatpush1.bf16.msra.mxu0 %v1572
        %1705 = vmatprep.subr.bf16.mxu0 0
        %1706 = vmatpush1.bf16.msra.mxu0 0
        %1707 = vmatprep.subr.bf16.mxu0 0
        %1708 = vmatpush1.bf16.msra.mxu0 0
        %1709 = vmatprep.subr.bf16.mxu0 0
        %1710 = vmatpush1.bf16.msra.mxu0 0
        %1711 = vmatprep.subr.bf16.mxu0 0
        %1712 = vmatpush1.bf16.msra.mxu0 0
        %1713 = vmatprep.subr.bf16.mxu0 0
        %1714 = vmatpush1.bf16.msra.mxu0 0
        %1715 = vmatprep.subr.bf16.mxu0 0
        %1716 = vmatpush1.bf16.msra.mxu0 0
        %1717 = vmatprep.subr.bf16.mxu0 0
        %1718 = vmatpush1.bf16.msra.mxu0 0
        %1719 = vmatprep.subr.bf16.mxu0 0
        %1720 = vmatpush1.bf16.msra.mxu0 0
        %1721 = vmatprep.subr.bf16.mxu0 0
        %1722 = vmatpush1.bf16.msra.mxu0 0
        %1723 = vmatprep.subr.bf16.mxu0 0
        %1724 = vmatpush1.bf16.msra.mxu0 0
        %1725 = vmatprep.subr.bf16.mxu0 0
        %1726 = vmatpush1.bf16.msra.mxu0 0
        %1727 = vmatprep.subr.bf16.mxu0 0
        %1728 = vmatpush1.bf16.msra.mxu0 0
        %1729 = vmatprep.subr.bf16.mxu0 0
        %1730 = vmatpush1.bf16.msra.mxu0 0
        %1731 = vmatprep.subr.bf16.mxu0 0
        %1732 = vmatpush1.bf16.msra.mxu0 0
        %1733 = vmatprep.mubr.bf16.mxu0 0
        %1734 = vmatmul.mubr.bf16.gmra.mrb[0].mxu0 %v1617
        %v1735 = vpop.f32.mrb[0].mxu0
        %v1736 = vadd.f32 %v1395, %v1735
        %v1737 = vpop.f32.mrb[0].mxu0
        %v1738 = vadd.f32 %v1399, %v1737
        %v1739 = vpop.f32.mrb[0].mxu0
        %v1740 = vpop.f32.mrb[0].mxu0
        %1741 = vdwg.mxu0
        %1742 = vmatprep.subr.bf16.mxu0 %v1559
        %1743 = vmatpush1.bf16.msra.mxu0 %v1558
        %1744 = vmatprep.subr.bf16.mxu0 %v1575
        %1745 = vmatpush1.bf16.msra.mxu0 %v1574
        %1746 = vmatprep.subr.bf16.mxu0 0
        %1747 = vmatpush1.bf16.msra.mxu0 0
        %1748 = vmatprep.subr.bf16.mxu0 0
        %1749 = vmatpush1.bf16.msra.mxu0 0
        %1750 = vmatprep.subr.bf16.mxu0 0
        %1751 = vmatpush1.bf16.msra.mxu0 0
        %1752 = vmatprep.subr.bf16.mxu0 0
        %1753 = vmatpush1.bf16.msra.mxu0 0
        %1754 = vmatprep.subr.bf16.mxu0 0
        %1755 = vmatpush1.bf16.msra.mxu0 0
        %1756 = vmatprep.subr.bf16.mxu0 0
        %1757 = vmatpush1.bf16.msra.mxu0 0
        %1758 = vmatprep.subr.bf16.mxu0 0
        %1759 = vmatpush1.bf16.msra.mxu0 0
        %1760 = vmatprep.subr.bf16.mxu0 0
        %1761 = vmatpush1.bf16.msra.mxu0 0
        %1762 = vmatprep.subr.bf16.mxu0 0
        %1763 = vmatpush1.bf16.msra.mxu0 0
        %1764 = vmatprep.subr.bf16.mxu0 0
        %1765 = vmatpush1.bf16.msra.mxu0 0
        %1766 = vmatprep.subr.bf16.mxu0 0
        %1767 = vmatpush1.bf16.msra.mxu0 0
        %1768 = vmatprep.subr.bf16.mxu0 0
        %1769 = vmatpush1.bf16.msra.mxu0 0
        %1770 = vmatprep.subr.bf16.mxu0 0
        %1771 = vmatpush1.bf16.msra.mxu0 0
        %1772 = vmatprep.subr.bf16.mxu0 0
        %1773 = vmatpush1.bf16.msra.mxu0 0
        %1774 = vmatprep.mubr.bf16.mxu0 0
        %1775 = vmatmul.mubr.bf16.gmra.mrb[0].mxu0 %v1617
        %v1776 = vpop.f32.mrb[0].mxu0
        %v1777 = vadd.f32 %v1403, %v1776
        %v1778 = vpop.f32.mrb[0].mxu0
        %v1779 = vadd.f32 %v1407, %v1778
        %v1780 = vpop.f32.mrb[0].mxu0
        %v1781 = vpop.f32.mrb[0].mxu0
        %1782 = vdwg.mxu0
        %1783 = vmatprep.subr.bf16.mxu0 %v1561
        %1784 = vmatpush1.bf16.msra.mxu0 %v1560
        %1785 = vmatprep.subr.bf16.mxu0 %v1577
        %1786 = vmatpush1.bf16.msra.mxu0 %v1576
        %1787 = vmatprep.subr.bf16.mxu0 0
        %1788 = vmatpush1.bf16.msra.mxu0 0
        %1789 = vmatprep.subr.bf16.mxu0 0
        %1790 = vmatpush1.bf16.msra.mxu0 0
        %1791 = vmatprep.subr.bf16.mxu0 0
        %1792 = vmatpush1.bf16.msra.mxu0 0
        %1793 = vmatprep.subr.bf16.mxu0 0
        %1794 = vmatpush1.bf16.msra.mxu0 0
        %1795 = vmatprep.subr.bf16.mxu0 0
        %1796 = vmatpush1.bf16.msra.mxu0 0
        %1797 = vmatprep.subr.bf16.mxu0 0
        %1798 = vmatpush1.bf16.msra.mxu0 0
        %1799 = vmatprep.subr.bf16.mxu0 0
        %1800 = vmatpush1.bf16.msra.mxu0 0
        %1801 = vmatprep.subr.bf16.mxu0 0
        %1802 = vmatpush1.bf16.msra.mxu0 0
        %1803 = vmatprep.subr.bf16.mxu0 0
        %1804 = vmatpush1.bf16.msra.mxu0 0
        %1805 = vmatprep.subr.bf16.mxu0 0
        %1806 = vmatpush1.bf16.msra.mxu0 0
        %1807 = vmatprep.subr.bf16.mxu0 0
        %1808 = vmatpush1.bf16.msra.mxu0 0
        %1809 = vmatprep.subr.bf16.mxu0 0
        %1810 = vmatpush1.bf16.msra.mxu0 0
        %1811 = vmatprep.subr.bf16.mxu0 0
        %1812 = vmatpush1.bf16.msra.mxu0 0
        %1813 = vmatprep.subr.bf16.mxu0 0
        %1814 = vmatpush1.bf16.msra.mxu0 0
        %1815 = vmatprep.mubr.bf16.mxu0 0
        %1816 = vmatmul.mubr.bf16.gmra.mrb[0].mxu0 %v1617
        %v1817 = vpop.f32.mrb[0].mxu0
        %v1818 = vadd.f32 %v1411, %v1817
        %v1819 = vpop.f32.mrb[0].mxu0
        %v1820 = vadd.f32 %v1415, %v1819
        %v1821 = vpop.f32.mrb[0].mxu0
        %v1822 = vpop.f32.mrb[0].mxu0
        %1823 = vdwg.mxu0
        %1824 = vmatprep.subr.bf16.mxu0 %v1563
        %1825 = vmatpush1.bf16.msra.mxu0 %v1562
        %1826 = vmatprep.subr.bf16.mxu0 %v1579
        %1827 = vmatpush1.bf16.msra.mxu0 %v1578
        %1828 = vmatprep.subr.bf16.mxu0 0
        %1829 = vmatpush1.bf16.msra.mxu0 0
        %1830 = vmatprep.subr.bf16.mxu0 0
        %1831 = vmatpush1.bf16.msra.mxu0 0
        %1832 = vmatprep.subr.bf16.mxu0 0
        %1833 = vmatpush1.bf16.msra.mxu0 0
        %1834 = vmatprep.subr.bf16.mxu0 0
        %1835 = vmatpush1.bf16.msra.mxu0 0
        %1836 = vmatprep.subr.bf16.mxu0 0
        %1837 = vmatpush1.bf16.msra.mxu0 0
        %1838 = vmatprep.subr.bf16.mxu0 0
        %1839 = vmatpush1.bf16.msra.mxu0 0
        %1840 = vmatprep.subr.bf16.mxu0 0
        %1841 = vmatpush1.bf16.msra.mxu0 0
        %1842 = vmatprep.subr.bf16.mxu0 0
        %1843 = vmatpush1.bf16.msra.mxu0 0
        %1844 = vmatprep.subr.bf16.mxu0 0
        %1845 = vmatpush1.bf16.msra.mxu0 0
        %1846 = vmatprep.subr.bf16.mxu0 0
        %1847 = vmatpush1.bf16.msra.mxu0 0
        %1848 = vmatprep.subr.bf16.mxu0 0
        %1849 = vmatpush1.bf16.msra.mxu0 0
        %1850 = vmatprep.subr.bf16.mxu0 0
        %1851 = vmatpush1.bf16.msra.mxu0 0
        %1852 = vmatprep.subr.bf16.mxu0 0
        %1853 = vmatpush1.bf16.msra.mxu0 0
        %1854 = vmatprep.subr.bf16.mxu0 0
        %1855 = vmatpush1.bf16.msra.mxu0 0
        %1856 = vmatprep.mubr.bf16.mxu0 0
        %1857 = vmatmul.mubr.bf16.gmra.mrb[0].mxu0 %v1617
        %v1858 = vpop.f32.mrb[0].mxu0
        %v1859 = vadd.f32 %v1419, %v1858
        %v1860 = vpop.f32.mrb[0].mxu0
        %v1861 = vadd.f32 %v1423, %v1860
        %v1862 = vpop.f32.mrb[0].mxu0
        %v1863 = vpop.f32.mrb[0].mxu0
        %1864 = vdwg.mxu0
        %1865 = vmatprep.subr.bf16.mxu0 %v1565
        %1866 = vmatpush1.bf16.msra.mxu0 %v1564
        %1867 = vmatprep.subr.bf16.mxu0 %v1581
        %1868 = vmatpush1.bf16.msra.mxu0 %v1580
        %1869 = vmatprep.subr.bf16.mxu0 0
        %1870 = vmatpush1.bf16.msra.mxu0 0
        %1871 = vmatprep.subr.bf16.mxu0 0
        %1872 = vmatpush1.bf16.msra.mxu0 0
        %1873 = vmatprep.subr.bf16.mxu0 0
        %1874 = vmatpush1.bf16.msra.mxu0 0
        %1875 = vmatprep.subr.bf16.mxu0 0
        %1876 = vmatpush1.bf16.msra.mxu0 0
        %1877 = vmatprep.subr.bf16.mxu0 0
        %1878 = vmatpush1.bf16.msra.mxu0 0
        %1879 = vmatprep.subr.bf16.mxu0 0
        %1880 = vmatpush1.bf16.msra.mxu0 0
        %1881 = vmatprep.subr.bf16.mxu0 0
        %1882 = vmatpush1.bf16.msra.mxu0 0
        %1883 = vmatprep.subr.bf16.mxu0 0
        %1884 = vmatpush1.bf16.msra.mxu0 0
        %1885 = vmatprep.subr.bf16.mxu0 0
        %1886 = vmatpush1.bf16.msra.mxu0 0
        %1887 = vmatprep.subr.bf16.mxu0 0
        %1888 = vmatpush1.bf16.msra.mxu0 0
        %1889 = vmatprep.subr.bf16.mxu0 0
        %1890 = vmatpush1.bf16.msra.mxu0 0
        %1891 = vmatprep.subr.bf16.mxu0 0
        %1892 = vmatpush1.bf16.msra.mxu0 0
        %1893 = vmatprep.subr.bf16.mxu0 0
        %1894 = vmatpush1.bf16.msra.mxu0 0
        %1895 = vmatprep.subr.bf16.mxu0 0
        %1896 = vmatpush1.bf16.msra.mxu0 0
        %1897 = vmatprep.mubr.bf16.mxu0 0
        %1898 = vmatmul.mubr.bf16.gmra.mrb[0].mxu0 %v1617
        %v1899 = vpop.f32.mrb[0].mxu0
        %v1900 = vadd.f32 %v1427, %v1899
        %v1901 = vpop.f32.mrb[0].mxu0
        %v1902 = vadd.f32 %v1431, %v1901
        %v1903 = vpop.f32.mrb[0].mxu0
        %v1904 = vpop.f32.mrb[0].mxu0
        %1905 = vdwg.mxu0
        %1906 = vmatprep.subr.bf16.mxu0 %v1567
        %1907 = vmatpush1.bf16.msra.mxu0 %v1566
        %1908 = vmatprep.subr.bf16.mxu0 %v1583
        %1909 = vmatpush1.bf16.msra.mxu0 %v1582
        %1910 = vmatprep.subr.bf16.mxu0 0
        %1911 = vmatpush1.bf16.msra.mxu0 0
        %1912 = vmatprep.subr.bf16.mxu0 0
        %1913 = vmatpush1.bf16.msra.mxu0 0
        %1914 = vmatprep.subr.bf16.mxu0 0
        %1915 = vmatpush1.bf16.msra.mxu0 0
        %1916 = vmatprep.subr.bf16.mxu0 0
        %1917 = vmatpush1.bf16.msra.mxu0 0
        %1918 = vmatprep.subr.bf16.mxu0 0
        %1919 = vmatpush1.bf16.msra.mxu0 0
        %1920 = vmatprep.subr.bf16.mxu0 0
        %1921 = vmatpush1.bf16.msra.mxu0 0
        %1922 = vmatprep.subr.bf16.mxu0 0
        %1923 = vmatpush1.bf16.msra.mxu0 0
        %1924 = vmatprep.subr.bf16.mxu0 0
        %1925 = vmatpush1.bf16.msra.mxu0 0
        %1926 = vmatprep.subr.bf16.mxu0 0
        %1927 = vmatpush1.bf16.msra.mxu0 0
        %1928 = vmatprep.subr.bf16.mxu0 0
        %1929 = vmatpush1.bf16.msra.mxu0 0
        %1930 = vmatprep.subr.bf16.mxu0 0
        %1931 = vmatpush1.bf16.msra.mxu0 0
        %1932 = vmatprep.subr.bf16.mxu0 0
        %1933 = vmatpush1.bf16.msra.mxu0 0
        %1934 = vmatprep.subr.bf16.mxu0 0
        %1935 = vmatpush1.bf16.msra.mxu0 0
        %1936 = vmatprep.subr.bf16.mxu0 0
        %1937 = vmatpush1.bf16.msra.mxu0 0
        %1938 = vmatprep.mubr.bf16.mxu0 0
        %1939 = vmatmul.mubr.bf16.gmra.mrb[0].mxu0 %v1617
        %v1940 = vpop.f32.mrb[0].mxu0
        %v1941 = vadd.f32 %v1435, %v1940
        %v1942 = vpop.f32.mrb[0].mxu0
        %v1943 = vadd.f32 %v1439, %v1942
        %v1944 = vpop.f32.mrb[0].mxu0
        %v1945 = vpop.f32.mrb[0].mxu0
        %1946 = vdwg.mxu0
        %v1947 = vmax.f32 %v1654, 0.0
        %v1948 = vmax.f32 %v1656, 0.0
        %v1949 = vmax.f32 %v1695, 0.0
        %v1950 = vmax.f32 %v1697, 0.0
        %v1951 = vmax.f32 %v1736, 0.0
        %v1952 = vmax.f32 %v1738, 0.0
        %v1953 = vmax.f32 %v1777, 0.0
        %v1954 = vmax.f32 %v1779, 0.0
        %v1955 = vmax.f32 %v1818, 0.0
        %v1956 = vmax.f32 %v1820, 0.0
        %v1957 = vmax.f32 %v1859, 0.0
        %v1958 = vmax.f32 %v1861, 0.0
        %v1959 = vmax.f32 %v1900, 0.0
        %v1960 = vmax.f32 %v1902, 0.0
        %v1961 = vmax.f32 %v1941, 0.0
        %v1962 = vmax.f32 %v1943, 0.0
        %v1963 = vpack.c.bf16 %v1947, %v1947
        %v1964 = vpack.c.bf16 %v1948, %v1948
        %v1965 = vpack.c.bf16 %v1949, %v1949
        %v1966 = vpack.c.bf16 %v1950, %v1950
        %v1967 = vpack.c.bf16 %v1951, %v1951
        %v1968 = vpack.c.bf16 %v1952, %v1952
        %v1969 = vpack.c.bf16 %v1953, %v1953
        %v1970 = vpack.c.bf16 %v1954, %v1954
        %v1971 = vpack.c.bf16 %v1955, %v1955
        %v1972 = vpack.c.bf16 %v1956, %v1956
        %v1973 = vpack.c.bf16 %v1957, %v1957
        %v1974 = vpack.c.bf16 %v1958, %v1958
        %v1975 = vpack.c.bf16 %v1959, %v1959
        %v1976 = vpack.c.bf16 %v1960, %v1960
        %v1977 = vpack.c.bf16 %v1961, %v1961
        %v1978 = vpack.c.bf16 %v1962, %v1962
        %v1979 = vld [vmem:[%s15] sm:$0xf]
        %v1980 = vld [vmem:[%s15 + $0x4] sm:$0xf]
        %v1981 = vld [vmem:[%s15 + $0x8] sm:$0xf]
        %v1982 = vld [vmem:[%s15 + $0xc] sm:$0xf]
        %v1983 = vld [vmem:[%s15 + $0x10] sm:$0xf]
        %v1984 = vld [vmem:[%s15 + $0x14] sm:$0xf]
        %v1985 = vld [vmem:[%s15 + $0x18] sm:$0xf]
        %v1986 = vld [vmem:[%s15 + $0x1c] sm:$0xf]
        %v1987 = vld [vmem:[%s15 + $0x20] sm:$0xf]
        %v1988 = vld [vmem:[%s15 + $0x24] sm:$0xf]
        %v1989 = vld [vmem:[%s15 + $0x28] sm:$0xf]
        %v1990 = vld [vmem:[%s15 + $0x2c] sm:$0xf]
        %v1991 = vld [vmem:[%s15 + $0x30] sm:$0xf]
        %v1992 = vld [vmem:[%s15 + $0x34] sm:$0xf]
        %v1993 = vld [vmem:[%s15 + $0x38] sm:$0xf]
        %v1994 = vld [vmem:[%s15 + $0x3c] sm:$0xf]
        %v1995 = vld [vmem:[%s15 + $0x40] sm:$0xf]
        %v1996 = vld [vmem:[%s15 + $0x44] sm:$0xf]
        %v1997 = vld [vmem:[%s15 + $0x48] sm:$0xf]
        %v1998 = vld [vmem:[%s15 + $0x4c] sm:$0xf]
        %v1999 = vld [vmem:[%s15 + $0x50] sm:$0xf]
        %v2000 = vld [vmem:[%s15 + $0x54] sm:$0xf]
        %v2001 = vld [vmem:[%s15 + $0x58] sm:$0xf]
        %v2002 = vld [vmem:[%s15 + $0x5c] sm:$0xf]
        %v2003 = vld [vmem:[%s15 + $0x60] sm:$0xf]
        %v2004 = vld [vmem:[%s15 + $0x64] sm:$0xf]
        %v2005 = vld [vmem:[%s15 + $0x68] sm:$0xf]
        %v2006 = vld [vmem:[%s15 + $0x6c] sm:$0xf]
        %v2007 = vld [vmem:[%s15 + $0x70] sm:$0xf]
        %v2008 = vld [vmem:[%s15 + $0x74] sm:$0xf]
        %v2009 = vld [vmem:[%s15 + $0x78] sm:$0xf]
        %v2010 = vld [vmem:[%s15 + $0x7c] sm:$0xf]
        %v2011 = vld [vmem:[%s15 + $0x80] sm:$0xf]
        %v2012 = vld [vmem:[%s15 + $0x84] sm:$0xf]
        %v2013 = vld [vmem:[%s15 + $0x88] sm:$0xf]
        %v2014 = vld [vmem:[%s15 + $0x8c] sm:$0xf]
        %v2015 = vld [vmem:[%s15 + $0x90] sm:$0xf]
        %v2016 = vld [vmem:[%s15 + $0x94] sm:$0xf]
        %v2017 = vld [vmem:[%s15 + $0x98] sm:$0xf]
        %v2018 = vld [vmem:[%s15 + $0x9c] sm:$0xf]
        %v2019 = vld [vmem:[%s15 + $0xa0] sm:$0xf]
        %v2020 = vld [vmem:[%s15 + $0xa4] sm:$0xf]
        %v2021 = vld [vmem:[%s15 + $0xa8] sm:$0xf]
        %v2022 = vld [vmem:[%s15 + $0xac] sm:$0xf]
        %v2023 = vld [vmem:[%s15 + $0xb0] sm:$0xf]
        %v2024 = vld [vmem:[%s15 + $0xb4] sm:$0xf]
        %v2025 = vld [vmem:[%s15 + $0xb8] sm:$0xf]
        %v2026 = vld [vmem:[%s15 + $0xbc] sm:$0xf]
        %v2027 = vld [vmem:[%s15 + $0xc0] sm:$0xf]
        %v2028 = vld [vmem:[%s15 + $0xc4] sm:$0xf]
        %v2029 = vld [vmem:[%s15 + $0xc8] sm:$0xf]
        %v2030 = vld [vmem:[%s15 + $0xcc] sm:$0xf]
        %v2031 = vld [vmem:[%s15 + $0xd0] sm:$0xf]
        %v2032 = vld [vmem:[%s15 + $0xd4] sm:$0xf]
        %v2033 = vld [vmem:[%s15 + $0xd8] sm:$0xf]
        %v2034 = vld [vmem:[%s15 + $0xdc] sm:$0xf]
        %v2035 = vld [vmem:[%s15 + $0xe0] sm:$0xf]
        %v2036 = vld [vmem:[%s15 + $0xe4] sm:$0xf]
        %v2037 = vld [vmem:[%s15 + $0xe8] sm:$0xf]
        %v2038 = vld [vmem:[%s15 + $0xec] sm:$0xf]
        %v2039 = vld [vmem:[%s15 + $0xf0] sm:$0xf]
        %v2040 = vld [vmem:[%s15 + $0xf4] sm:$0xf]
        %v2041 = vld [vmem:[%s15 + $0xf8] sm:$0xf]
        %v2042 = vld [vmem:[%s15 + $0xfc] sm:$0xf]
        %v2043 = vld [vmem:[%s15 + $0x100] sm:$0xf]
        %v2044 = vld [vmem:[%s15 + $0x104] sm:$0xf]
        %v2045 = vld [vmem:[%s15 + $0x108] sm:$0xf]
        %v2046 = vld [vmem:[%s15 + $0x10c] sm:$0xf]
        %v2047 = vld [vmem:[%s15 + $0x110] sm:$0xf]
        %v2048 = vld [vmem:[%s15 + $0x114] sm:$0xf]
        %v2049 = vld [vmem:[%s15 + $0x118] sm:$0xf]
        %v2050 = vld [vmem:[%s15 + $0x11c] sm:$0xf]
        %v2051 = vld [vmem:[%s15 + $0x120] sm:$0xf]
        %v2052 = vld [vmem:[%s15 + $0x124] sm:$0xf]
        %v2053 = vld [vmem:[%s15 + $0x128] sm:$0xf]
        %v2054 = vld [vmem:[%s15 + $0x12c] sm:$0xf]
        %v2055 = vld [vmem:[%s15 + $0x130] sm:$0xf]
        %v2056 = vld [vmem:[%s15 + $0x134] sm:$0xf]
        %v2057 = vld [vmem:[%s15 + $0x138] sm:$0xf]
        %v2058 = vld [vmem:[%s15 + $0x13c] sm:$0xf]
        %v2059 = vld [vmem:[%s15 + $0x140] sm:$0xf]
        %v2060 = vld [vmem:[%s15 + $0x144] sm:$0xf]
        %v2061 = vld [vmem:[%s15 + $0x148] sm:$0xf]
        %v2062 = vld [vmem:[%s15 + $0x14c] sm:$0xf]
        %v2063 = vld [vmem:[%s15 + $0x150] sm:$0xf]
        %v2064 = vld [vmem:[%s15 + $0x154] sm:$0xf]
        %v2065 = vld [vmem:[%s15 + $0x158] sm:$0xf]
        %v2066 = vld [vmem:[%s15 + $0x15c] sm:$0xf]
        %v2067 = vld [vmem:[%s15 + $0x160] sm:$0xf]
        %v2068 = vld [vmem:[%s15 + $0x164] sm:$0xf]
        %v2069 = vld [vmem:[%s15 + $0x168] sm:$0xf]
        %v2070 = vld [vmem:[%s15 + $0x16c] sm:$0xf]
        %v2071 = vld [vmem:[%s15 + $0x170] sm:$0xf]
        %v2072 = vld [vmem:[%s15 + $0x174] sm:$0xf]
        %v2073 = vld [vmem:[%s15 + $0x178] sm:$0xf]
        %v2074 = vld [vmem:[%s15 + $0x17c] sm:$0xf]
        %v2075 = vld [vmem:[%s15 + $0x180] sm:$0xf]
        %v2076 = vld [vmem:[%s15 + $0x184] sm:$0xf]
        %v2077 = vld [vmem:[%s15 + $0x188] sm:$0xf]
        %v2078 = vld [vmem:[%s15 + $0x18c] sm:$0xf]
        %v2079 = vld [vmem:[%s15 + $0x190] sm:$0xf]
        %v2080 = vld [vmem:[%s15 + $0x194] sm:$0xf]
        %v2081 = vld [vmem:[%s15 + $0x198] sm:$0xf]
        %v2082 = vld [vmem:[%s15 + $0x19c] sm:$0xf]
        %v2083 = vld [vmem:[%s15 + $0x1a0] sm:$0xf]
        %v2084 = vld [vmem:[%s15 + $0x1a4] sm:$0xf]
        %v2085 = vld [vmem:[%s15 + $0x1a8] sm:$0xf]
        %v2086 = vld [vmem:[%s15 + $0x1ac] sm:$0xf]
        %v2087 = vld [vmem:[%s15 + $0x1b0] sm:$0xf]
        %v2088 = vld [vmem:[%s15 + $0x1b4] sm:$0xf]
        %v2089 = vld [vmem:[%s15 + $0x1b8] sm:$0xf]
        %v2090 = vld [vmem:[%s15 + $0x1bc] sm:$0xf]
        %v2091 = vld [vmem:[%s15 + $0x1c0] sm:$0xf]
        %v2092 = vld [vmem:[%s15 + $0x1c4] sm:$0xf]
        %v2093 = vld [vmem:[%s15 + $0x1c8] sm:$0xf]
        %v2094 = vld [vmem:[%s15 + $0x1cc] sm:$0xf]
        %v2095 = vld [vmem:[%s15 + $0x1d0] sm:$0xf]
        %v2096 = vld [vmem:[%s15 + $0x1d4] sm:$0xf]
        %v2097 = vld [vmem:[%s15 + $0x1d8] sm:$0xf]
        %v2098 = vld [vmem:[%s15 + $0x1dc] sm:$0xf]
        %v2099 = vld [vmem:[%s15 + $0x1e0] sm:$0xf]
        %v2100 = vld [vmem:[%s15 + $0x1e4] sm:$0xf]
        %v2101 = vld [vmem:[%s15 + $0x1e8] sm:$0xf]
        %v2102 = vld [vmem:[%s15 + $0x1ec] sm:$0xf]
        %v2103 = vld [vmem:[%s15 + $0x1f0] sm:$0xf]
        %v2104 = vld [vmem:[%s15 + $0x1f4] sm:$0xf]
        %v2105 = vld [vmem:[%s15 + $0x1f8] sm:$0xf]
        %v2106 = vld [vmem:[%s15 + $0x1fc] sm:$0xf]
        %v2107 = vld [vmem:[%s15 + $0x200] sm:$0xf]
        %v2108 = vld [vmem:[%s15 + $0x204] sm:$0xf]
        %v2109 = vld [vmem:[%s15 + $0x208] sm:$0xf]
        %v2110 = vld [vmem:[%s15 + $0x20c] sm:$0xf]
        %v2111 = vld [vmem:[%s15 + $0x210] sm:$0xf]
        %v2112 = vld [vmem:[%s15 + $0x214] sm:$0xf]
        %v2113 = vld [vmem:[%s15 + $0x218] sm:$0xf]
        %v2114 = vld [vmem:[%s15 + $0x21c] sm:$0xf]
        %v2115 = vld [vmem:[%s15 + $0x220] sm:$0xf]
        %v2116 = vld [vmem:[%s15 + $0x224] sm:$0xf]
        %v2117 = vld [vmem:[%s15 + $0x228] sm:$0xf]
        %v2118 = vld [vmem:[%s15 + $0x22c] sm:$0xf]
        %v2119 = vld [vmem:[%s15 + $0x230] sm:$0xf]
        %v2120 = vld [vmem:[%s15 + $0x234] sm:$0xf]
        %v2121 = vld [vmem:[%s15 + $0x238] sm:$0xf]
        %v2122 = vld [vmem:[%s15 + $0x23c] sm:$0xf]
        %v2123 = vld [vmem:[%s15 + $0x240] sm:$0xf]
        %v2124 = vld [vmem:[%s15 + $0x244] sm:$0xf]
        %v2125 = vld [vmem:[%s15 + $0x248] sm:$0xf]
        %v2126 = vld [vmem:[%s15 + $0x24c] sm:$0xf]
        %v2127 = vld [vmem:[%s15 + $0x250] sm:$0xf]
        %v2128 = vld [vmem:[%s15 + $0x254] sm:$0xf]
        %v2129 = vld [vmem:[%s15 + $0x258] sm:$0xf]
        %v2130 = vld [vmem:[%s15 + $0x25c] sm:$0xf]
        %v2131 = vld [vmem:[%s15 + $0x260] sm:$0xf]
        %v2132 = vld [vmem:[%s15 + $0x264] sm:$0xf]
        %v2133 = vld [vmem:[%s15 + $0x268] sm:$0xf]
        %v2134 = vld [vmem:[%s15 + $0x26c] sm:$0xf]
        %v2135 = vld [vmem:[%s15 + $0x270] sm:$0xf]
        %v2136 = vld [vmem:[%s15 + $0x274] sm:$0xf]
        %v2137 = vld [vmem:[%s15 + $0x278] sm:$0xf]
        %v2138 = vld [vmem:[%s15 + $0x27c] sm:$0xf]
        %v2139 = vld [vmem:[%s15 + $0x280] sm:$0xf]
        %v2140 = vld [vmem:[%s15 + $0x284] sm:$0xf]
        %v2141 = vld [vmem:[%s15 + $0x288] sm:$0xf]
        %v2142 = vld [vmem:[%s15 + $0x28c] sm:$0xf]
        %v2143 = vld [vmem:[%s15 + $0x290] sm:$0xf]
        %v2144 = vld [vmem:[%s15 + $0x294] sm:$0xf]
        %v2145 = vld [vmem:[%s15 + $0x298] sm:$0xf]
        %v2146 = vld [vmem:[%s15 + $0x29c] sm:$0xf]
        %v2147 = vld [vmem:[%s15 + $0x2a0] sm:$0xf]
        %v2148 = vld [vmem:[%s15 + $0x2a4] sm:$0xf]
        %v2149 = vld [vmem:[%s15 + $0x2a8] sm:$0xf]
        %v2150 = vld [vmem:[%s15 + $0x2ac] sm:$0xf]
        %v2151 = vld [vmem:[%s15 + $0x2b0] sm:$0xf]
        %v2152 = vld [vmem:[%s15 + $0x2b4] sm:$0xf]
        %v2153 = vld [vmem:[%s15 + $0x2b8] sm:$0xf]
        %v2154 = vld [vmem:[%s15 + $0x2bc] sm:$0xf]
        %v2155 = vld [vmem:[%s15 + $0x2c0] sm:$0xf]
        %v2156 = vld [vmem:[%s15 + $0x2c4] sm:$0xf]
        %v2157 = vld [vmem:[%s15 + $0x2c8] sm:$0xf]
        %v2158 = vld [vmem:[%s15 + $0x2cc] sm:$0xf]
        %v2159 = vld [vmem:[%s15 + $0x2d0] sm:$0xf]
        %v2160 = vld [vmem:[%s15 + $0x2d4] sm:$0xf]
        %v2161 = vld [vmem:[%s15 + $0x2d8] sm:$0xf]
        %v2162 = vld [vmem:[%s15 + $0x2dc] sm:$0xf]
        %v2163 = vld [vmem:[%s15 + $0x2e0] sm:$0xf]
        %v2164 = vld [vmem:[%s15 + $0x2e4] sm:$0xf]
        %v2165 = vld [vmem:[%s15 + $0x2e8] sm:$0xf]
        %v2166 = vld [vmem:[%s15 + $0x2ec] sm:$0xf]
        %v2167 = vld [vmem:[%s15 + $0x2f0] sm:$0xf]
        %v2168 = vld [vmem:[%s15 + $0x2f4] sm:$0xf]
        %v2169 = vld [vmem:[%s15 + $0x2f8] sm:$0xf]
        %v2170 = vld [vmem:[%s15 + $0x2fc] sm:$0xf]
        %v2171 = vld [vmem:[%s15 + $0x300] sm:$0xf]
        %v2172 = vld [vmem:[%s15 + $0x304] sm:$0xf]
        %v2173 = vld [vmem:[%s15 + $0x308] sm:$0xf]
        %v2174 = vld [vmem:[%s15 + $0x30c] sm:$0xf]
        %v2175 = vld [vmem:[%s15 + $0x310] sm:$0xf]
        %v2176 = vld [vmem:[%s15 + $0x314] sm:$0xf]
        %v2177 = vld [vmem:[%s15 + $0x318] sm:$0xf]
        %v2178 = vld [vmem:[%s15 + $0x31c] sm:$0xf]
        %v2179 = vld [vmem:[%s15 + $0x320] sm:$0xf]
        %v2180 = vld [vmem:[%s15 + $0x324] sm:$0xf]
        %v2181 = vld [vmem:[%s15 + $0x328] sm:$0xf]
        %v2182 = vld [vmem:[%s15 + $0x32c] sm:$0xf]
        %v2183 = vld [vmem:[%s15 + $0x330] sm:$0xf]
        %v2184 = vld [vmem:[%s15 + $0x334] sm:$0xf]
        %v2185 = vld [vmem:[%s15 + $0x338] sm:$0xf]
        %v2186 = vld [vmem:[%s15 + $0x33c] sm:$0xf]
        %v2187 = vld [vmem:[%s15 + $0x340] sm:$0xf]
        %v2188 = vld [vmem:[%s15 + $0x344] sm:$0xf]
        %v2189 = vld [vmem:[%s15 + $0x348] sm:$0xf]
        %v2190 = vld [vmem:[%s15 + $0x34c] sm:$0xf]
        %v2191 = vld [vmem:[%s15 + $0x350] sm:$0xf]
        %v2192 = vld [vmem:[%s15 + $0x354] sm:$0xf]
        %v2193 = vld [vmem:[%s15 + $0x358] sm:$0xf]
        %v2194 = vld [vmem:[%s15 + $0x35c] sm:$0xf]
        %v2195 = vld [vmem:[%s15 + $0x360] sm:$0xf]
        %v2196 = vld [vmem:[%s15 + $0x364] sm:$0xf]
        %v2197 = vld [vmem:[%s15 + $0x368] sm:$0xf]
        %v2198 = vld [vmem:[%s15 + $0x36c] sm:$0xf]
        %v2199 = vld [vmem:[%s15 + $0x370] sm:$0xf]
        %v2200 = vld [vmem:[%s15 + $0x374] sm:$0xf]
        %v2201 = vld [vmem:[%s15 + $0x378] sm:$0xf]
        %v2202 = vld [vmem:[%s15 + $0x37c] sm:$0xf]
        %v2203 = vld [vmem:[%s15 + $0x380] sm:$0xf]
        %v2204 = vld [vmem:[%s15 + $0x384] sm:$0xf]
        %v2205 = vld [vmem:[%s15 + $0x388] sm:$0xf]
        %v2206 = vld [vmem:[%s15 + $0x38c] sm:$0xf]
        %v2207 = vld [vmem:[%s15 + $0x390] sm:$0xf]
        %v2208 = vld [vmem:[%s15 + $0x394] sm:$0xf]
        %v2209 = vld [vmem:[%s15 + $0x398] sm:$0xf]
        %v2210 = vld [vmem:[%s15 + $0x39c] sm:$0xf]
        %v2211 = vld [vmem:[%s15 + $0x3a0] sm:$0xf]
        %v2212 = vld [vmem:[%s15 + $0x3a4] sm:$0xf]
        %v2213 = vld [vmem:[%s15 + $0x3a8] sm:$0xf]
        %v2214 = vld [vmem:[%s15 + $0x3ac] sm:$0xf]
        %v2215 = vld [vmem:[%s15 + $0x3b0] sm:$0xf]
        %v2216 = vld [vmem:[%s15 + $0x3b4] sm:$0xf]
        %v2217 = vld [vmem:[%s15 + $0x3b8] sm:$0xf]
        %v2218 = vld [vmem:[%s15 + $0x3bc] sm:$0xf]
        %v2219 = vld [vmem:[%s15 + $0x3c0] sm:$0xf]
        %v2220 = vld [vmem:[%s15 + $0x3c4] sm:$0xf]
        %v2221 = vld [vmem:[%s15 + $0x3c8] sm:$0xf]
        %v2222 = vld [vmem:[%s15 + $0x3cc] sm:$0xf]
        %v2223 = vld [vmem:[%s15 + $0x3d0] sm:$0xf]
        %v2224 = vld [vmem:[%s15 + $0x3d4] sm:$0xf]
        %v2225 = vld [vmem:[%s15 + $0x3d8] sm:$0xf]
        %v2226 = vld [vmem:[%s15 + $0x3dc] sm:$0xf]
        %v2227 = vld [vmem:[%s15 + $0x3e0] sm:$0xf]
        %v2228 = vld [vmem:[%s15 + $0x3e4] sm:$0xf]
        %v2229 = vld [vmem:[%s15 + $0x3e8] sm:$0xf]
        %v2230 = vld [vmem:[%s15 + $0x3ec] sm:$0xf]
        %v2231 = vld [vmem:[%s15 + $0x3f0] sm:$0xf]
        %v2232 = vld [vmem:[%s15 + $0x3f4] sm:$0xf]
        %v2233 = vld [vmem:[%s15 + $0x3f8] sm:$0xf]
        %v2234 = vld [vmem:[%s15 + $0x3fc] sm:$0xf]
        %v2235 = vld [vmem:[%s16] sm:$0x1]
        %v2237 = vlaneseq
        %v2238 = vshrl.u32 %v2237, 7
        %v2239 = vsub.s32 0, %v2238
        %v2240 = vrot.slane %v2235, %v2239
        %v2498 = vunpack.c.l.b16 %v1979
        %v2499 = vunpack.c.l.b16 %v1980
        %v2500 = vunpack.c.l.b16 %v1981
        %v2501 = vunpack.c.l.b16 %v1982
        %v2502 = vunpack.c.l.b16 %v1983
        %v2503 = vunpack.c.l.b16 %v1984
        %v2504 = vunpack.c.l.b16 %v1985
        %v2505 = vunpack.c.l.b16 %v1986
        %v2506 = vunpack.c.l.b16 %v1987
        %v2507 = vunpack.c.l.b16 %v1988
        %v2508 = vunpack.c.l.b16 %v1989
        %v2509 = vunpack.c.l.b16 %v1990
        %v2510 = vunpack.c.l.b16 %v1991
        %v2511 = vunpack.c.l.b16 %v1992
        %v2512 = vunpack.c.l.b16 %v1993
        %v2513 = vunpack.c.l.b16 %v1994
        %v2514 = vunpack.c.l.b16 %v1995
        %v2515 = vunpack.c.l.b16 %v1996
        %v2516 = vunpack.c.l.b16 %v1997
        %v2517 = vunpack.c.l.b16 %v1998
        %v2518 = vunpack.c.l.b16 %v1999
        %v2519 = vunpack.c.l.b16 %v2000
        %v2520 = vunpack.c.l.b16 %v2001
        %v2521 = vunpack.c.l.b16 %v2002
        %v2522 = vunpack.c.l.b16 %v2003
        %v2523 = vunpack.c.l.b16 %v2004
        %v2524 = vunpack.c.l.b16 %v2005
        %v2525 = vunpack.c.l.b16 %v2006
        %v2526 = vunpack.c.l.b16 %v2007
        %v2527 = vunpack.c.l.b16 %v2008
        %v2528 = vunpack.c.l.b16 %v2009
        %v2529 = vunpack.c.l.b16 %v2010
        %v2530 = vunpack.c.l.b16 %v2011
        %v2531 = vunpack.c.l.b16 %v2012
        %v2532 = vunpack.c.l.b16 %v2013
        %v2533 = vunpack.c.l.b16 %v2014
        %v2534 = vunpack.c.l.b16 %v2015
        %v2535 = vunpack.c.l.b16 %v2016
        %v2536 = vunpack.c.l.b16 %v2017
        %v2537 = vunpack.c.l.b16 %v2018
        %v2538 = vunpack.c.l.b16 %v2019
        %v2539 = vunpack.c.l.b16 %v2020
        %v2540 = vunpack.c.l.b16 %v2021
        %v2541 = vunpack.c.l.b16 %v2022
        %v2542 = vunpack.c.l.b16 %v2023
        %v2543 = vunpack.c.l.b16 %v2024
        %v2544 = vunpack.c.l.b16 %v2025
        %v2545 = vunpack.c.l.b16 %v2026
        %v2546 = vunpack.c.l.b16 %v2027
        %v2547 = vunpack.c.l.b16 %v2028
        %v2548 = vunpack.c.l.b16 %v2029
        %v2549 = vunpack.c.l.b16 %v2030
        %v2550 = vunpack.c.l.b16 %v2031
        %v2551 = vunpack.c.l.b16 %v2032
        %v2552 = vunpack.c.l.b16 %v2033
        %v2553 = vunpack.c.l.b16 %v2034
        %v2554 = vunpack.c.l.b16 %v2035
        %v2555 = vunpack.c.l.b16 %v2036
        %v2556 = vunpack.c.l.b16 %v2037
        %v2557 = vunpack.c.l.b16 %v2038
        %v2558 = vunpack.c.l.b16 %v2039
        %v2559 = vunpack.c.l.b16 %v2040
        %v2560 = vunpack.c.l.b16 %v2041
        %v2561 = vunpack.c.l.b16 %v2042
        %v2562 = vunpack.c.l.b16 %v2043
        %v2563 = vunpack.c.l.b16 %v2044
        %v2564 = vunpack.c.l.b16 %v2045
        %v2565 = vunpack.c.l.b16 %v2046
        %v2566 = vunpack.c.l.b16 %v2047
        %v2567 = vunpack.c.l.b16 %v2048
        %v2568 = vunpack.c.l.b16 %v2049
        %v2569 = vunpack.c.l.b16 %v2050
        %v2570 = vunpack.c.l.b16 %v2051
        %v2571 = vunpack.c.l.b16 %v2052
        %v2572 = vunpack.c.l.b16 %v2053
        %v2573 = vunpack.c.l.b16 %v2054
        %v2574 = vunpack.c.l.b16 %v2055
        %v2575 = vunpack.c.l.b16 %v2056
        %v2576 = vunpack.c.l.b16 %v2057
        %v2577 = vunpack.c.l.b16 %v2058
        %v2578 = vunpack.c.l.b16 %v2059
        %v2579 = vunpack.c.l.b16 %v2060
        %v2580 = vunpack.c.l.b16 %v2061
        %v2581 = vunpack.c.l.b16 %v2062
        %v2582 = vunpack.c.l.b16 %v2063
        %v2583 = vunpack.c.l.b16 %v2064
        %v2584 = vunpack.c.l.b16 %v2065
        %v2585 = vunpack.c.l.b16 %v2066
        %v2586 = vunpack.c.l.b16 %v2067
        %v2587 = vunpack.c.l.b16 %v2068
        %v2588 = vunpack.c.l.b16 %v2069
        %v2589 = vunpack.c.l.b16 %v2070
        %v2590 = vunpack.c.l.b16 %v2071
        %v2591 = vunpack.c.l.b16 %v2072
        %v2592 = vunpack.c.l.b16 %v2073
        %v2593 = vunpack.c.l.b16 %v2074
        %v2594 = vunpack.c.l.b16 %v2075
        %v2595 = vunpack.c.l.b16 %v2076
        %v2596 = vunpack.c.l.b16 %v2077
        %v2597 = vunpack.c.l.b16 %v2078
        %v2598 = vunpack.c.l.b16 %v2079
        %v2599 = vunpack.c.l.b16 %v2080
        %v2600 = vunpack.c.l.b16 %v2081
        %v2601 = vunpack.c.l.b16 %v2082
        %v2602 = vunpack.c.l.b16 %v2083
        %v2603 = vunpack.c.l.b16 %v2084
        %v2604 = vunpack.c.l.b16 %v2085
        %v2605 = vunpack.c.l.b16 %v2086
        %v2606 = vunpack.c.l.b16 %v2087
        %v2607 = vunpack.c.l.b16 %v2088
        %v2608 = vunpack.c.l.b16 %v2089
        %v2609 = vunpack.c.l.b16 %v2090
        %v2610 = vunpack.c.l.b16 %v2091
        %v2611 = vunpack.c.l.b16 %v2092
        %v2612 = vunpack.c.l.b16 %v2093
        %v2613 = vunpack.c.l.b16 %v2094
        %v2614 = vunpack.c.l.b16 %v2095
        %v2615 = vunpack.c.l.b16 %v2096
        %v2616 = vunpack.c.l.b16 %v2097
        %v2617 = vunpack.c.l.b16 %v2098
        %v2618 = vunpack.c.l.b16 %v2099
        %v2619 = vunpack.c.l.b16 %v2100
        %v2620 = vunpack.c.l.b16 %v2101
        %v2621 = vunpack.c.l.b16 %v2102
        %v2622 = vunpack.c.l.b16 %v2103
        %v2623 = vunpack.c.l.b16 %v2104
        %v2624 = vunpack.c.l.b16 %v2105
        %v2625 = vunpack.c.l.b16 %v2106
        %v2626 = vunpack.c.l.b16 %v2107
        %v2627 = vunpack.c.l.b16 %v2108
        %v2628 = vunpack.c.l.b16 %v2109
        %v2629 = vunpack.c.l.b16 %v2110
        %v2630 = vunpack.c.l.b16 %v2111
        %v2631 = vunpack.c.l.b16 %v2112
        %v2632 = vunpack.c.l.b16 %v2113
        %v2633 = vunpack.c.l.b16 %v2114
        %v2634 = vunpack.c.l.b16 %v2115
        %v2635 = vunpack.c.l.b16 %v2116
        %v2636 = vunpack.c.l.b16 %v2117
        %v2637 = vunpack.c.l.b16 %v2118
        %v2638 = vunpack.c.l.b16 %v2119
        %v2639 = vunpack.c.l.b16 %v2120
        %v2640 = vunpack.c.l.b16 %v2121
        %v2641 = vunpack.c.l.b16 %v2122
        %v2642 = vunpack.c.l.b16 %v2123
        %v2643 = vunpack.c.l.b16 %v2124
        %v2644 = vunpack.c.l.b16 %v2125
        %v2645 = vunpack.c.l.b16 %v2126
        %v2646 = vunpack.c.l.b16 %v2127
        %v2647 = vunpack.c.l.b16 %v2128
        %v2648 = vunpack.c.l.b16 %v2129
        %v2649 = vunpack.c.l.b16 %v2130
        %v2650 = vunpack.c.l.b16 %v2131
        %v2651 = vunpack.c.l.b16 %v2132
        %v2652 = vunpack.c.l.b16 %v2133
        %v2653 = vunpack.c.l.b16 %v2134
        %v2654 = vunpack.c.l.b16 %v2135
        %v2655 = vunpack.c.l.b16 %v2136
        %v2656 = vunpack.c.l.b16 %v2137
        %v2657 = vunpack.c.l.b16 %v2138
        %v2658 = vunpack.c.l.b16 %v2139
        %v2659 = vunpack.c.l.b16 %v2140
        %v2660 = vunpack.c.l.b16 %v2141
        %v2661 = vunpack.c.l.b16 %v2142
        %v2662 = vunpack.c.l.b16 %v2143
        %v2663 = vunpack.c.l.b16 %v2144
        %v2664 = vunpack.c.l.b16 %v2145
        %v2665 = vunpack.c.l.b16 %v2146
        %v2666 = vunpack.c.l.b16 %v2147
        %v2667 = vunpack.c.l.b16 %v2148
        %v2668 = vunpack.c.l.b16 %v2149
        %v2669 = vunpack.c.l.b16 %v2150
        %v2670 = vunpack.c.l.b16 %v2151
        %v2671 = vunpack.c.l.b16 %v2152
        %v2672 = vunpack.c.l.b16 %v2153
        %v2673 = vunpack.c.l.b16 %v2154
        %v2674 = vunpack.c.l.b16 %v2155
        %v2675 = vunpack.c.l.b16 %v2156
        %v2676 = vunpack.c.l.b16 %v2157
        %v2677 = vunpack.c.l.b16 %v2158
        %v2678 = vunpack.c.l.b16 %v2159
        %v2679 = vunpack.c.l.b16 %v2160
        %v2680 = vunpack.c.l.b16 %v2161
        %v2681 = vunpack.c.l.b16 %v2162
        %v2682 = vunpack.c.l.b16 %v2163
        %v2683 = vunpack.c.l.b16 %v2164
        %v2684 = vunpack.c.l.b16 %v2165
        %v2685 = vunpack.c.l.b16 %v2166
        %v2686 = vunpack.c.l.b16 %v2167
        %v2687 = vunpack.c.l.b16 %v2168
        %v2688 = vunpack.c.l.b16 %v2169
        %v2689 = vunpack.c.l.b16 %v2170
        %v2690 = vunpack.c.l.b16 %v2171
        %v2691 = vunpack.c.l.b16 %v2172
        %v2692 = vunpack.c.l.b16 %v2173
        %v2693 = vunpack.c.l.b16 %v2174
        %v2694 = vunpack.c.l.b16 %v2175
        %v2695 = vunpack.c.l.b16 %v2176
        %v2696 = vunpack.c.l.b16 %v2177
        %v2697 = vunpack.c.l.b16 %v2178
        %v2698 = vunpack.c.l.b16 %v2179
        %v2699 = vunpack.c.l.b16 %v2180
        %v2700 = vunpack.c.l.b16 %v2181
        %v2701 = vunpack.c.l.b16 %v2182
        %v2702 = vunpack.c.l.b16 %v2183
        %v2703 = vunpack.c.l.b16 %v2184
        %v2704 = vunpack.c.l.b16 %v2185
        %v2705 = vunpack.c.l.b16 %v2186
        %v2706 = vunpack.c.l.b16 %v2187
        %v2707 = vunpack.c.l.b16 %v2188
        %v2708 = vunpack.c.l.b16 %v2189
        %v2709 = vunpack.c.l.b16 %v2190
        %v2710 = vunpack.c.l.b16 %v2191
        %v2711 = vunpack.c.l.b16 %v2192
        %v2712 = vunpack.c.l.b16 %v2193
        %v2713 = vunpack.c.l.b16 %v2194
        %v2714 = vunpack.c.l.b16 %v2195
        %v2715 = vunpack.c.l.b16 %v2196
        %v2716 = vunpack.c.l.b16 %v2197
        %v2717 = vunpack.c.l.b16 %v2198
        %v2718 = vunpack.c.l.b16 %v2199
        %v2719 = vunpack.c.l.b16 %v2200
        %v2720 = vunpack.c.l.b16 %v2201
        %v2721 = vunpack.c.l.b16 %v2202
        %v2722 = vunpack.c.l.b16 %v2203
        %v2723 = vunpack.c.l.b16 %v2204
        %v2724 = vunpack.c.l.b16 %v2205
        %v2725 = vunpack.c.l.b16 %v2206
        %v2726 = vunpack.c.l.b16 %v2207
        %v2727 = vunpack.c.l.b16 %v2208
        %v2728 = vunpack.c.l.b16 %v2209
        %v2729 = vunpack.c.l.b16 %v2210
        %v2730 = vunpack.c.l.b16 %v2211
        %v2731 = vunpack.c.l.b16 %v2212
        %v2732 = vunpack.c.l.b16 %v2213
        %v2733 = vunpack.c.l.b16 %v2214
        %v2734 = vunpack.c.l.b16 %v2215
        %v2735 = vunpack.c.l.b16 %v2216
        %v2736 = vunpack.c.l.b16 %v2217
        %v2737 = vunpack.c.l.b16 %v2218
        %v2738 = vunpack.c.l.b16 %v2219
        %v2739 = vunpack.c.l.b16 %v2220
        %v2740 = vunpack.c.l.b16 %v2221
        %v2741 = vunpack.c.l.b16 %v2222
        %v2742 = vunpack.c.l.b16 %v2223
        %v2743 = vunpack.c.l.b16 %v2224
        %v2744 = vunpack.c.l.b16 %v2225
        %v2745 = vunpack.c.l.b16 %v2226
        %v2746 = vunpack.c.l.b16 %v2227
        %v2747 = vunpack.c.l.b16 %v2228
        %v2748 = vunpack.c.l.b16 %v2229
        %v2749 = vunpack.c.l.b16 %v2230
        %v2750 = vunpack.c.l.b16 %v2231
        %v2751 = vunpack.c.l.b16 %v2232
        %v2752 = vunpack.c.l.b16 %v2233
        %v2753 = vunpack.c.l.b16 %v2234
        %v2754 = vpack.c.b16 %v2499, %v2498
        %v2755 = vpack.c.b16 %v2501, %v2500
        %v2756 = vpack.c.b16 %v2503, %v2502
        %v2757 = vpack.c.b16 %v2505, %v2504
        %v2758 = vpack.c.b16 %v2507, %v2506
        %v2759 = vpack.c.b16 %v2509, %v2508
        %v2760 = vpack.c.b16 %v2511, %v2510
        %v2761 = vpack.c.b16 %v2513, %v2512
        %v2762 = vpack.c.b16 %v2515, %v2514
        %v2763 = vpack.c.b16 %v2517, %v2516
        %v2764 = vpack.c.b16 %v2519, %v2518
        %v2765 = vpack.c.b16 %v2521, %v2520
        %v2766 = vpack.c.b16 %v2523, %v2522
        %v2767 = vpack.c.b16 %v2525, %v2524
        %v2768 = vpack.c.b16 %v2527, %v2526
        %v2769 = vpack.c.b16 %v2529, %v2528
        %v2770 = vpack.c.b16 %v2531, %v2530
        %v2771 = vpack.c.b16 %v2533, %v2532
        %v2772 = vpack.c.b16 %v2535, %v2534
        %v2773 = vpack.c.b16 %v2537, %v2536
        %v2774 = vpack.c.b16 %v2539, %v2538
        %v2775 = vpack.c.b16 %v2541, %v2540
        %v2776 = vpack.c.b16 %v2543, %v2542
        %v2777 = vpack.c.b16 %v2545, %v2544
        %v2778 = vpack.c.b16 %v2547, %v2546
        %v2779 = vpack.c.b16 %v2549, %v2548
        %v2780 = vpack.c.b16 %v2551, %v2550
        %v2781 = vpack.c.b16 %v2553, %v2552
        %v2782 = vpack.c.b16 %v2555, %v2554
        %v2783 = vpack.c.b16 %v2557, %v2556
        %v2784 = vpack.c.b16 %v2559, %v2558
        %v2785 = vpack.c.b16 %v2561, %v2560
        %v2786 = vpack.c.b16 %v2563, %v2562
        %v2787 = vpack.c.b16 %v2565, %v2564
        %v2788 = vpack.c.b16 %v2567, %v2566
        %v2789 = vpack.c.b16 %v2569, %v2568
        %v2790 = vpack.c.b16 %v2571, %v2570
        %v2791 = vpack.c.b16 %v2573, %v2572
        %v2792 = vpack.c.b16 %v2575, %v2574
        %v2793 = vpack.c.b16 %v2577, %v2576
        %v2794 = vpack.c.b16 %v2579, %v2578
        %v2795 = vpack.c.b16 %v2581, %v2580
        %v2796 = vpack.c.b16 %v2583, %v2582
        %v2797 = vpack.c.b16 %v2585, %v2584
        %v2798 = vpack.c.b16 %v2587, %v2586
        %v2799 = vpack.c.b16 %v2589, %v2588
        %v2800 = vpack.c.b16 %v2591, %v2590
        %v2801 = vpack.c.b16 %v2593, %v2592
        %v2802 = vpack.c.b16 %v2595, %v2594
        %v2803 = vpack.c.b16 %v2597, %v2596
        %v2804 = vpack.c.b16 %v2599, %v2598
        %v2805 = vpack.c.b16 %v2601, %v2600
        %v2806 = vpack.c.b16 %v2603, %v2602
        %v2807 = vpack.c.b16 %v2605, %v2604
        %v2808 = vpack.c.b16 %v2607, %v2606
        %v2809 = vpack.c.b16 %v2609, %v2608
        %v2810 = vpack.c.b16 %v2611, %v2610
        %v2811 = vpack.c.b16 %v2613, %v2612
        %v2812 = vpack.c.b16 %v2615, %v2614
        %v2813 = vpack.c.b16 %v2617, %v2616
        %v2814 = vpack.c.b16 %v2619, %v2618
        %v2815 = vpack.c.b16 %v2621, %v2620
        %v2816 = vpack.c.b16 %v2623, %v2622
        %v2817 = vpack.c.b16 %v2625, %v2624
        %v2818 = vpack.c.b16 %v2627, %v2626
        %v2819 = vpack.c.b16 %v2629, %v2628
        %v2820 = vpack.c.b16 %v2631, %v2630
        %v2821 = vpack.c.b16 %v2633, %v2632
        %v2822 = vpack.c.b16 %v2635, %v2634
        %v2823 = vpack.c.b16 %v2637, %v2636
        %v2824 = vpack.c.b16 %v2639, %v2638
        %v2825 = vpack.c.b16 %v2641, %v2640
        %v2826 = vpack.c.b16 %v2643, %v2642
        %v2827 = vpack.c.b16 %v2645, %v2644
        %v2828 = vpack.c.b16 %v2647, %v2646
        %v2829 = vpack.c.b16 %v2649, %v2648
        %v2830 = vpack.c.b16 %v2651, %v2650
        %v2831 = vpack.c.b16 %v2653, %v2652
        %v2832 = vpack.c.b16 %v2655, %v2654
        %v2833 = vpack.c.b16 %v2657, %v2656
        %v2834 = vpack.c.b16 %v2659, %v2658
        %v2835 = vpack.c.b16 %v2661, %v2660
        %v2836 = vpack.c.b16 %v2663, %v2662
        %v2837 = vpack.c.b16 %v2665, %v2664
        %v2838 = vpack.c.b16 %v2667, %v2666
        %v2839 = vpack.c.b16 %v2669, %v2668
        %v2840 = vpack.c.b16 %v2671, %v2670
        %v2841 = vpack.c.b16 %v2673, %v2672
        %v2842 = vpack.c.b16 %v2675, %v2674
        %v2843 = vpack.c.b16 %v2677, %v2676
        %v2844 = vpack.c.b16 %v2679, %v2678
        %v2845 = vpack.c.b16 %v2681, %v2680
        %v2846 = vpack.c.b16 %v2683, %v2682
        %v2847 = vpack.c.b16 %v2685, %v2684
        %v2848 = vpack.c.b16 %v2687, %v2686
        %v2849 = vpack.c.b16 %v2689, %v2688
        %v2850 = vpack.c.b16 %v2691, %v2690
        %v2851 = vpack.c.b16 %v2693, %v2692
        %v2852 = vpack.c.b16 %v2695, %v2694
        %v2853 = vpack.c.b16 %v2697, %v2696
        %v2854 = vpack.c.b16 %v2699, %v2698
        %v2855 = vpack.c.b16 %v2701, %v2700
        %v2856 = vpack.c.b16 %v2703, %v2702
        %v2857 = vpack.c.b16 %v2705, %v2704
        %v2858 = vpack.c.b16 %v2707, %v2706
        %v2859 = vpack.c.b16 %v2709, %v2708
        %v2860 = vpack.c.b16 %v2711, %v2710
        %v2861 = vpack.c.b16 %v2713, %v2712
        %v2862 = vpack.c.b16 %v2715, %v2714
        %v2863 = vpack.c.b16 %v2717, %v2716
        %v2864 = vpack.c.b16 %v2719, %v2718
        %v2865 = vpack.c.b16 %v2721, %v2720
        %v2866 = vpack.c.b16 %v2723, %v2722
        %v2867 = vpack.c.b16 %v2725, %v2724
        %v2868 = vpack.c.b16 %v2727, %v2726
        %v2869 = vpack.c.b16 %v2729, %v2728
        %v2870 = vpack.c.b16 %v2731, %v2730
        %v2871 = vpack.c.b16 %v2733, %v2732
        %v2872 = vpack.c.b16 %v2735, %v2734
        %v2873 = vpack.c.b16 %v2737, %v2736
        %v2874 = vpack.c.b16 %v2739, %v2738
        %v2875 = vpack.c.b16 %v2741, %v2740
        %v2876 = vpack.c.b16 %v2743, %v2742
        %v2877 = vpack.c.b16 %v2745, %v2744
        %v2878 = vpack.c.b16 %v2747, %v2746
        %v2879 = vpack.c.b16 %v2749, %v2748
        %v2880 = vpack.c.b16 %v2751, %v2750
        %v2881 = vpack.c.b16 %v2753, %v2752
        %3010 = vmatprep.subr.bf16.mxu0 0
        %3011 = vmatpush1.bf16.msra.mxu0 %v2754
        %3012 = vmatprep.subr.bf16.mxu0 0
        %3013 = vmatpush1.bf16.msra.mxu0 %v2755
        %3014 = vmatprep.subr.bf16.mxu0 0
        %3015 = vmatpush1.bf16.msra.mxu0 %v2756
        %3016 = vmatprep.subr.bf16.mxu0 0
        %3017 = vmatpush1.bf16.msra.mxu0 %v2757
        %3018 = vmatprep.subr.bf16.mxu0 0
        %3019 = vmatpush1.bf16.msra.mxu0 %v2758
        %3020 = vmatprep.subr.bf16.mxu0 0
        %3021 = vmatpush1.bf16.msra.mxu0 %v2759
        %3022 = vmatprep.subr.bf16.mxu0 0
        %3023 = vmatpush1.bf16.msra.mxu0 %v2760
        %3024 = vmatprep.subr.bf16.mxu0 0
        %3025 = vmatpush1.bf16.msra.mxu0 %v2761
        %3026 = vmatprep.subr.bf16.mxu0 0
        %3027 = vmatpush1.bf16.msra.mxu0 %v2762
        %3028 = vmatprep.subr.bf16.mxu0 0
        %3029 = vmatpush1.bf16.msra.mxu0 %v2763
        %3030 = vmatprep.subr.bf16.mxu0 0
        %3031 = vmatpush1.bf16.msra.mxu0 %v2764
        %3032 = vmatprep.subr.bf16.mxu0 0
        %3033 = vmatpush1.bf16.msra.mxu0 %v2765
        %3034 = vmatprep.subr.bf16.mxu0 0
        %3035 = vmatpush1.bf16.msra.mxu0 %v2766
        %3036 = vmatprep.subr.bf16.mxu0 0
        %3037 = vmatpush1.bf16.msra.mxu0 %v2767
        %3038 = vmatprep.subr.bf16.mxu0 0
        %3039 = vmatpush1.bf16.msra.mxu0 %v2768
        %3040 = vmatprep.subr.bf16.mxu0 0
        %3041 = vmatpush1.bf16.msra.mxu0 %v2769
        %3042 = vmatprep.mubr.bf16.mxu0 %v1964
        %3043 = vmatmul.mubr.bf16.gmra.mrb[0].mxu0 %v1963
        %v3044 = vpop.f32.mrb[0].mxu0
        %v3045 = vadd.f32 %v2240, %v3044
        %v3046 = vpop.f32.mrb[0].mxu0
        %v3047 = vpop.f32.mrb[0].mxu0
        %v3048 = vpop.f32.mrb[0].mxu0
        %3049 = vdwg.mxu0
        %3050 = vmatprep.subr.bf16.mxu0 0
        %3051 = vmatpush1.bf16.msra.mxu0 %v2770
        %3052 = vmatprep.subr.bf16.mxu0 0
        %3053 = vmatpush1.bf16.msra.mxu0 %v2771
        %3054 = vmatprep.subr.bf16.mxu0 0
        %3055 = vmatpush1.bf16.msra.mxu0 %v2772
        %3056 = vmatprep.subr.bf16.mxu0 0
        %3057 = vmatpush1.bf16.msra.mxu0 %v2773
        %3058 = vmatprep.subr.bf16.mxu0 0
        %3059 = vmatpush1.bf16.msra.mxu0 %v2774
        %3060 = vmatprep.subr.bf16.mxu0 0
        %3061 = vmatpush1.bf16.msra.mxu0 %v2775
        %3062 = vmatprep.subr.bf16.mxu0 0
        %3063 = vmatpush1.bf16.msra.mxu0 %v2776
        %3064 = vmatprep.subr.bf16.mxu0 0
        %3065 = vmatpush1.bf16.msra.mxu0 %v2777
        %3066 = vmatprep.subr.bf16.mxu0 0
        %3067 = vmatpush1.bf16.msra.mxu0 %v2778
        %3068 = vmatprep.subr.bf16.mxu0 0
        %3069 = vmatpush1.bf16.msra.mxu0 %v2779
        %3070 = vmatprep.subr.bf16.mxu0 0
        %3071 = vmatpush1.bf16.msra.mxu0 %v2780
        %3072 = vmatprep.subr.bf16.mxu0 0
        %3073 = vmatpush1.bf16.msra.mxu0 %v2781
        %3074 = vmatprep.subr.bf16.mxu0 0
        %3075 = vmatpush1.bf16.msra.mxu0 %v2782
        %3076 = vmatprep.subr.bf16.mxu0 0
        %3077 = vmatpush1.bf16.msra.mxu0 %v2783
        %3078 = vmatprep.subr.bf16.mxu0 0
        %3079 = vmatpush1.bf16.msra.mxu0 %v2784
        %3080 = vmatprep.subr.bf16.mxu0 0
        %3081 = vmatpush1.bf16.msra.mxu0 %v2785
        %3082 = vmatprep.mubr.bf16.mxu0 %v1966
        %3083 = vmatmul.mubr.bf16.gmra.mrb[0].mxu0 %v1965
        %v3084 = vpop.f32.mrb[0].mxu0
        %v3085 = vadd.f32 %v3045, %v3084
        %v3086 = vpop.f32.mrb[0].mxu0
        %v3087 = vpop.f32.mrb[0].mxu0
        %v3088 = vpop.f32.mrb[0].mxu0
        %3089 = vdwg.mxu0
        %3090 = vmatprep.subr.bf16.mxu0 0
        %3091 = vmatpush1.bf16.msra.mxu0 %v2786
        %3092 = vmatprep.subr.bf16.mxu0 0
        %3093 = vmatpush1.bf16.msra.mxu0 %v2787
        %3094 = vmatprep.subr.bf16.mxu0 0
        %3095 = vmatpush1.bf16.msra.mxu0 %v2788
        %3096 = vmatprep.subr.bf16.mxu0 0
        %3097 = vmatpush1.bf16.msra.mxu0 %v2789
        %3098 = vmatprep.subr.bf16.mxu0 0
        %3099 = vmatpush1.bf16.msra.mxu0 %v2790
        %3100 = vmatprep.subr.bf16.mxu0 0
        %3101 = vmatpush1.bf16.msra.mxu0 %v2791
        %3102 = vmatprep.subr.bf16.mxu0 0
        %3103 = vmatpush1.bf16.msra.mxu0 %v2792
        %3104 = vmatprep.subr.bf16.mxu0 0
        %3105 = vmatpush1.bf16.msra.mxu0 %v2793
        %3106 = vmatprep.subr.bf16.mxu0 0
        %3107 = vmatpush1.bf16.msra.mxu0 %v2794
        %3108 = vmatprep.subr.bf16.mxu0 0
        %3109 = vmatpush1.bf16.msra.mxu0 %v2795
        %3110 = vmatprep.subr.bf16.mxu0 0
        %3111 = vmatpush1.bf16.msra.mxu0 %v2796
        %3112 = vmatprep.subr.bf16.mxu0 0
        %3113 = vmatpush1.bf16.msra.mxu0 %v2797
        %3114 = vmatprep.subr.bf16.mxu0 0
        %3115 = vmatpush1.bf16.msra.mxu0 %v2798
        %3116 = vmatprep.subr.bf16.mxu0 0
        %3117 = vmatpush1.bf16.msra.mxu0 %v2799
        %3118 = vmatprep.subr.bf16.mxu0 0
        %3119 = vmatpush1.bf16.msra.mxu0 %v2800
        %3120 = vmatprep.subr.bf16.mxu0 0
        %3121 = vmatpush1.bf16.msra.mxu0 %v2801
        %3122 = vmatprep.mubr.bf16.mxu0 %v1968
        %3123 = vmatmul.mubr.bf16.gmra.mrb[0].mxu0 %v1967
        %v3124 = vpop.f32.mrb[0].mxu0
        %v3125 = vadd.f32 %v3085, %v3124
        %v3126 = vpop.f32.mrb[0].mxu0
        %v3127 = vpop.f32.mrb[0].mxu0
        %v3128 = vpop.f32.mrb[0].mxu0
        %3129 = vdwg.mxu0
        %3130 = vmatprep.subr.bf16.mxu0 0
        %3131 = vmatpush1.bf16.msra.mxu0 %v2802
        %3132 = vmatprep.subr.bf16.mxu0 0
        %3133 = vmatpush1.bf16.msra.mxu0 %v2803
        %3134 = vmatprep.subr.bf16.mxu0 0
        %3135 = vmatpush1.bf16.msra.mxu0 %v2804
        %3136 = vmatprep.subr.bf16.mxu0 0
        %3137 = vmatpush1.bf16.msra.mxu0 %v2805
        %3138 = vmatprep.subr.bf16.mxu0 0
        %3139 = vmatpush1.bf16.msra.mxu0 %v2806
        %3140 = vmatprep.subr.bf16.mxu0 0
        %3141 = vmatpush1.bf16.msra.mxu0 %v2807
        %3142 = vmatprep.subr.bf16.mxu0 0
        %3143 = vmatpush1.bf16.msra.mxu0 %v2808
        %3144 = vmatprep.subr.bf16.mxu0 0
        %3145 = vmatpush1.bf16.msra.mxu0 %v2809
        %3146 = vmatprep.subr.bf16.mxu0 0
        %3147 = vmatpush1.bf16.msra.mxu0 %v2810
        %3148 = vmatprep.subr.bf16.mxu0 0
        %3149 = vmatpush1.bf16.msra.mxu0 %v2811
        %3150 = vmatprep.subr.bf16.mxu0 0
        %3151 = vmatpush1.bf16.msra.mxu0 %v2812
        %3152 = vmatprep.subr.bf16.mxu0 0
        %3153 = vmatpush1.bf16.msra.mxu0 %v2813
        %3154 = vmatprep.subr.bf16.mxu0 0
        %3155 = vmatpush1.bf16.msra.mxu0 %v2814
        %3156 = vmatprep.subr.bf16.mxu0 0
        %3157 = vmatpush1.bf16.msra.mxu0 %v2815
        %3158 = vmatprep.subr.bf16.mxu0 0
        %3159 = vmatpush1.bf16.msra.mxu0 %v2816
        %3160 = vmatprep.subr.bf16.mxu0 0
        %3161 = vmatpush1.bf16.msra.mxu0 %v2817
        %3162 = vmatprep.mubr.bf16.mxu0 %v1970
        %3163 = vmatmul.mubr.bf16.gmra.mrb[0].mxu0 %v1969
        %v3164 = vpop.f32.mrb[0].mxu0
        %v3165 = vadd.f32 %v3125, %v3164
        %v3166 = vpop.f32.mrb[0].mxu0
        %v3167 = vpop.f32.mrb[0].mxu0
        %v3168 = vpop.f32.mrb[0].mxu0
        %3169 = vdwg.mxu0
        %3170 = vmatprep.subr.bf16.mxu0 0
        %3171 = vmatpush1.bf16.msra.mxu0 %v2818
        %3172 = vmatprep.subr.bf16.mxu0 0
        %3173 = vmatpush1.bf16.msra.mxu0 %v2819
        %3174 = vmatprep.subr.bf16.mxu0 0
        %3175 = vmatpush1.bf16.msra.mxu0 %v2820
        %3176 = vmatprep.subr.bf16.mxu0 0
        %3177 = vmatpush1.bf16.msra.mxu0 %v2821
        %3178 = vmatprep.subr.bf16.mxu0 0
        %3179 = vmatpush1.bf16.msra.mxu0 %v2822
        %3180 = vmatprep.subr.bf16.mxu0 0
        %3181 = vmatpush1.bf16.msra.mxu0 %v2823
        %3182 = vmatprep.subr.bf16.mxu0 0
        %3183 = vmatpush1.bf16.msra.mxu0 %v2824
        %3184 = vmatprep.subr.bf16.mxu0 0
        %3185 = vmatpush1.bf16.msra.mxu0 %v2825
        %3186 = vmatprep.subr.bf16.mxu0 0
        %3187 = vmatpush1.bf16.msra.mxu0 %v2826
        %3188 = vmatprep.subr.bf16.mxu0 0
        %3189 = vmatpush1.bf16.msra.mxu0 %v2827
        %3190 = vmatprep.subr.bf16.mxu0 0
        %3191 = vmatpush1.bf16.msra.mxu0 %v2828
        %3192 = vmatprep.subr.bf16.mxu0 0
        %3193 = vmatpush1.bf16.msra.mxu0 %v2829
        %3194 = vmatprep.subr.bf16.mxu0 0
        %3195 = vmatpush1.bf16.msra.mxu0 %v2830
        %3196 = vmatprep.subr.bf16.mxu0 0
        %3197 = vmatpush1.bf16.msra.mxu0 %v2831
        %3198 = vmatprep.subr.bf16.mxu0 0
        %3199 = vmatpush1.bf16.msra.mxu0 %v2832
        %3200 = vmatprep.subr.bf16.mxu0 0
        %3201 = vmatpush1.bf16.msra.mxu0 %v2833
        %3202 = vmatprep.mubr.bf16.mxu0 %v1972
        %3203 = vmatmul.mubr.bf16.gmra.mrb[0].mxu0 %v1971
        %v3204 = vpop.f32.mrb[0].mxu0
        %v3205 = vadd.f32 %v3165, %v3204
        %v3206 = vpop.f32.mrb[0].mxu0
        %v3207 = vpop.f32.mrb[0].mxu0
        %v3208 = vpop.f32.mrb[0].mxu0
        %3209 = vdwg.mxu0
        %3210 = vmatprep.subr.bf16.mxu0 0
        %3211 = vmatpush1.bf16.msra.mxu0 %v2834
        %3212 = vmatprep.subr.bf16.mxu0 0
        %3213 = vmatpush1.bf16.msra.mxu0 %v2835
        %3214 = vmatprep.subr.bf16.mxu0 0
        %3215 = vmatpush1.bf16.msra.mxu0 %v2836
        %3216 = vmatprep.subr.bf16.mxu0 0
        %3217 = vmatpush1.bf16.msra.mxu0 %v2837
        %3218 = vmatprep.subr.bf16.mxu0 0
        %3219 = vmatpush1.bf16.msra.mxu0 %v2838
        %3220 = vmatprep.subr.bf16.mxu0 0
        %3221 = vmatpush1.bf16.msra.mxu0 %v2839
        %3222 = vmatprep.subr.bf16.mxu0 0
        %3223 = vmatpush1.bf16.msra.mxu0 %v2840
        %3224 = vmatprep.subr.bf16.mxu0 0
        %3225 = vmatpush1.bf16.msra.mxu0 %v2841
        %3226 = vmatprep.subr.bf16.mxu0 0
        %3227 = vmatpush1.bf16.msra.mxu0 %v2842
        %3228 = vmatprep.subr.bf16.mxu0 0
        %3229 = vmatpush1.bf16.msra.mxu0 %v2843
        %3230 = vmatprep.subr.bf16.mxu0 0
        %3231 = vmatpush1.bf16.msra.mxu0 %v2844
        %3232 = vmatprep.subr.bf16.mxu0 0
        %3233 = vmatpush1.bf16.msra.mxu0 %v2845
        %3234 = vmatprep.subr.bf16.mxu0 0
        %3235 = vmatpush1.bf16.msra.mxu0 %v2846
        %3236 = vmatprep.subr.bf16.mxu0 0
        %3237 = vmatpush1.bf16.msra.mxu0 %v2847
        %3238 = vmatprep.subr.bf16.mxu0 0
        %3239 = vmatpush1.bf16.msra.mxu0 %v2848
        %3240 = vmatprep.subr.bf16.mxu0 0
        %3241 = vmatpush1.bf16.msra.mxu0 %v2849
        %3242 = vmatprep.mubr.bf16.mxu0 %v1974
        %3243 = vmatmul.mubr.bf16.gmra.mrb[0].mxu0 %v1973
        %v3244 = vpop.f32.mrb[0].mxu0
        %v3245 = vadd.f32 %v3205, %v3244
        %v3246 = vpop.f32.mrb[0].mxu0
        %v3247 = vpop.f32.mrb[0].mxu0
        %v3248 = vpop.f32.mrb[0].mxu0
        %3249 = vdwg.mxu0
        %3250 = vmatprep.subr.bf16.mxu0 0
        %3251 = vmatpush1.bf16.msra.mxu0 %v2850
        %3252 = vmatprep.subr.bf16.mxu0 0
        %3253 = vmatpush1.bf16.msra.mxu0 %v2851
        %3254 = vmatprep.subr.bf16.mxu0 0
        %3255 = vmatpush1.bf16.msra.mxu0 %v2852
        %3256 = vmatprep.subr.bf16.mxu0 0
        %3257 = vmatpush1.bf16.msra.mxu0 %v2853
        %3258 = vmatprep.subr.bf16.mxu0 0
        %3259 = vmatpush1.bf16.msra.mxu0 %v2854
        %3260 = vmatprep.subr.bf16.mxu0 0
        %3261 = vmatpush1.bf16.msra.mxu0 %v2855
        %3262 = vmatprep.subr.bf16.mxu0 0
        %3263 = vmatpush1.bf16.msra.mxu0 %v2856
        %3264 = vmatprep.subr.bf16.mxu0 0
        %3265 = vmatpush1.bf16.msra.mxu0 %v2857
        %3266 = vmatprep.subr.bf16.mxu0 0
        %3267 = vmatpush1.bf16.msra.mxu0 %v2858
        %3268 = vmatprep.subr.bf16.mxu0 0
        %3269 = vmatpush1.bf16.msra.mxu0 %v2859
        %3270 = vmatprep.subr.bf16.mxu0 0
        %3271 = vmatpush1.bf16.msra.mxu0 %v2860
        %3272 = vmatprep.subr.bf16.mxu0 0
        %3273 = vmatpush1.bf16.msra.mxu0 %v2861
        %3274 = vmatprep.subr.bf16.mxu0 0
        %3275 = vmatpush1.bf16.msra.mxu0 %v2862
        %3276 = vmatprep.subr.bf16.mxu0 0
        %3277 = vmatpush1.bf16.msra.mxu0 %v2863
        %3278 = vmatprep.subr.bf16.mxu0 0
        %3279 = vmatpush1.bf16.msra.mxu0 %v2864
        %3280 = vmatprep.subr.bf16.mxu0 0
        %3281 = vmatpush1.bf16.msra.mxu0 %v2865
        %3282 = vmatprep.mubr.bf16.mxu0 %v1976
        %3283 = vmatmul.mubr.bf16.gmra.mrb[0].mxu0 %v1975
        %v3284 = vpop.f32.mrb[0].mxu0
        %v3285 = vadd.f32 %v3245, %v3284
        %v3286 = vpop.f32.mrb[0].mxu0
        %v3287 = vpop.f32.mrb[0].mxu0
        %v3288 = vpop.f32.mrb[0].mxu0
        %3289 = vdwg.mxu0
        %3290 = vmatprep.subr.bf16.mxu0 0
        %3291 = vmatpush1.bf16.msra.mxu0 %v2866
        %3292 = vmatprep.subr.bf16.mxu0 0
        %3293 = vmatpush1.bf16.msra.mxu0 %v2867
        %3294 = vmatprep.subr.bf16.mxu0 0
        %3295 = vmatpush1.bf16.msra.mxu0 %v2868
        %3296 = vmatprep.subr.bf16.mxu0 0
        %3297 = vmatpush1.bf16.msra.mxu0 %v2869
        %3298 = vmatprep.subr.bf16.mxu0 0
        %3299 = vmatpush1.bf16.msra.mxu0 %v2870
        %3300 = vmatprep.subr.bf16.mxu0 0
        %3301 = vmatpush1.bf16.msra.mxu0 %v2871
        %3302 = vmatprep.subr.bf16.mxu0 0
        %3303 = vmatpush1.bf16.msra.mxu0 %v2872
        %3304 = vmatprep.subr.bf16.mxu0 0
        %3305 = vmatpush1.bf16.msra.mxu0 %v2873
        %3306 = vmatprep.subr.bf16.mxu0 0
        %3307 = vmatpush1.bf16.msra.mxu0 %v2874
        %3308 = vmatprep.subr.bf16.mxu0 0
        %3309 = vmatpush1.bf16.msra.mxu0 %v2875
        %3310 = vmatprep.subr.bf16.mxu0 0
        %3311 = vmatpush1.bf16.msra.mxu0 %v2876
        %3312 = vmatprep.subr.bf16.mxu0 0
        %3313 = vmatpush1.bf16.msra.mxu0 %v2877
        %3314 = vmatprep.subr.bf16.mxu0 0
        %3315 = vmatpush1.bf16.msra.mxu0 %v2878
        %3316 = vmatprep.subr.bf16.mxu0 0
        %3317 = vmatpush1.bf16.msra.mxu0 %v2879
        %3318 = vmatprep.subr.bf16.mxu0 0
        %3319 = vmatpush1.bf16.msra.mxu0 %v2880
        %3320 = vmatprep.subr.bf16.mxu0 0
        %3321 = vmatpush1.bf16.msra.mxu0 %v2881
        %3322 = vmatprep.mubr.bf16.mxu0 %v1978
        %3323 = vmatmul.mubr.bf16.gmra.mrb[0].mxu0 %v1977
        %v3324 = vpop.f32.mrb[0].mxu0
        %v3325 = vadd.f32 %v3285, %v3324
        %v3326 = vpop.f32.mrb[0].mxu0
        %v3327 = vpop.f32.mrb[0].mxu0
        %v3328 = vpop.f32.mrb[0].mxu0
        %3329 = vdwg.mxu0
        %v3330 = vadd.f32 %v3325, %v1309
        %3331 = vst.msk [vmem:[%s539] sm:$0xff] %vm546, %v3330
        %s3332 = sand.u32 %s401, 1
        %s3333 = scalar_lea.sflag [#allocation4], %s3332
        %s3334 = sand.u32 %s401, 1
        %s3335 = smul.addr %s3334, 8
        %s3336 = scalar_lea.vmem [#allocation3], %s3335
        // Predicated region
        $region89: #{transformer_block.1} parent=87 // pred_check
          %p3337 = pneg %p411
        $region90: #{transformer_block.1} parent=87 // pred_check_branch
          %3339 = sbr.rel (%p3337) target = $region92
        $region91: #{transformer_block.1} parent=87 // pred_region
          %s3341 = ssub.s32 128, 128
          %3342 = vsyncadd %s3333, %s3341
          %s3343 = smul.addr %s31, 128
          %s3344 = scalar_lea.hbm %s17, %s3343
          %s3346 = sshll.u32 %s3336, 4
          %s3347 = int_to_ptr.vmem [resolvable:$true] %s3346
          %3349 = dma.vmem_to_hbm [thread:$0]  %s3347, 128, %s3344, %s3333
        $region92: #{transformer_block.1} parent=87 // pred_fallthru
          _
      $region88: #{transformer_block.1} parent=5 // pred_fallthru
        _
      %p3350 = scmp.le.s32.totalorder 2, %s26
      // Predicated region
      $region93: #{transformer_block.1} parent=5 // pred_check
        %p3351 = pneg %p3350
      $region94: #{transformer_block.1} parent=5 // pred_check_branch
        %3353 = sbr.rel (%p3351) target = $region96
      $region95: #{transformer_block.1} parent=5 // pred_region
        %s3354 = ssub.s32 %s26, 2
        // Predicated region
        $region97: #{transformer_block.1} parent=95 // pred_check
          %p3355 = pneg %p417
        $region98: #{transformer_block.1} parent=95 // pred_check_branch
          %3357 = sbr.rel (%p3355) target = $region100
        $region99: #{transformer_block.1} parent=95 // pred_region
          %s3358 = sand.u32 %s402, 1
          %s3359 = scalar_lea.sflag [#allocation4], %s3358
          %s3360 = sand.u32 %s402, 1
          %s3361 = smul.addr %s3360, 8
          %s3362 = scalar_lea.vmem [#allocation3], %s3361
          %3363 = dma.done %s3359, 128
        $region100: #{transformer_block.1} parent=95 // pred_fallthru
          _
      $region96: #{transformer_block.1} parent=5 // pred_fallthru
        _
    $region6: #{transformer_block.1} parent=1 // loop_footer
      %s30 = sadd.s32 1, %s26
    $region7: #{transformer_block.1} parent=1 // loop_footer_branch
      %25 = sbr.rel target = $region3
    $region8: #{transformer_block.1} parent=1 // loop_exit
      _
    %3364 = vsyncpa [#allocation4], 1
    %s3365 = scalar_lea.sflag [#allocation4], 1
    %3366 = vsyncpa %s3365, 1

</llo_original>
